<compile_context>
chip_gen: v7x
topology: tpu7x:2x2x1
jax: 0.10.0
libtpu: 0.0.40
codegen_flags: <defaults>
</compile_context>

<pallas_src>
import jax
import jax.numpy as jnp
from jax.experimental import pallas as pl
from jax.experimental.pallas import tpu as pltpu

# ----- model hyperparameters (small, consistent with the module) -----
EMBED = 32
HEADS = 4
HEAD_DIM = EMBED // HEADS
FF = 4 * EMBED          # forward_expansion = 4  (== 128, one full lane width)
LN_EPS = 1e-5


def decoder_block_kernel(x_ref, ekv_ref, tbias_ref, sbias_ref,
                         wself_ref, wcross_ref, wffn_ref, vec_ref, out_ref):
    n, t, e = x_ref.shape
    ns = ekv_ref.shape[0] // 2          # N*S
    s = ns // n
    e3 = 3 * e

    xf = x_ref[...].reshape(n * t, e)   # (N*T, E) decoder input

    def layernorm(h, g, b):             # h: (rows, E); g, b: (1, E)
        mu = jnp.mean(h, axis=-1, keepdims=True)
        var = jnp.mean((h - mu) ** 2, axis=-1, keepdims=True)
        return (h - mu) * jax.lax.rsqrt(var + LN_EPS) * g + b

    def heads_attention(q, k, v, lq, bias):
        # q/k/v: (n, l, E); head h lives in lanes [h*HEAD_DIM, (h+1)*HEAD_DIM).
        # 1/sqrt(D) already folded into Wq; mask is an additive bias.
        outs = []
        for h in range(HEADS):
            sl = slice(h * HEAD_DIM, (h + 1) * HEAD_DIM)
            logits = jnp.einsum('nqd,nkd->nqk', q[..., sl], k[..., sl],
                                preferred_element_type=jnp.float32) + bias
            logits = logits - jnp.max(logits, axis=-1, keepdims=True)
            p = jnp.exp(logits)
            denom = jnp.sum(p, axis=-1, keepdims=True)
            inv = pl.reciprocal(denom, approx=True)          # EUP slot
            inv = inv * (2.0 - denom * inv)                   # Newton step -> f32 accuracy
            outs.append(jnp.einsum('nqk,nkd->nqd', p * inv, v[..., sl],
                                   preferred_element_type=jnp.float32))
        return jnp.concatenate(outs, axis=-1).reshape(n * lq, e)

    # ---- 1) masked self-attention: fused QKV (one MXU matmul) + residual + LN
    qkv = jnp.dot(xf, wself_ref[:, 0:e3], preferred_element_type=jnp.float32)  # (N*T, 3E)
    q1 = qkv[:, 0:e].reshape(n, t, e)
    k1 = qkv[:, e:2 * e].reshape(n, t, e)
    v1 = qkv[:, 2 * e:e3].reshape(n, t, e)
    ctx1 = heads_attention(q1, k1, v1, t, tbias_ref[...])
    att1 = jnp.dot(ctx1, wself_ref[:, e3:], preferred_element_type=jnp.float32) \
        + vec_ref[0:1, :e]
    query = layernorm(att1 + xf, vec_ref[1:2, :e], vec_ref[2:3, :e])   # dropout = identity

    # ---- 2) cross-attention: Q from query, fused K/V from stacked encoder slab
    q2 = jnp.dot(query, wcross_ref[:, 0:e],
                 preferred_element_type=jnp.float32).reshape(n, t, e)
    kv = jnp.dot(ekv_ref[...], wcross_ref[:, e:e3],
                 preferred_element_type=jnp.float32)                   # (2*N*S, 2E)
    k2 = kv[0:ns, 0:e].reshape(n, s, e)          # enc_key  @ Wk
    v2 = kv[ns:2 * ns, e:2 * e].reshape(n, s, e)  # enc_value @ Wv
    ctx2 = heads_attention(q2, k2, v2, t, sbias_ref[...])   # (N,1,S) bias broadcasts
    att2 = jnp.dot(ctx2, wcross_ref[:, e3:], preferred_element_type=jnp.float32) \
        + vec_ref[3:4, :e]
    h1 = layernorm(att2 + query, vec_ref[4:5, :e], vec_ref[5:6, :e])

    # ---- 3) feed-forward (Linear -> ReLU -> Linear) + residual + LN2
    hid = jnp.maximum(
        jnp.dot(h1, wffn_ref[0:e, :], preferred_element_type=jnp.float32)
        + vec_ref[9:10, :], 0.0)                                       # (N*T, FF)
    ff2 = jnp.dot(hid, wffn_ref[e:, :], preferred_element_type=jnp.float32)
    ffo = ff2[:, :e] + vec_ref[6:7, :e]          # cols >= E of padded W2 are zero
    out_ref[...] = layernorm(ffo + h1, vec_ref[7:8, :e], vec_ref[8:9, :e])


def decoder_block_forward(x, enc_value, enc_key, src_mask_keys, trg_mask, params):
    """x:(N,T,E) f32, enc_value/enc_key:(N,S,E) f32,
    src_mask_keys:(N,S) {0,1}, trg_mask:(N,T,T) {0,1}."""
    N, T, E = x.shape
    S = enc_key.shape[1]
    inv_scale = 1.0 / float(HEAD_DIM) ** 0.5
    neg = jnp.float32(-1e19 * inv_scale)   # masked_fill value, pre-divided by scale

    # additive mask biases, precomputed outside the kernel
    trg_bias = jnp.where(trg_mask == 0, neg, jnp.float32(0.0))                 # (N,T,T)
    src_bias = jnp.where(src_mask_keys[:, None, :] == 0, neg, jnp.float32(0.0))  # (N,1,S)

    sa, ca = params['self_attn'], params['cross_attn']

    def bd(w):
        """nn.Linear weight (D,D) -> block-diag (E,E) of w.T (same block per head)."""
        return jnp.kron(jnp.eye(HEADS, dtype=w.dtype), w.T)

    def attn_slab(p):
        # (E, 4E): [Wq_bd*inv_scale | Wk_bd | Wv_bd | Wo^T]
        return jnp.concatenate(
            [bd(p['wq']) * inv_scale, bd(p['wk']), bd(p['wv']), p['wo'].T], axis=1)

    self_w = attn_slab(sa)                    # (E, 4E) = (32, 128)
    cross_w = attn_slab(ca)                   # (E, 4E) = (32, 128)

    # FFN slab (E+FF, FF): rows 0:E = W1^T, rows E: = W2^T zero-padded to FF cols.
    wff2_t_pad = jnp.zeros((FF, FF), jnp.float32).at[:, :E].set(params['wff2'].T)
    ffn_w = jnp.concatenate([params['wff1'].T, wff2_t_pad], axis=0)    # (160, 128)

    def pad_row(v):                           # pad an (E,) vector to FF(=128) lanes
        return jnp.pad(v, (0, FF - v.shape[0]))

    vec = jnp.stack([pad_row(sa['bo']), pad_row(params['g0']), pad_row(params['b0']),
                     pad_row(ca['bo']), pad_row(params['g1']), pad_row(params['b1']),
                     pad_row(params['bff2']), pad_row(params['g2']), pad_row(params['b2']),
                     params['bff1']])                                   # (10, 128)

    # row-stacked encoder slab: rows 0:N*S = keys, N*S:2*N*S = values
    ekv = jnp.concatenate([enc_key.reshape(N * S, E),
                           enc_value.reshape(N * S, E)], axis=0)        # (2*N*S, E)

    args = (x, ekv, trg_bias, src_bias, self_w, cross_w, ffn_w, vec)
    vmem = pl.BlockSpec(memory_space=pltpu.MemorySpace.VMEM)
    out2d = pl.pallas_call(
        decoder_block_kernel,
        out_shape=jax.ShapeDtypeStruct((N * T, E), jnp.float32),
        in_specs=[vmem] * len(args),
        out_specs=vmem,
    )(*args)
    return out2d.reshape(N, T, E)


# ---------------- pure-JAX reference (mirrors the PyTorch math) ----------------
def _layernorm_ref(h, g, b):
    mu = jnp.mean(h, axis=-1, keepdims=True)
    var = jnp.mean((h - mu) ** 2, axis=-1, keepdims=True)
    return (h - mu) * jax.lax.rsqrt(var + LN_EPS) * g + b


def _attention_ref(values, keys, queries, mask4, p):
    n, lq = queries.shape[0], queries.shape[1]
    lk, lv = keys.shape[1], values.shape[1]
    v = values.reshape(n, lv, HEADS, HEAD_DIM) @ p['wv'].T
    k = keys.reshape(n, lk, HEADS, HEAD_DIM) @ p['wk'].T
    q = queries.reshape(n, lq, HEADS, HEAD_DIM) @ p['wq'].T
    energy = jnp.einsum('nqhd,nkhd->nhqk', q, k)
    energy = jnp.where(mask4 == 0, jnp.float32(-1e19), energy)
    att = jax.nn.softmax(energy / (HEAD_DIM ** 0.5), axis=3)
    out = jnp.einsum('nhql,nlhd->nqhd', att, v).reshape(n, lq, EMBED)
    return out @ p['wo'].T + p['bo']


def _decoder_block_ref(x, value, key, src_mask4, trg_mask4, params):
    att = _attention_ref(x, x, x, trg_mask4, params['self_attn'])
    query = _layernorm_ref(att + x, params['g0'], params['b0'])
    att2 = _attention_ref(value, key, query, src_mask4, params['cross_attn'])
    h1 = _layernorm_ref(att2 + query, params['g1'], params['b1'])
    ff = jax.nn.relu(h1 @ params['wff1'].T + params['bff1']) @ params['wff2'].T + params['bff2']
    return _layernorm_ref(ff + h1, params['g2'], params['b2'])


# ---------------- deterministic parameter init ----------------
def init_params(key):
    ks = jax.random.split(key, 12)

    def attn_params(k):
        ka, kb, kc, kd, ke = jax.random.split(k, 5)
        return {
            'wq': 0.3 * jax.random.normal(ka, (HEAD_DIM, HEAD_DIM), jnp.float32),
            'wk': 0.3 * jax.random.normal(kb, (HEAD_DIM, HEAD_DIM), jnp.float32),
            'wv': 0.3 * jax.random.normal(kc, (HEAD_DIM, HEAD_DIM), jnp.float32),
            'wo': 0.15 * jax.random.normal(kd, (EMBED, EMBED), jnp.float32),
            'bo': 0.05 * jax.random.normal(ke, (EMBED,), jnp.float32),
        }

    return {
        'self_attn': attn_params(ks[0]),
        'cross_attn': attn_params(ks[1]),
        'g0': 1.0 + 0.1 * jax.random.normal(ks[2], (EMBED,), jnp.float32),
        'b0': 0.05 * jax.random.normal(ks[3], (EMBED,), jnp.float32),
        'g1': 1.0 + 0.1 * jax.random.normal(ks[4], (EMBED,), jnp.float32),
        'b1': 0.05 * jax.random.normal(ks[5], (EMBED,), jnp.float32),
        'g2': 1.0 + 0.1 * jax.random.normal(ks[6], (EMBED,), jnp.float32),
        'b2': 0.05 * jax.random.normal(ks[7], (EMBED,), jnp.float32),
        'wff1': 0.1 * jax.random.normal(ks[8], (FF, EMBED), jnp.float32),
        'bff1': 0.05 * jax.random.normal(ks[9], (FF,), jnp.float32),
        'wff2': 0.1 * jax.random.normal(ks[10], (EMBED, FF), jnp.float32),
        'bff2': 0.05 * jax.random.normal(ks[11], (EMBED,), jnp.float32),
    }


if __name__ == "__main__":
    N, T, S = 2, 8, 16      # batch, target (decoder) seq len, source (encoder) seq len
    root = jax.random.PRNGKey(0)
    kp, kx, kv, kk = jax.random.split(root, 4)
    params = init_params(kp)

    x = jax.random.normal(kx, (N, T, EMBED), jnp.float32)
    enc_value = jax.random.normal(kv, (N, S, EMBED), jnp.float32)
    enc_key = jax.random.normal(kk, (N, S, EMBED), jnp.float32)

    # src padding mask (sample 0 has 11 valid source tokens) and causal trg mask
    src_valid = jnp.array([11, 16])
    src_mask_keys = (jnp.arange(S)[None, :] < src_valid[:, None]).astype(jnp.int32)   # (N,S)
    trg_mask = jnp.broadcast_to(jnp.tril(jnp.ones((T, T), jnp.int32)), (N, T, T))     # (N,T,T)

    out = decoder_block_forward(x, enc_value, enc_key, src_mask_keys, trg_mask, params)
    out = jax.block_until_ready(out)

    ref = _decoder_block_ref(x, enc_value, enc_key,
                             src_mask_keys[:, None, None, :], trg_mask[:, None, :, :],
                             params)
    ref = jax.block_until_ready(ref)

    assert out.shape == (N, T, EMBED)
    assert bool(jnp.allclose(out, ref, rtol=1e-4, atol=1e-4)), "mismatch vs reference"

    print("KERNEL_OK")
</pallas_src>

<mosaic_0001>
module attributes {stable_mosaic.version = 11 : i64} {
  func.func @decoder_block_kernel(%arg0: memref<2x8x32xf32, #tpu.memory_space<vmem>>, %arg1: memref<64x32xf32, #tpu.memory_space<vmem>>, %arg2: memref<2x8x8xf32, #tpu.memory_space<vmem>>, %arg3: memref<2x1x16xf32, #tpu.memory_space<vmem>>, %arg4: memref<32x128xf32, #tpu.memory_space<vmem>>, %arg5: memref<32x128xf32, #tpu.memory_space<vmem>>, %arg6: memref<160x128xf32, #tpu.memory_space<vmem>>, %arg7: memref<10x128xf32, #tpu.memory_space<vmem>>, %arg8: memref<16x32xf32, #tpu.memory_space<vmem>>) attributes {dimension_semantics = [], scalar_prefetch = 0 : i64, scratch_operands = 0 : i64, tpu.core_type = #tpu.core_type<tc>} {
    %c0 = arith.constant 0 : index
    %c0_0 = arith.constant 0 : index
    %c0_1 = arith.constant 0 : index
    %0 = vector.load %arg0[%c0, %c0_0, %c0_1] : memref<2x8x32xf32, #tpu.memory_space<vmem>>, vector<2x8x32xf32>
    %1 = vector.shape_cast %0 : vector<2x8x32xf32> to vector<16x32xf32>
    %c0_2 = arith.constant 0 : index
    %c0_3 = arith.constant 0 : index
    %2 = vector.load %arg4[%c0_2, %c0_3] : memref<32x128xf32, #tpu.memory_space<vmem>>, vector<32x96xf32>
    %cst = arith.constant dense<0.000000e+00> : vector<16x96xf32>
    %3 = tpu.matmul %1, %2, %cst {dimension_numbers = #tpu.dot_dimension_numbers<[1], [0], [0], [1], [0, 0, 1, 1], [], []>} : vector<16x32xf32>, vector<32x96xf32>, vector<16x96xf32> -> vector<16x96xf32>
    %4 = vector.extract_strided_slice %3 {offsets = [0, 0], sizes = [16, 32], strides = [1, 1]} : vector<16x96xf32> to vector<16x32xf32>
    %5 = vector.shape_cast %4 : vector<16x32xf32> to vector<2x8x32xf32>
    %6 = vector.extract_strided_slice %3 {offsets = [0, 32], sizes = [16, 32], strides = [1, 1]} : vector<16x96xf32> to vector<16x32xf32>
    %7 = vector.shape_cast %6 : vector<16x32xf32> to vector<2x8x32xf32>
    %8 = vector.extract_strided_slice %3 {offsets = [0, 64], sizes = [16, 32], strides = [1, 1]} : vector<16x96xf32> to vector<16x32xf32>
    %9 = vector.shape_cast %8 : vector<16x32xf32> to vector<2x8x32xf32>
    %c0_4 = arith.constant 0 : index
    %c0_5 = arith.constant 0 : index
    %c0_6 = arith.constant 0 : index
    %10 = vector.load %arg2[%c0_4, %c0_5, %c0_6] : memref<2x8x8xf32, #tpu.memory_space<vmem>>, vector<2x8x8xf32>
    %11 = vector.extract_strided_slice %5 {offsets = [0, 0, 0], sizes = [2, 8, 8], strides = [1, 1, 1]} : vector<2x8x32xf32> to vector<2x8x8xf32>
    %12 = vector.extract_strided_slice %7 {offsets = [0, 0, 0], sizes = [2, 8, 8], strides = [1, 1, 1]} : vector<2x8x32xf32> to vector<2x8x8xf32>
    "tpu.trace_start"() <{level = 10 : i32, message = "nqd,nkd->nqk"}> : () -> ()
    %cst_7 = arith.constant dense<0.000000e+00> : vector<2x8x8xf32>
    %13 = tpu.matmul %11, %12, %cst_7 {dimension_numbers = #tpu.dot_dimension_numbers<[2], [2], [1], [1], [0, 0, 0, 1, 1, 1], [0], [0]>} : vector<2x8x8xf32>, vector<2x8x8xf32>, vector<2x8x8xf32> -> vector<2x8x8xf32>
    "tpu.trace_stop"() : () -> ()
    %14 = arith.addf %13, %10 : vector<2x8x8xf32>
    %cst_8 = arith.constant dense<0xFF800000> : vector<2x8xf32>
    %15 = vector.multi_reduction <maximumf>, %14, %cst_8 [2] : vector<2x8x8xf32> to vector<2x8xf32>
    %16 = vector.shape_cast %15 : vector<2x8xf32> to vector<2x8x1xf32>
    %17 = vector.broadcast %16 : vector<2x8x1xf32> to vector<2x8x8xf32>
    %18 = arith.subf %14, %17 : vector<2x8x8xf32>
    %19 = math.exp %18 : vector<2x8x8xf32>
    %cst_9 = arith.constant dense<0.000000e+00> : vector<2x8xf32>
    %20 = vector.multi_reduction <add>, %19, %cst_9 [2] : vector<2x8x8xf32> to vector<2x8xf32>
    %21 = vector.shape_cast %20 : vector<2x8xf32> to vector<2x8x1xf32>
    %22 = tpu.reciprocal %21 {approx = true} : vector<2x8x1xf32> -> vector<2x8x1xf32>
    %23 = arith.mulf %21, %22 : vector<2x8x1xf32>
    %cst_10 = arith.constant 2.000000e+00 : f32
    %24 = vector.broadcast %cst_10 : f32 to vector<2x8x1xf32>
    %25 = arith.subf %24, %23 : vector<2x8x1xf32>
    %26 = arith.mulf %22, %25 : vector<2x8x1xf32>
    %27 = vector.broadcast %26 : vector<2x8x1xf32> to vector<2x8x8xf32>
    %28 = arith.mulf %19, %27 : vector<2x8x8xf32>
    %29 = vector.extract_strided_slice %9 {offsets = [0, 0, 0], sizes = [2, 8, 8], strides = [1, 1, 1]} : vector<2x8x32xf32> to vector<2x8x8xf32>
    "tpu.trace_start"() <{level = 10 : i32, message = "nqk,nkd->nqd"}> : () -> ()
    %cst_11 = arith.constant dense<0.000000e+00> : vector<2x8x8xf32>
    %30 = tpu.matmul %28, %29, %cst_11 {dimension_numbers = #tpu.dot_dimension_numbers<[2], [1], [1], [2], [0, 0, 0, 1, 1, 2], [0], [0]>} : vector<2x8x8xf32>, vector<2x8x8xf32>, vector<2x8x8xf32> -> vector<2x8x8xf32>
    "tpu.trace_stop"() : () -> ()
    %31 = vector.extract_strided_slice %5 {offsets = [0, 0, 8], sizes = [2, 8, 8], strides = [1, 1, 1]} : vector<2x8x32xf32> to vector<2x8x8xf32>
    %32 = vector.extract_strided_slice %7 {offsets = [0, 0, 8], sizes = [2, 8, 8], strides = [1, 1, 1]} : vector<2x8x32xf32> to vector<2x8x8xf32>
    "tpu.trace_start"() <{level = 10 : i32, message = "nqd,nkd->nqk"}> : () -> ()
    %cst_12 = arith.constant dense<0.000000e+00> : vector<2x8x8xf32>
    %33 = tpu.matmul %31, %32, %cst_12 {dimension_numbers = #tpu.dot_dimension_numbers<[2], [2], [1], [1], [0, 0, 0, 1, 1, 1], [0], [0]>} : vector<2x8x8xf32>, vector<2x8x8xf32>, vector<2x8x8xf32> -> vector<2x8x8xf32>
    "tpu.trace_stop"() : () -> ()
    %34 = arith.addf %33, %10 : vector<2x8x8xf32>
    %cst_13 = arith.constant dense<0xFF800000> : vector<2x8xf32>
    %35 = vector.multi_reduction <maximumf>, %34, %cst_13 [2] : vector<2x8x8xf32> to vector<2x8xf32>
    %36 = vector.shape_cast %35 : vector<2x8xf32> to vector<2x8x1xf32>
    %37 = vector.broadcast %36 : vector<2x8x1xf32> to vector<2x8x8xf32>
    %38 = arith.subf %34, %37 : vector<2x8x8xf32>
    %39 = math.exp %38 : vector<2x8x8xf32>
    %cst_14 = arith.constant dense<0.000000e+00> : vector<2x8xf32>
    %40 = vector.multi_reduction <add>, %39, %cst_14 [2] : vector<2x8x8xf32> to vector<2x8xf32>
    %41 = vector.shape_cast %40 : vector<2x8xf32> to vector<2x8x1xf32>
    %42 = tpu.reciprocal %41 {approx = true} : vector<2x8x1xf32> -> vector<2x8x1xf32>
    %43 = arith.mulf %41, %42 : vector<2x8x1xf32>
    %cst_15 = arith.constant 2.000000e+00 : f32
    %44 = vector.broadcast %cst_15 : f32 to vector<2x8x1xf32>
    %45 = arith.subf %44, %43 : vector<2x8x1xf32>
    %46 = arith.mulf %42, %45 : vector<2x8x1xf32>
    %47 = vector.broadcast %46 : vector<2x8x1xf32> to vector<2x8x8xf32>
    %48 = arith.mulf %39, %47 : vector<2x8x8xf32>
    %49 = vector.extract_strided_slice %9 {offsets = [0, 0, 8], sizes = [2, 8, 8], strides = [1, 1, 1]} : vector<2x8x32xf32> to vector<2x8x8xf32>
    "tpu.trace_start"() <{level = 10 : i32, message = "nqk,nkd->nqd"}> : () -> ()
    %cst_16 = arith.constant dense<0.000000e+00> : vector<2x8x8xf32>
    %50 = tpu.matmul %48, %49, %cst_16 {dimension_numbers = #tpu.dot_dimension_numbers<[2], [1], [1], [2], [0, 0, 0, 1, 1, 2], [0], [0]>} : vector<2x8x8xf32>, vector<2x8x8xf32>, vector<2x8x8xf32> -> vector<2x8x8xf32>
    "tpu.trace_stop"() : () -> ()
    %51 = vector.extract_strided_slice %5 {offsets = [0, 0, 16], sizes = [2, 8, 8], strides = [1, 1, 1]} : vector<2x8x32xf32> to vector<2x8x8xf32>
    %52 = vector.extract_strided_slice %7 {offsets = [0, 0, 16], sizes = [2, 8, 8], strides = [1, 1, 1]} : vector<2x8x32xf32> to vector<2x8x8xf32>
    "tpu.trace_start"() <{level = 10 : i32, message = "nqd,nkd->nqk"}> : () -> ()
    %cst_17 = arith.constant dense<0.000000e+00> : vector<2x8x8xf32>
    %53 = tpu.matmul %51, %52, %cst_17 {dimension_numbers = #tpu.dot_dimension_numbers<[2], [2], [1], [1], [0, 0, 0, 1, 1, 1], [0], [0]>} : vector<2x8x8xf32>, vector<2x8x8xf32>, vector<2x8x8xf32> -> vector<2x8x8xf32>
    "tpu.trace_stop"() : () -> ()
    %54 = arith.addf %53, %10 : vector<2x8x8xf32>
    %cst_18 = arith.constant dense<0xFF800000> : vector<2x8xf32>
    %55 = vector.multi_reduction <maximumf>, %54, %cst_18 [2] : vector<2x8x8xf32> to vector<2x8xf32>
    %56 = vector.shape_cast %55 : vector<2x8xf32> to vector<2x8x1xf32>
    %57 = vector.broadcast %56 : vector<2x8x1xf32> to vector<2x8x8xf32>
    %58 = arith.subf %54, %57 : vector<2x8x8xf32>
    %59 = math.exp %58 : vector<2x8x8xf32>
    %cst_19 = arith.constant dense<0.000000e+00> : vector<2x8xf32>
    %60 = vector.multi_reduction <add>, %59, %cst_19 [2] : vector<2x8x8xf32> to vector<2x8xf32>
    %61 = vector.shape_cast %60 : vector<2x8xf32> to vector<2x8x1xf32>
    %62 = tpu.reciprocal %61 {approx = true} : vector<2x8x1xf32> -> vector<2x8x1xf32>
    %63 = arith.mulf %61, %62 : vector<2x8x1xf32>
    %cst_20 = arith.constant 2.000000e+00 : f32
    %64 = vector.broadcast %cst_20 : f32 to vector<2x8x1xf32>
    %65 = arith.subf %64, %63 : vector<2x8x1xf32>
    %66 = arith.mulf %62, %65 : vector<2x8x1xf32>
    %67 = vector.broadcast %66 : vector<2x8x1xf32> to vector<2x8x8xf32>
    %68 = arith.mulf %59, %67 : vector<2x8x8xf32>
    %69 = vector.extract_strided_slice %9 {offsets = [0, 0, 16], sizes = [2, 8, 8], strides = [1, 1, 1]} : vector<2x8x32xf32> to vector<2x8x8xf32>
    "tpu.trace_start"() <{level = 10 : i32, message = "nqk,nkd->nqd"}> : () -> ()
    %cst_21 = arith.constant dense<0.000000e+00> : vector<2x8x8xf32>
    %70 = tpu.matmul %68, %69, %cst_21 {dimension_numbers = #tpu.dot_dimension_numbers<[2], [1], [1], [2], [0, 0, 0, 1, 1, 2], [0], [0]>} : vector<2x8x8xf32>, vector<2x8x8xf32>, vector<2x8x8xf32> -> vector<2x8x8xf32>
    "tpu.trace_stop"() : () -> ()
    %71 = vector.extract_strided_slice %5 {offsets = [0, 0, 24], sizes = [2, 8, 8], strides = [1, 1, 1]} : vector<2x8x32xf32> to vector<2x8x8xf32>
    %72 = vector.extract_strided_slice %7 {offsets = [0, 0, 24], sizes = [2, 8, 8], strides = [1, 1, 1]} : vector<2x8x32xf32> to vector<2x8x8xf32>
    "tpu.trace_start"() <{level = 10 : i32, message = "nqd,nkd->nqk"}> : () -> ()
    %cst_22 = arith.constant dense<0.000000e+00> : vector<2x8x8xf32>
    %73 = tpu.matmul %71, %72, %cst_22 {dimension_numbers = #tpu.dot_dimension_numbers<[2], [2], [1], [1], [0, 0, 0, 1, 1, 1], [0], [0]>} : vector<2x8x8xf32>, vector<2x8x8xf32>, vector<2x8x8xf32> -> vector<2x8x8xf32>
    "tpu.trace_stop"() : () -> ()
    %74 = arith.addf %73, %10 : vector<2x8x8xf32>
    %cst_23 = arith.constant dense<0xFF800000> : vector<2x8xf32>
    %75 = vector.multi_reduction <maximumf>, %74, %cst_23 [2] : vector<2x8x8xf32> to vector<2x8xf32>
    %76 = vector.shape_cast %75 : vector<2x8xf32> to vector<2x8x1xf32>
    %77 = vector.broadcast %76 : vector<2x8x1xf32> to vector<2x8x8xf32>
    %78 = arith.subf %74, %77 : vector<2x8x8xf32>
    %79 = math.exp %78 : vector<2x8x8xf32>
    %cst_24 = arith.constant dense<0.000000e+00> : vector<2x8xf32>
    %80 = vector.multi_reduction <add>, %79, %cst_24 [2] : vector<2x8x8xf32> to vector<2x8xf32>
    %81 = vector.shape_cast %80 : vector<2x8xf32> to vector<2x8x1xf32>
    %82 = tpu.reciprocal %81 {approx = true} : vector<2x8x1xf32> -> vector<2x8x1xf32>
    %83 = arith.mulf %81, %82 : vector<2x8x1xf32>
    %cst_25 = arith.constant 2.000000e+00 : f32
    %84 = vector.broadcast %cst_25 : f32 to vector<2x8x1xf32>
    %85 = arith.subf %84, %83 : vector<2x8x1xf32>
    %86 = arith.mulf %82, %85 : vector<2x8x1xf32>
    %87 = vector.broadcast %86 : vector<2x8x1xf32> to vector<2x8x8xf32>
    %88 = arith.mulf %79, %87 : vector<2x8x8xf32>
    %89 = vector.extract_strided_slice %9 {offsets = [0, 0, 24], sizes = [2, 8, 8], strides = [1, 1, 1]} : vector<2x8x32xf32> to vector<2x8x8xf32>
    "tpu.trace_start"() <{level = 10 : i32, message = "nqk,nkd->nqd"}> : () -> ()
    %cst_26 = arith.constant dense<0.000000e+00> : vector<2x8x8xf32>
    %90 = tpu.matmul %88, %89, %cst_26 {dimension_numbers = #tpu.dot_dimension_numbers<[2], [1], [1], [2], [0, 0, 0, 1, 1, 2], [0], [0]>} : vector<2x8x8xf32>, vector<2x8x8xf32>, vector<2x8x8xf32> -> vector<2x8x8xf32>
    "tpu.trace_stop"() : () -> ()
    %91 = tpu.concatenate %30, %50, %70, %90 in 2 : vector<2x8x8xf32>, vector<2x8x8xf32>, vector<2x8x8xf32>, vector<2x8x8xf32> -> vector<2x8x32xf32>
    %92 = vector.shape_cast %91 : vector<2x8x32xf32> to vector<16x32xf32>
    %c0_27 = arith.constant 0 : index
    %c96 = arith.constant 96 : index
    %93 = vector.load %arg4[%c0_27, %c96] : memref<32x128xf32, #tpu.memory_space<vmem>>, vector<32x32xf32>
    %cst_28 = arith.constant dense<0.000000e+00> : vector<16x32xf32>
    %94 = tpu.matmul %92, %93, %cst_28 {dimension_numbers = #tpu.dot_dimension_numbers<[1], [0], [0], [1], [0, 0, 1, 1], [], []>} : vector<16x32xf32>, vector<32x32xf32>, vector<16x32xf32> -> vector<16x32xf32>
    %c0_29 = arith.constant 0 : index
    %c0_30 = arith.constant 0 : index
    %95 = vector.load %arg7[%c0_29, %c0_30] : memref<10x128xf32, #tpu.memory_space<vmem>>, vector<1x32xf32>
    %96 = vector.broadcast %95 : vector<1x32xf32> to vector<16x32xf32>
    %97 = arith.addf %94, %96 : vector<16x32xf32>
    %98 = arith.addf %97, %1 : vector<16x32xf32>
    %c1 = arith.constant 1 : index
    %c0_31 = arith.constant 0 : index
    %99 = vector.load %arg7[%c1, %c0_31] : memref<10x128xf32, #tpu.memory_space<vmem>>, vector<1x32xf32>
    %c2 = arith.constant 2 : index
    %c0_32 = arith.constant 0 : index
    %100 = vector.load %arg7[%c2, %c0_32] : memref<10x128xf32, #tpu.memory_space<vmem>>, vector<1x32xf32>
    %cst_33 = arith.constant dense<0.000000e+00> : vector<16xf32>
    %101 = vector.multi_reduction <add>, %98, %cst_33 [1] : vector<16x32xf32> to vector<16xf32>
    %102 = vector.shape_cast %101 : vector<16xf32> to vector<16x1xf32>
    %cst_34 = arith.constant 3.200000e+01 : f32
    %103 = vector.broadcast %cst_34 : f32 to vector<16x1xf32>
    %104 = arith.divf %102, %103 : vector<16x1xf32>
    %105 = vector.broadcast %104 : vector<16x1xf32> to vector<16x32xf32>
    %106 = arith.subf %98, %105 : vector<16x32xf32>
    %107 = arith.mulf %106, %106 : vector<16x32xf32>
    %cst_35 = arith.constant dense<0.000000e+00> : vector<16xf32>
    %108 = vector.multi_reduction <add>, %107, %cst_35 [1] : vector<16x32xf32> to vector<16xf32>
    %109 = vector.shape_cast %108 : vector<16xf32> to vector<16x1xf32>
    %cst_36 = arith.constant 3.200000e+01 : f32
    %110 = vector.broadcast %cst_36 : f32 to vector<16x1xf32>
    %111 = arith.divf %109, %110 : vector<16x1xf32>
    %112 = vector.broadcast %104 : vector<16x1xf32> to vector<16x32xf32>
    %113 = arith.subf %98, %112 : vector<16x32xf32>
    %cst_37 = arith.constant 9.99999974E-6 : f32
    %114 = vector.broadcast %cst_37 : f32 to vector<16x1xf32>
    %115 = arith.addf %111, %114 : vector<16x1xf32>
    %116 = math.rsqrt %115 : vector<16x1xf32>
    %117 = vector.broadcast %116 : vector<16x1xf32> to vector<16x32xf32>
    %118 = arith.mulf %113, %117 : vector<16x32xf32>
    %119 = vector.broadcast %99 : vector<1x32xf32> to vector<16x32xf32>
    %120 = arith.mulf %118, %119 : vector<16x32xf32>
    %121 = vector.broadcast %100 : vector<1x32xf32> to vector<16x32xf32>
    %122 = arith.addf %120, %121 : vector<16x32xf32>
    %c0_38 = arith.constant 0 : index
    %c0_39 = arith.constant 0 : index
    %123 = vector.load %arg5[%c0_38, %c0_39] : memref<32x128xf32, #tpu.memory_space<vmem>>, vector<32x32xf32>
    %cst_40 = arith.constant dense<0.000000e+00> : vector<16x32xf32>
    %124 = tpu.matmul %122, %123, %cst_40 {dimension_numbers = #tpu.dot_dimension_numbers<[1], [0], [0], [1], [0, 0, 1, 1], [], []>} : vector<16x32xf32>, vector<32x32xf32>, vector<16x32xf32> -> vector<16x32xf32>
    %125 = vector.shape_cast %124 : vector<16x32xf32> to vector<2x8x32xf32>
    %c0_41 = arith.constant 0 : index
    %c0_42 = arith.constant 0 : index
    %126 = vector.load %arg1[%c0_41, %c0_42] : memref<64x32xf32, #tpu.memory_space<vmem>>, vector<64x32xf32>
    %c0_43 = arith.constant 0 : index
    %c32 = arith.constant 32 : index
    %127 = vector.load %arg5[%c0_43, %c32] : memref<32x128xf32, #tpu.memory_space<vmem>>, vector<32x64xf32>
    %cst_44 = arith.constant dense<0.000000e+00> : vector<64x64xf32>
    %128 = tpu.matmul %126, %127, %cst_44 {dimension_numbers = #tpu.dot_dimension_numbers<[1], [0], [0], [1], [0, 0, 1, 1], [], []>} : vector<64x32xf32>, vector<32x64xf32>, vector<64x64xf32> -> vector<64x64xf32>
    %129 = vector.extract_strided_slice %128 {offsets = [0, 0], sizes = [32, 32], strides = [1, 1]} : vector<64x64xf32> to vector<32x32xf32>
    %130 = vector.shape_cast %129 : vector<32x32xf32> to vector<2x16x32xf32>
    %131 = vector.extract_strided_slice %128 {offsets = [32, 32], sizes = [32, 32], strides = [1, 1]} : vector<64x64xf32> to vector<32x32xf32>
    %132 = vector.shape_cast %131 : vector<32x32xf32> to vector<2x16x32xf32>
    %c0_45 = arith.constant 0 : index
    %c0_46 = arith.constant 0 : index
    %c0_47 = arith.constant 0 : index
    %133 = vector.load %arg3[%c0_45, %c0_46, %c0_47] : memref<2x1x16xf32, #tpu.memory_space<vmem>>, vector<2x1x16xf32>
    %134 = vector.extract_strided_slice %125 {offsets = [0, 0, 0], sizes = [2, 8, 8], strides = [1, 1, 1]} : vector<2x8x32xf32> to vector<2x8x8xf32>
    %135 = vector.extract_strided_slice %130 {offsets = [0, 0, 0], sizes = [2, 16, 8], strides = [1, 1, 1]} : vector<2x16x32xf32> to vector<2x16x8xf32>
    "tpu.trace_start"() <{level = 10 : i32, message = "nqd,nkd->nqk"}> : () -> ()
    %cst_48 = arith.constant dense<0.000000e+00> : vector<2x8x16xf32>
    %136 = tpu.matmul %134, %135, %cst_48 {dimension_numbers = #tpu.dot_dimension_numbers<[2], [2], [1], [1], [0, 0, 0, 1, 1, 1], [0], [0]>} : vector<2x8x8xf32>, vector<2x16x8xf32>, vector<2x8x16xf32> -> vector<2x8x16xf32>
    "tpu.trace_stop"() : () -> ()
    %137 = vector.broadcast %133 : vector<2x1x16xf32> to vector<2x8x16xf32>
    %138 = arith.addf %136, %137 : vector<2x8x16xf32>
    %cst_49 = arith.constant dense<0xFF800000> : vector<2x8xf32>
    %139 = vector.multi_reduction <maximumf>, %138, %cst_49 [2] : vector<2x8x16xf32> to vector<2x8xf32>
    %140 = vector.shape_cast %139 : vector<2x8xf32> to vector<2x8x1xf32>
    %141 = vector.broadcast %140 : vector<2x8x1xf32> to vector<2x8x16xf32>
    %142 = arith.subf %138, %141 : vector<2x8x16xf32>
    %143 = math.exp %142 : vector<2x8x16xf32>
    %cst_50 = arith.constant dense<0.000000e+00> : vector<2x8xf32>
    %144 = vector.multi_reduction <add>, %143, %cst_50 [2] : vector<2x8x16xf32> to vector<2x8xf32>
    %145 = vector.shape_cast %144 : vector<2x8xf32> to vector<2x8x1xf32>
    %146 = tpu.reciprocal %145 {approx = true} : vector<2x8x1xf32> -> vector<2x8x1xf32>
    %147 = arith.mulf %145, %146 : vector<2x8x1xf32>
    %cst_51 = arith.constant 2.000000e+00 : f32
    %148 = vector.broadcast %cst_51 : f32 to vector<2x8x1xf32>
    %149 = arith.subf %148, %147 : vector<2x8x1xf32>
    %150 = arith.mulf %146, %149 : vector<2x8x1xf32>
    %151 = vector.broadcast %150 : vector<2x8x1xf32> to vector<2x8x16xf32>
    %152 = arith.mulf %143, %151 : vector<2x8x16xf32>
    %153 = vector.extract_strided_slice %132 {offsets = [0, 0, 0], sizes = [2, 16, 8], strides = [1, 1, 1]} : vector<2x16x32xf32> to vector<2x16x8xf32>
    "tpu.trace_start"() <{level = 10 : i32, message = "nqk,nkd->nqd"}> : () -> ()
    %cst_52 = arith.constant dense<0.000000e+00> : vector<2x8x8xf32>
    %154 = tpu.matmul %152, %153, %cst_52 {dimension_numbers = #tpu.dot_dimension_numbers<[2], [1], [1], [2], [0, 0, 0, 1, 1, 2], [0], [0]>} : vector<2x8x16xf32>, vector<2x16x8xf32>, vector<2x8x8xf32> -> vector<2x8x8xf32>
    "tpu.trace_stop"() : () -> ()
    %155 = vector.extract_strided_slice %125 {offsets = [0, 0, 8], sizes = [2, 8, 8], strides = [1, 1, 1]} : vector<2x8x32xf32> to vector<2x8x8xf32>
    %156 = vector.extract_strided_slice %130 {offsets = [0, 0, 8], sizes = [2, 16, 8], strides = [1, 1, 1]} : vector<2x16x32xf32> to vector<2x16x8xf32>
    "tpu.trace_start"() <{level = 10 : i32, message = "nqd,nkd->nqk"}> : () -> ()
    %cst_53 = arith.constant dense<0.000000e+00> : vector<2x8x16xf32>
    %157 = tpu.matmul %155, %156, %cst_53 {dimension_numbers = #tpu.dot_dimension_numbers<[2], [2], [1], [1], [0, 0, 0, 1, 1, 1], [0], [0]>} : vector<2x8x8xf32>, vector<2x16x8xf32>, vector<2x8x16xf32> -> vector<2x8x16xf32>
    "tpu.trace_stop"() : () -> ()
    %158 = vector.broadcast %133 : vector<2x1x16xf32> to vector<2x8x16xf32>
    %159 = arith.addf %157, %158 : vector<2x8x16xf32>
    %cst_54 = arith.constant dense<0xFF800000> : vector<2x8xf32>
    %160 = vector.multi_reduction <maximumf>, %159, %cst_54 [2] : vector<2x8x16xf32> to vector<2x8xf32>
    %161 = vector.shape_cast %160 : vector<2x8xf32> to vector<2x8x1xf32>
    %162 = vector.broadcast %161 : vector<2x8x1xf32> to vector<2x8x16xf32>
    %163 = arith.subf %159, %162 : vector<2x8x16xf32>
    %164 = math.exp %163 : vector<2x8x16xf32>
    %cst_55 = arith.constant dense<0.000000e+00> : vector<2x8xf32>
    %165 = vector.multi_reduction <add>, %164, %cst_55 [2] : vector<2x8x16xf32> to vector<2x8xf32>
    %166 = vector.shape_cast %165 : vector<2x8xf32> to vector<2x8x1xf32>
    %167 = tpu.reciprocal %166 {approx = true} : vector<2x8x1xf32> -> vector<2x8x1xf32>
    %168 = arith.mulf %166, %167 : vector<2x8x1xf32>
    %cst_56 = arith.constant 2.000000e+00 : f32
    %169 = vector.broadcast %cst_56 : f32 to vector<2x8x1xf32>
    %170 = arith.subf %169, %168 : vector<2x8x1xf32>
    %171 = arith.mulf %167, %170 : vector<2x8x1xf32>
    %172 = vector.broadcast %171 : vector<2x8x1xf32> to vector<2x8x16xf32>
    %173 = arith.mulf %164, %172 : vector<2x8x16xf32>
    %174 = vector.extract_strided_slice %132 {offsets = [0, 0, 8], sizes = [2, 16, 8], strides = [1, 1, 1]} : vector<2x16x32xf32> to vector<2x16x8xf32>
    "tpu.trace_start"() <{level = 10 : i32, message = "nqk,nkd->nqd"}> : () -> ()
    %cst_57 = arith.constant dense<0.000000e+00> : vector<2x8x8xf32>
    %175 = tpu.matmul %173, %174, %cst_57 {dimension_numbers = #tpu.dot_dimension_numbers<[2], [1], [1], [2], [0, 0, 0, 1, 1, 2], [0], [0]>} : vector<2x8x16xf32>, vector<2x16x8xf32>, vector<2x8x8xf32> -> vector<2x8x8xf32>
    "tpu.trace_stop"() : () -> ()
    %176 = vector.extract_strided_slice %125 {offsets = [0, 0, 16], sizes = [2, 8, 8], strides = [1, 1, 1]} : vector<2x8x32xf32> to vector<2x8x8xf32>
    %177 = vector.extract_strided_slice %130 {offsets = [0, 0, 16], sizes = [2, 16, 8], strides = [1, 1, 1]} : vector<2x16x32xf32> to vector<2x16x8xf32>
    "tpu.trace_start"() <{level = 10 : i32, message = "nqd,nkd->nqk"}> : () -> ()
    %cst_58 = arith.constant dense<0.000000e+00> : vector<2x8x16xf32>
    %178 = tpu.matmul %176, %177, %cst_58 {dimension_numbers = #tpu.dot_dimension_numbers<[2], [2], [1], [1], [0, 0, 0, 1, 1, 1], [0], [0]>} : vector<2x8x8xf32>, vector<2x16x8xf32>, vector<2x8x16xf32> -> vector<2x8x16xf32>
    "tpu.trace_stop"() : () -> ()
    %179 = vector.broadcast %133 : vector<2x1x16xf32> to vector<2x8x16xf32>
    %180 = arith.addf %178, %179 : vector<2x8x16xf32>
    %cst_59 = arith.constant dense<0xFF800000> : vector<2x8xf32>
    %181 = vector.multi_reduction <maximumf>, %180, %cst_59 [2] : vector<2x8x16xf32> to vector<2x8xf32>
    %182 = vector.shape_cast %181 : vector<2x8xf32> to vector<2x8x1xf32>
    %183 = vector.broadcast %182 : vector<2x8x1xf32> to vector<2x8x16xf32>
    %184 = arith.subf %180, %183 : vector<2x8x16xf32>
    %185 = math.exp %184 : vector<2x8x16xf32>
    %cst_60 = arith.constant dense<0.000000e+00> : vector<2x8xf32>
    %186 = vector.multi_reduction <add>, %185, %cst_60 [2] : vector<2x8x16xf32> to vector<2x8xf32>
    %187 = vector.shape_cast %186 : vector<2x8xf32> to vector<2x8x1xf32>
    %188 = tpu.reciprocal %187 {approx = true} : vector<2x8x1xf32> -> vector<2x8x1xf32>
    %189 = arith.mulf %187, %188 : vector<2x8x1xf32>
    %cst_61 = arith.constant 2.000000e+00 : f32
    %190 = vector.broadcast %cst_61 : f32 to vector<2x8x1xf32>
    %191 = arith.subf %190, %189 : vector<2x8x1xf32>
    %192 = arith.mulf %188, %191 : vector<2x8x1xf32>
    %193 = vector.broadcast %192 : vector<2x8x1xf32> to vector<2x8x16xf32>
    %194 = arith.mulf %185, %193 : vector<2x8x16xf32>
    %195 = vector.extract_strided_slice %132 {offsets = [0, 0, 16], sizes = [2, 16, 8], strides = [1, 1, 1]} : vector<2x16x32xf32> to vector<2x16x8xf32>
    "tpu.trace_start"() <{level = 10 : i32, message = "nqk,nkd->nqd"}> : () -> ()
    %cst_62 = arith.constant dense<0.000000e+00> : vector<2x8x8xf32>
    %196 = tpu.matmul %194, %195, %cst_62 {dimension_numbers = #tpu.dot_dimension_numbers<[2], [1], [1], [2], [0, 0, 0, 1, 1, 2], [0], [0]>} : vector<2x8x16xf32>, vector<2x16x8xf32>, vector<2x8x8xf32> -> vector<2x8x8xf32>
    "tpu.trace_stop"() : () -> ()
    %197 = vector.extract_strided_slice %125 {offsets = [0, 0, 24], sizes = [2, 8, 8], strides = [1, 1, 1]} : vector<2x8x32xf32> to vector<2x8x8xf32>
    %198 = vector.extract_strided_slice %130 {offsets = [0, 0, 24], sizes = [2, 16, 8], strides = [1, 1, 1]} : vector<2x16x32xf32> to vector<2x16x8xf32>
    "tpu.trace_start"() <{level = 10 : i32, message = "nqd,nkd->nqk"}> : () -> ()
    %cst_63 = arith.constant dense<0.000000e+00> : vector<2x8x16xf32>
    %199 = tpu.matmul %197, %198, %cst_63 {dimension_numbers = #tpu.dot_dimension_numbers<[2], [2], [1], [1], [0, 0, 0, 1, 1, 1], [0], [0]>} : vector<2x8x8xf32>, vector<2x16x8xf32>, vector<2x8x16xf32> -> vector<2x8x16xf32>
    "tpu.trace_stop"() : () -> ()
    %200 = vector.broadcast %133 : vector<2x1x16xf32> to vector<2x8x16xf32>
    %201 = arith.addf %199, %200 : vector<2x8x16xf32>
    %cst_64 = arith.constant dense<0xFF800000> : vector<2x8xf32>
    %202 = vector.multi_reduction <maximumf>, %201, %cst_64 [2] : vector<2x8x16xf32> to vector<2x8xf32>
    %203 = vector.shape_cast %202 : vector<2x8xf32> to vector<2x8x1xf32>
    %204 = vector.broadcast %203 : vector<2x8x1xf32> to vector<2x8x16xf32>
    %205 = arith.subf %201, %204 : vector<2x8x16xf32>
    %206 = math.exp %205 : vector<2x8x16xf32>
    %cst_65 = arith.constant dense<0.000000e+00> : vector<2x8xf32>
    %207 = vector.multi_reduction <add>, %206, %cst_65 [2] : vector<2x8x16xf32> to vector<2x8xf32>
    %208 = vector.shape_cast %207 : vector<2x8xf32> to vector<2x8x1xf32>
    %209 = tpu.reciprocal %208 {approx = true} : vector<2x8x1xf32> -> vector<2x8x1xf32>
    %210 = arith.mulf %208, %209 : vector<2x8x1xf32>
    %cst_66 = arith.constant 2.000000e+00 : f32
    %211 = vector.broadcast %cst_66 : f32 to vector<2x8x1xf32>
    %212 = arith.subf %211, %210 : vector<2x8x1xf32>
    %213 = arith.mulf %209, %212 : vector<2x8x1xf32>
    %214 = vector.broadcast %213 : vector<2x8x1xf32> to vector<2x8x16xf32>
    %215 = arith.mulf %206, %214 : vector<2x8x16xf32>
    %216 = vector.extract_strided_slice %132 {offsets = [0, 0, 24], sizes = [2, 16, 8], strides = [1, 1, 1]} : vector<2x16x32xf32> to vector<2x16x8xf32>
    "tpu.trace_start"() <{level = 10 : i32, message = "nqk,nkd->nqd"}> : () -> ()
    %cst_67 = arith.constant dense<0.000000e+00> : vector<2x8x8xf32>
    %217 = tpu.matmul %215, %216, %cst_67 {dimension_numbers = #tpu.dot_dimension_numbers<[2], [1], [1], [2], [0, 0, 0, 1, 1, 2], [0], [0]>} : vector<2x8x16xf32>, vector<2x16x8xf32>, vector<2x8x8xf32> -> vector<2x8x8xf32>
    "tpu.trace_stop"() : () -> ()
    %218 = tpu.concatenate %154, %175, %196, %217 in 2 : vector<2x8x8xf32>, vector<2x8x8xf32>, vector<2x8x8xf32>, vector<2x8x8xf32> -> vector<2x8x32xf32>
    %219 = vector.shape_cast %218 : vector<2x8x32xf32> to vector<16x32xf32>
    %c0_68 = arith.constant 0 : index
    %c96_69 = arith.constant 96 : index
    %220 = vector.load %arg5[%c0_68, %c96_69] : memref<32x128xf32, #tpu.memory_space<vmem>>, vector<32x32xf32>
    %cst_70 = arith.constant dense<0.000000e+00> : vector<16x32xf32>
    %221 = tpu.matmul %219, %220, %cst_70 {dimension_numbers = #tpu.dot_dimension_numbers<[1], [0], [0], [1], [0, 0, 1, 1], [], []>} : vector<16x32xf32>, vector<32x32xf32>, vector<16x32xf32> -> vector<16x32xf32>
    %c3 = arith.constant 3 : index
    %c0_71 = arith.constant 0 : index
    %222 = vector.load %arg7[%c3, %c0_71] : memref<10x128xf32, #tpu.memory_space<vmem>>, vector<1x32xf32>
    %223 = vector.broadcast %222 : vector<1x32xf32> to vector<16x32xf32>
    %224 = arith.addf %221, %223 : vector<16x32xf32>
    %225 = arith.addf %224, %122 : vector<16x32xf32>
    %c4 = arith.constant 4 : index
    %c0_72 = arith.constant 0 : index
    %226 = vector.load %arg7[%c4, %c0_72] : memref<10x128xf32, #tpu.memory_space<vmem>>, vector<1x32xf32>
    %c5 = arith.constant 5 : index
    %c0_73 = arith.constant 0 : index
    %227 = vector.load %arg7[%c5, %c0_73] : memref<10x128xf32, #tpu.memory_space<vmem>>, vector<1x32xf32>
    %cst_74 = arith.constant dense<0.000000e+00> : vector<16xf32>
    %228 = vector.multi_reduction <add>, %225, %cst_74 [1] : vector<16x32xf32> to vector<16xf32>
    %229 = vector.shape_cast %228 : vector<16xf32> to vector<16x1xf32>
    %cst_75 = arith.constant 3.200000e+01 : f32
    %230 = vector.broadcast %cst_75 : f32 to vector<16x1xf32>
    %231 = arith.divf %229, %230 : vector<16x1xf32>
    %232 = vector.broadcast %231 : vector<16x1xf32> to vector<16x32xf32>
    %233 = arith.subf %225, %232 : vector<16x32xf32>
    %234 = arith.mulf %233, %233 : vector<16x32xf32>
    %cst_76 = arith.constant dense<0.000000e+00> : vector<16xf32>
    %235 = vector.multi_reduction <add>, %234, %cst_76 [1] : vector<16x32xf32> to vector<16xf32>
    %236 = vector.shape_cast %235 : vector<16xf32> to vector<16x1xf32>
    %cst_77 = arith.constant 3.200000e+01 : f32
    %237 = vector.broadcast %cst_77 : f32 to vector<16x1xf32>
    %238 = arith.divf %236, %237 : vector<16x1xf32>
    %239 = vector.broadcast %231 : vector<16x1xf32> to vector<16x32xf32>
    %240 = arith.subf %225, %239 : vector<16x32xf32>
    %cst_78 = arith.constant 9.99999974E-6 : f32
    %241 = vector.broadcast %cst_78 : f32 to vector<16x1xf32>
    %242 = arith.addf %238, %241 : vector<16x1xf32>
    %243 = math.rsqrt %242 : vector<16x1xf32>
    %244 = vector.broadcast %243 : vector<16x1xf32> to vector<16x32xf32>
    %245 = arith.mulf %240, %244 : vector<16x32xf32>
    %246 = vector.broadcast %226 : vector<1x32xf32> to vector<16x32xf32>
    %247 = arith.mulf %245, %246 : vector<16x32xf32>
    %248 = vector.broadcast %227 : vector<1x32xf32> to vector<16x32xf32>
    %249 = arith.addf %247, %248 : vector<16x32xf32>
    %c0_79 = arith.constant 0 : index
    %c0_80 = arith.constant 0 : index
    %250 = vector.load %arg6[%c0_79, %c0_80] : memref<160x128xf32, #tpu.memory_space<vmem>>, vector<32x128xf32>
    %cst_81 = arith.constant dense<0.000000e+00> : vector<16x128xf32>
    %251 = tpu.matmul %249, %250, %cst_81 {dimension_numbers = #tpu.dot_dimension_numbers<[1], [0], [0], [1], [0, 0, 1, 1], [], []>} : vector<16x32xf32>, vector<32x128xf32>, vector<16x128xf32> -> vector<16x128xf32>
    %c9 = arith.constant 9 : index
    %c0_82 = arith.constant 0 : index
    %252 = vector.load %arg7[%c9, %c0_82] : memref<10x128xf32, #tpu.memory_space<vmem>>, vector<1x128xf32>
    %253 = vector.broadcast %252 : vector<1x128xf32> to vector<16x128xf32>
    %254 = arith.addf %251, %253 : vector<16x128xf32>
    %cst_83 = arith.constant 0.000000e+00 : f32
    %255 = vector.broadcast %cst_83 : f32 to vector<16x128xf32>
    %256 = arith.maximumf %254, %255 : vector<16x128xf32>
    %c32_84 = arith.constant 32 : index
    %c0_85 = arith.constant 0 : index
    %257 = vector.load %arg6[%c32_84, %c0_85] : memref<160x128xf32, #tpu.memory_space<vmem>>, vector<128x128xf32>
    %cst_86 = arith.constant dense<0.000000e+00> : vector<16x128xf32>
    %258 = tpu.matmul %256, %257, %cst_86 {dimension_numbers = #tpu.dot_dimension_numbers<[1], [0], [0], [1], [0, 0, 1, 1], [], []>} : vector<16x128xf32>, vector<128x128xf32>, vector<16x128xf32> -> vector<16x128xf32>
    %259 = vector.extract_strided_slice %258 {offsets = [0, 0], sizes = [16, 32], strides = [1, 1]} : vector<16x128xf32> to vector<16x32xf32>
    %c6 = arith.constant 6 : index
    %c0_87 = arith.constant 0 : index
    %260 = vector.load %arg7[%c6, %c0_87] : memref<10x128xf32, #tpu.memory_space<vmem>>, vector<1x32xf32>
    %261 = vector.broadcast %260 : vector<1x32xf32> to vector<16x32xf32>
    %262 = arith.addf %259, %261 : vector<16x32xf32>
    %263 = arith.addf %262, %249 : vector<16x32xf32>
    %c7 = arith.constant 7 : index
    %c0_88 = arith.constant 0 : index
    %264 = vector.load %arg7[%c7, %c0_88] : memref<10x128xf32, #tpu.memory_space<vmem>>, vector<1x32xf32>
    %c8 = arith.constant 8 : index
    %c0_89 = arith.constant 0 : index
    %265 = vector.load %arg7[%c8, %c0_89] : memref<10x128xf32, #tpu.memory_space<vmem>>, vector<1x32xf32>
    %cst_90 = arith.constant dense<0.000000e+00> : vector<16xf32>
    %266 = vector.multi_reduction <add>, %263, %cst_90 [1] : vector<16x32xf32> to vector<16xf32>
    %267 = vector.shape_cast %266 : vector<16xf32> to vector<16x1xf32>
    %cst_91 = arith.constant 3.200000e+01 : f32
    %268 = vector.broadcast %cst_91 : f32 to vector<16x1xf32>
    %269 = arith.divf %267, %268 : vector<16x1xf32>
    %270 = vector.broadcast %269 : vector<16x1xf32> to vector<16x32xf32>
    %271 = arith.subf %263, %270 : vector<16x32xf32>
    %272 = arith.mulf %271, %271 : vector<16x32xf32>
    %cst_92 = arith.constant dense<0.000000e+00> : vector<16xf32>
    %273 = vector.multi_reduction <add>, %272, %cst_92 [1] : vector<16x32xf32> to vector<16xf32>
    %274 = vector.shape_cast %273 : vector<16xf32> to vector<16x1xf32>
    %cst_93 = arith.constant 3.200000e+01 : f32
    %275 = vector.broadcast %cst_93 : f32 to vector<16x1xf32>
    %276 = arith.divf %274, %275 : vector<16x1xf32>
    %277 = vector.broadcast %269 : vector<16x1xf32> to vector<16x32xf32>
    %278 = arith.subf %263, %277 : vector<16x32xf32>
    %cst_94 = arith.constant 9.99999974E-6 : f32
    %279 = vector.broadcast %cst_94 : f32 to vector<16x1xf32>
    %280 = arith.addf %276, %279 : vector<16x1xf32>
    %281 = math.rsqrt %280 : vector<16x1xf32>
    %282 = vector.broadcast %281 : vector<16x1xf32> to vector<16x32xf32>
    %283 = arith.mulf %278, %282 : vector<16x32xf32>
    %284 = vector.broadcast %264 : vector<1x32xf32> to vector<16x32xf32>
    %285 = arith.mulf %283, %284 : vector<16x32xf32>
    %286 = vector.broadcast %265 : vector<1x32xf32> to vector<16x32xf32>
    %287 = arith.addf %285, %286 : vector<16x32xf32>
    %c0_95 = arith.constant 0 : index
    %c0_96 = arith.constant 0 : index
    %288 = vector.load %arg8[%c0_95, %c0_96] : memref<16x32xf32, #tpu.memory_space<vmem>>, vector<16x32xf32>
    tpu.vector_store %arg8[%c0_95, %c0_96], %287 {strides = array<i32>} : memref<16x32xf32, #tpu.memory_space<vmem>>, vector<16x32xf32>,
    return
  }
}

</mosaic_0001>

<llo_original>
// kernel: tpu_custom_call.1
$region0: #{tpu_custom_call.1}
  #allocation0 [shape = 'u32[]', space=smem, size = 0x4, offset = 0x4, fixed_abs, tag = 'smem constant byte address 0x4 - core index']
  #allocation1 [shape = 'u32[144,128]{1,0:T(1,128)}', space=vmem, size = 0x12000, scoped, tag = 'internal scratch']
  %s0 = inlined_call_operand.vmem [shape: f32[2,8,32], index: 0, kind: input, shape index: {}]
  %s1 = inlined_call_operand.vmem [shape: f32[64,32], index: 1, kind: input, shape index: {}]
  %s2 = inlined_call_operand.vmem [shape: f32[2,8,8], index: 2, kind: input, shape index: {}]
  %s3 = inlined_call_operand.vmem [shape: f32[2,1,16], index: 3, kind: input, shape index: {}]
  %s4 = inlined_call_operand.vmem [shape: f32[32,128], index: 4, kind: input, shape index: {}]
  %s5 = inlined_call_operand.vmem [shape: f32[32,128], index: 5, kind: input, shape index: {}]
  %s6 = inlined_call_operand.hbm [shape: f32[160,128], index: 6, kind: input, shape index: {}]
  %s7 = inlined_call_operand.vmem [shape: f32[10,128], index: 7, kind: input, shape index: {}]
  %s8 = inlined_call_operand.hbm [shape: f32[16,32], index: 8, kind: output, shape index: {}]
  %s9 = sld [smem:[#allocation0]]
  $region46: #{tpu_custom_call.1} parent=0
    _
  %s11 = ssub.s32 1, %s9
  %s12 = scalar_select 0, %s11, %s9
  $region1: #{tpu_custom_call.1} parent=0
    #allocation2 [shape = 'u8[81920]{0}', space=vmem, size = 0x14000, scoped, tag = 'input window, operand 6, single buffered']
    #allocation3 [shape = 's32[1]{0}', space=sflag, size = 0x4, scoped, tag = 'scoped memory for tpu_custom_call.1']
    #allocation4 [shape = 's32[1]{0}', space=sflag, size = 0x4, scoped, tag = 'scoped memory for tpu_custom_call.1']
    #allocation5 [shape = 'u8[8192]{0}', space=vmem, size = 0x2000, scoped, tag = 'output window, operand 0, single buffered']
    %13 = vsyncpa [#allocation3], 0
    %14 = vsyncpa [#allocation4], 0
    // Predicated region
    $region2: #{tpu_custom_call.1} parent=1 // pred_check
      _
    $region3: #{tpu_custom_call.1} parent=1 // pred_check_branch
      %16 = sbr.rel (0) target = $region5
    $region4: #{tpu_custom_call.1} parent=1 // pred_region
      _
    $region5: #{tpu_custom_call.1} parent=1 // pred_fallthru
      _
    // Predicated region
    $region6: #{tpu_custom_call.1} parent=1 // pred_check
      _
    $region7: #{tpu_custom_call.1} parent=1 // pred_check_branch
      %18 = sbr.rel (0) target = $region9
    $region8: #{tpu_custom_call.1} parent=1 // pred_region
      _
    $region9: #{tpu_custom_call.1} parent=1 // pred_fallthru
      _
    // Predicated region
    $region10: #{tpu_custom_call.1} parent=1 // pred_check
      _
    $region11: #{tpu_custom_call.1} parent=1 // pred_check_branch
      %20 = sbr.rel (0) target = $region13
    $region12: #{tpu_custom_call.1} parent=1 // pred_region
      _
    $region13: #{tpu_custom_call.1} parent=1 // pred_fallthru
      _
    // Predicated region
    $region14: #{tpu_custom_call.1} parent=1 // pred_check
      _
    $region15: #{tpu_custom_call.1} parent=1 // pred_check_branch
      %22 = sbr.rel (0) target = $region17
    $region16: #{tpu_custom_call.1} parent=1 // pred_region
      _
    $region17: #{tpu_custom_call.1} parent=1 // pred_fallthru
      _
    // Predicated region
    $region18: #{tpu_custom_call.1} parent=1 // pred_check
      _
    $region19: #{tpu_custom_call.1} parent=1 // pred_check_branch
      %24 = sbr.rel (0) target = $region21
    $region20: #{tpu_custom_call.1} parent=1 // pred_region
      _
    $region21: #{tpu_custom_call.1} parent=1 // pred_fallthru
      _
    // Predicated region
    $region22: #{tpu_custom_call.1} parent=1 // pred_check
      _
    $region23: #{tpu_custom_call.1} parent=1 // pred_check_branch
      %26 = sbr.rel (0) target = $region25
    $region24: #{tpu_custom_call.1} parent=1 // pred_region
      _
    $region25: #{tpu_custom_call.1} parent=1 // pred_fallthru
      _
    // Predicated region
    $region26: #{tpu_custom_call.1} parent=1 // pred_check
      _
    $region27: #{tpu_custom_call.1} parent=1 // pred_check_branch
      %28 = sbr.rel (0) target = $region29
    $region28: #{tpu_custom_call.1} parent=1 // pred_region
      %s30 = ssub.s32 2560, 2560
      %31 = vsyncadd [#allocation3], %s30
      %s32 = sshll.u32 [#allocation2], 4
      %s33 = int_to_ptr.vmem [resolvable:$true] %s32
      %38 = dma.hbm_to_vmem [thread:$0]  %s6, 2560, %s33, [#allocation3], 128, 128, 8
    $region29: #{tpu_custom_call.1} parent=1 // pred_fallthru
      _
    // Predicated region
    $region30: #{tpu_custom_call.1} parent=1 // pred_check
      _
    $region31: #{tpu_custom_call.1} parent=1 // pred_check_branch
      %40 = sbr.rel (0) target = $region33
    $region32: #{tpu_custom_call.1} parent=1 // pred_region
      _
    $region33: #{tpu_custom_call.1} parent=1 // pred_fallthru
      _
    // Predicated region
    $region34: #{tpu_custom_call.1} parent=1 // pred_check
      _
    $region35: #{tpu_custom_call.1} parent=1 // pred_check_branch
      %42 = sbr.rel (0) target = $region37
    $region36: #{tpu_custom_call.1} parent=1 // pred_region
      %43 = dma.done [#allocation3], 2560
    $region37: #{tpu_custom_call.1} parent=1 // pred_fallthru
      _
    %v44 = vld [vmem:[%s0] sm:$0xff]
    %v45 = vld [vmem:[%s0 + $0x8] sm:$0xff]
    %v46 = vld [vmem:[%s4] sm:$0xff]
    %v47 = vld [vmem:[%s4 + $0x8] sm:$0xff]
    %v48 = vld [vmem:[%s4 + $0x10] sm:$0xff]
    %v49 = vld [vmem:[%s4 + $0x18] sm:$0xff]
    %vm50 = vcmask 261120
    %v52 = vsel %vm50, %v44, 0
    %v55 = vsel %vm50, %v45, 0
    %57 = vmatprep.subr.mxu0 0.0
    %58 = vmatpush1.msra.mxu0 %v46
    %59 = vmatprep.subr.mxu0 0.0
    %60 = vmatpush1.msra.mxu0 %v47
    %61 = vmatprep.subr.mxu0 0.0
    %62 = vmatpush1.msra.mxu0 %v48
    %63 = vmatprep.subr.mxu0 0.0
    %64 = vmatpush1.msra.mxu0 %v49
    %65 = vmatprep.subr.mxu0 0.0
    %66 = vmatpush1.msra.mxu0 0.0
    %67 = vmatprep.subr.mxu0 0.0
    %68 = vmatpush1.msra.mxu0 0.0
    %69 = vmatprep.subr.mxu0 0.0
    %70 = vmatpush1.msra.mxu0 0.0
    %71 = vmatprep.subr.mxu0 0.0
    %72 = vmatpush1.msra.mxu0 0.0
    %73 = vmatprep.subr.mxu0 0.0
    %74 = vmatpush1.msra.mxu0 0.0
    %75 = vmatprep.subr.mxu0 0.0
    %76 = vmatpush1.msra.mxu0 0.0
    %77 = vmatprep.subr.mxu0 0.0
    %78 = vmatpush1.msra.mxu0 0.0
    %79 = vmatprep.subr.mxu0 0.0
    %80 = vmatpush1.msra.mxu0 0.0
    %81 = vmatprep.subr.mxu0 0.0
    %82 = vmatpush1.msra.mxu0 0.0
    %83 = vmatprep.subr.mxu0 0.0
    %84 = vmatpush1.msra.mxu0 0.0
    %85 = vmatprep.subr.mxu0 0.0
    %86 = vmatpush1.msra.mxu0 0.0
    %87 = vmatprep.subr.mxu0 0.0
    %88 = vmatpush1.msra.mxu0 0.0
    %89 = vmatprep.subr.mxu0 0.0
    %90 = vmatpush1.msra.mxu0 0.0
    %91 = vmatprep.subr.mxu0 0.0
    %92 = vmatpush1.msra.mxu0 0.0
    %93 = vmatprep.subr.mxu0 0.0
    %94 = vmatpush1.msra.mxu0 0.0
    %95 = vmatprep.subr.mxu0 0.0
    %96 = vmatpush1.msra.mxu0 0.0
    %97 = vmatprep.subr.mxu0 0.0
    %98 = vmatpush1.msra.mxu0 0.0
    %99 = vmatprep.subr.mxu0 0.0
    %100 = vmatpush1.msra.mxu0 0.0
    %101 = vmatprep.subr.mxu0 0.0
    %102 = vmatpush1.msra.mxu0 0.0
    %103 = vmatprep.subr.mxu0 0.0
    %104 = vmatpush1.msra.mxu0 0.0
    %105 = vmatprep.subr.mxu0 0.0
    %106 = vmatpush1.msra.mxu0 0.0
    %107 = vmatprep.subr.mxu0 0.0
    %108 = vmatpush1.msra.mxu0 0.0
    %109 = vmatprep.subr.mxu0 0.0
    %110 = vmatpush1.msra.mxu0 0.0
    %111 = vmatprep.subr.mxu0 0.0
    %112 = vmatpush1.msra.mxu0 0.0
    %113 = vmatprep.subr.mxu0 0.0
    %114 = vmatpush1.msra.mxu0 0.0
    %115 = vmatprep.subr.mxu0 0.0
    %116 = vmatpush1.msra.mxu0 0.0
    %117 = vmatprep.subr.mxu0 0.0
    %118 = vmatpush1.msra.mxu0 0.0
    %119 = vmatprep.subr.mxu0 0.0
    %120 = vmatpush1.msra.mxu0 0.0
    %121 = vmatprep.mubr.f32.mxu0 0.0
    %122 = vmatmul.mubr.f32.gmra.mrb[0].mxu0 %v52
    %v123 = vpop.f32.mrb[0].mxu0
    %v124 = vadd.f32 0.0, %v123
    %v125 = vpop.f32.mrb[0].mxu0
    %126 = vmatprep.mubr.f32.mxu0 0.0
    %127 = vmatmul.mubr.f32.gmra.mrb[0].mxu0 %v55
    %v128 = vpop.f32.mrb[0].mxu0
    %v129 = vadd.f32 0.0, %v128
    %v130 = vpop.f32.mrb[0].mxu0
    %131 = vdwg.mxu0
    %v132 = vld [vmem:[%s2] sm:$0xff]
    %v133 = vld [vmem:[%s2 + $0x8] sm:$0xff]
    %135 = vrot.lane.b32.xlu0 %v124, 96
    %v136 = vpop.permute.xlu0 %135
    %vm137 = vcmask 64512
    %v138 = vsel %vm137, %v124, 0
    %v140 = vsel %vm137, %v136, 0
    %142 = vmatprep.subr.mxu0 0.0
    %143 = vmatpush1.xpose.msra.mxu0 %v140
    %144 = vmatprep.subr.mxu0 0.0
    %145 = vmatpush1.xpose.msra.mxu0 0.0
    %146 = vmatprep.subr.mxu0 0.0
    %147 = vmatpush1.xpose.msra.mxu0 0.0
    %148 = vmatprep.subr.mxu0 0.0
    %149 = vmatpush1.xpose.msra.mxu0 0.0
    %150 = vmatprep.subr.mxu0 0.0
    %151 = vmatpush1.xpose.msra.mxu0 0.0
    %152 = vmatprep.subr.mxu0 0.0
    %153 = vmatpush1.xpose.msra.mxu0 0.0
    %154 = vmatprep.subr.mxu0 0.0
    %155 = vmatpush1.xpose.msra.mxu0 0.0
    %156 = vmatprep.subr.mxu0 0.0
    %157 = vmatpush1.xpose.msra.mxu0 0.0
    %158 = vmatprep.subr.mxu0 0.0
    %159 = vmatpush1.xpose.msra.mxu0 0.0
    %160 = vmatprep.subr.mxu0 0.0
    %161 = vmatpush1.xpose.msra.mxu0 0.0
    %162 = vmatprep.subr.mxu0 0.0
    %163 = vmatpush1.xpose.msra.mxu0 0.0
    %164 = vmatprep.subr.mxu0 0.0
    %165 = vmatpush1.xpose.msra.mxu0 0.0
    %166 = vmatprep.subr.mxu0 0.0
    %167 = vmatpush1.xpose.msra.mxu0 0.0
    %168 = vmatprep.subr.mxu0 0.0
    %169 = vmatpush1.xpose.msra.mxu0 0.0
    %170 = vmatprep.subr.mxu0 0.0
    %171 = vmatpush1.xpose.msra.mxu0 0.0
    %172 = vmatprep.subr.mxu0 0.0
    %173 = vmatpush1.xpose.msra.mxu0 0.0
    %174 = vmatprep.subr.mxu0 0.0
    %175 = vmatpush1.xpose.msra.mxu0 0.0
    %176 = vmatprep.subr.mxu0 0.0
    %177 = vmatpush1.xpose.msra.mxu0 0.0
    %178 = vmatprep.subr.mxu0 0.0
    %179 = vmatpush1.xpose.msra.mxu0 0.0
    %180 = vmatprep.subr.mxu0 0.0
    %181 = vmatpush1.xpose.msra.mxu0 0.0
    %182 = vmatprep.subr.mxu0 0.0
    %183 = vmatpush1.xpose.msra.mxu0 0.0
    %184 = vmatprep.subr.mxu0 0.0
    %185 = vmatpush1.xpose.msra.mxu0 0.0
    %186 = vmatprep.subr.mxu0 0.0
    %187 = vmatpush1.xpose.msra.mxu0 0.0
    %188 = vmatprep.subr.mxu0 0.0
    %189 = vmatpush1.xpose.msra.mxu0 0.0
    %190 = vmatprep.subr.mxu0 0.0
    %191 = vmatpush1.xpose.msra.mxu0 0.0
    %192 = vmatprep.subr.mxu0 0.0
    %193 = vmatpush1.xpose.msra.mxu0 0.0
    %194 = vmatprep.subr.mxu0 0.0
    %195 = vmatpush1.xpose.msra.mxu0 0.0
    %196 = vmatprep.subr.mxu0 0.0
    %197 = vmatpush1.xpose.msra.mxu0 0.0
    %198 = vmatprep.subr.mxu0 0.0
    %199 = vmatpush1.xpose.msra.mxu0 0.0
    %200 = vmatprep.subr.mxu0 0.0
    %201 = vmatpush1.xpose.msra.mxu0 0.0
    %202 = vmatprep.subr.mxu0 0.0
    %203 = vmatpush1.xpose.msra.mxu0 0.0
    %204 = vmatprep.subr.mxu0 0.0
    %205 = vmatpush1.xpose.msra.mxu0 0.0
    %206 = vmatprep.mubr.f32.mxu0 0.0
    %207 = vmatmul.mubr.f32.gmra.mrb[0].mxu0 %v138
    %v208 = vpop.f32.mrb[0].mxu0
    %v209 = vadd.f32 %v132, %v208
    %v210 = vpop.f32.mrb[0].mxu0
    %211 = vdwg.mxu0
    %213 = vrot.lane.b32.xlu0 %v129, 96
    %v214 = vpop.permute.xlu0 %213
    %v215 = vsel %vm137, %v129, 0
    %v217 = vsel %vm137, %v214, 0
    %219 = vmatprep.subr.mxu0 0.0
    %220 = vmatpush1.xpose.msra.mxu0 %v217
    %221 = vmatprep.subr.mxu0 0.0
    %222 = vmatpush1.xpose.msra.mxu0 0.0
    %223 = vmatprep.subr.mxu0 0.0
    %224 = vmatpush1.xpose.msra.mxu0 0.0
    %225 = vmatprep.subr.mxu0 0.0
    %226 = vmatpush1.xpose.msra.mxu0 0.0
    %227 = vmatprep.subr.mxu0 0.0
    %228 = vmatpush1.xpose.msra.mxu0 0.0
    %229 = vmatprep.subr.mxu0 0.0
    %230 = vmatpush1.xpose.msra.mxu0 0.0
    %231 = vmatprep.subr.mxu0 0.0
    %232 = vmatpush1.xpose.msra.mxu0 0.0
    %233 = vmatprep.subr.mxu0 0.0
    %234 = vmatpush1.xpose.msra.mxu0 0.0
    %235 = vmatprep.subr.mxu0 0.0
    %236 = vmatpush1.xpose.msra.mxu0 0.0
    %237 = vmatprep.subr.mxu0 0.0
    %238 = vmatpush1.xpose.msra.mxu0 0.0
    %239 = vmatprep.subr.mxu0 0.0
    %240 = vmatpush1.xpose.msra.mxu0 0.0
    %241 = vmatprep.subr.mxu0 0.0
    %242 = vmatpush1.xpose.msra.mxu0 0.0
    %243 = vmatprep.subr.mxu0 0.0
    %244 = vmatpush1.xpose.msra.mxu0 0.0
    %245 = vmatprep.subr.mxu0 0.0
    %246 = vmatpush1.xpose.msra.mxu0 0.0
    %247 = vmatprep.subr.mxu0 0.0
    %248 = vmatpush1.xpose.msra.mxu0 0.0
    %249 = vmatprep.subr.mxu0 0.0
    %250 = vmatpush1.xpose.msra.mxu0 0.0
    %251 = vmatprep.subr.mxu0 0.0
    %252 = vmatpush1.xpose.msra.mxu0 0.0
    %253 = vmatprep.subr.mxu0 0.0
    %254 = vmatpush1.xpose.msra.mxu0 0.0
    %255 = vmatprep.subr.mxu0 0.0
    %256 = vmatpush1.xpose.msra.mxu0 0.0
    %257 = vmatprep.subr.mxu0 0.0
    %258 = vmatpush1.xpose.msra.mxu0 0.0
    %259 = vmatprep.subr.mxu0 0.0
    %260 = vmatpush1.xpose.msra.mxu0 0.0
    %261 = vmatprep.subr.mxu0 0.0
    %262 = vmatpush1.xpose.msra.mxu0 0.0
    %263 = vmatprep.subr.mxu0 0.0
    %264 = vmatpush1.xpose.msra.mxu0 0.0
    %265 = vmatprep.subr.mxu0 0.0
    %266 = vmatpush1.xpose.msra.mxu0 0.0
    %267 = vmatprep.subr.mxu0 0.0
    %268 = vmatpush1.xpose.msra.mxu0 0.0
    %269 = vmatprep.subr.mxu0 0.0
    %270 = vmatpush1.xpose.msra.mxu0 0.0
    %271 = vmatprep.subr.mxu0 0.0
    %272 = vmatpush1.xpose.msra.mxu0 0.0
    %273 = vmatprep.subr.mxu0 0.0
    %274 = vmatpush1.xpose.msra.mxu0 0.0
    %275 = vmatprep.subr.mxu0 0.0
    %276 = vmatpush1.xpose.msra.mxu0 0.0
    %277 = vmatprep.subr.mxu0 0.0
    %278 = vmatpush1.xpose.msra.mxu0 0.0
    %279 = vmatprep.subr.mxu0 0.0
    %280 = vmatpush1.xpose.msra.mxu0 0.0
    %281 = vmatprep.subr.mxu0 0.0
    %282 = vmatpush1.xpose.msra.mxu0 0.0
    %283 = vmatprep.mubr.f32.mxu0 0.0
    %284 = vmatmul.mubr.f32.gmra.mrb[0].mxu0 %v215
    %v285 = vpop.f32.mrb[0].mxu0
    %v286 = vadd.f32 %v133, %v285
    %v287 = vpop.f32.mrb[0].mxu0
    %288 = vdwg.mxu0
    %v289 = vsel %vm137, %v209, -inf
    %290 = vmax.xlane.f32.xlu0 %v289
    %v291 = vpop.xlane.xlu0 %290
    %v292 = vsel %vm137, %v286, -inf
    %293 = vmax.xlane.f32.xlu0 %v292
    %v294 = vpop.xlane.xlu0 %293
    %v295 = vsub.f32 %v209, %v291
    %v296 = vsub.f32 %v286, %v294
    %v297 = vmul.f32 %v295, 1.442695
    %v298 = vpow.pop %v297
    %v299 = vmul.f32 %v296, 1.442695
    %v300 = vpow.pop %v299
    %v301 = vsel %vm137, %v298, 0.0
    %302 = vadd.xlane.f32.xlu0 %v301
    %v303 = vpop.xlane.xlu0 %302
    %v304 = vsel %vm137, %v300, 0.0
    %305 = vadd.xlane.f32.xlu0 %v304
    %v306 = vpop.xlane.xlu0 %305
    %v307 = vrcp.pop %v303
    %v308 = vrcp.pop %v306
    %v309 = vmul.f32 %v303, %v307
    %v310 = vmul.f32 %v306, %v308
    %v311 = vsub.f32 2.0, %v309
    %v312 = vsub.f32 2.0, %v310
    %v313 = vmul.f32 %v307, %v311
    %v314 = vmul.f32 %v308, %v312
    %v315 = vmul.f32 %v298, %v313
    %v316 = vmul.f32 %v300, %v314
    %317 = vrot.lane.b32.xlu0 %v124, 64
    %v318 = vpop.permute.xlu0 %317
    %v321 = vsel %vm137, %v315, 0
    %323 = vmatprep.subr.mxu0 0.0
    %324 = vmatpush1.msra.mxu0 %v318
    %325 = vmatprep.subr.mxu0 0.0
    %326 = vmatpush1.msra.mxu0 0.0
    %327 = vmatprep.subr.mxu0 0.0
    %328 = vmatpush1.msra.mxu0 0.0
    %329 = vmatprep.subr.mxu0 0.0
    %330 = vmatpush1.msra.mxu0 0.0
    %331 = vmatprep.subr.mxu0 0.0
    %332 = vmatpush1.msra.mxu0 0.0
    %333 = vmatprep.subr.mxu0 0.0
    %334 = vmatpush1.msra.mxu0 0.0
    %335 = vmatprep.subr.mxu0 0.0
    %336 = vmatpush1.msra.mxu0 0.0
    %337 = vmatprep.subr.mxu0 0.0
    %338 = vmatpush1.msra.mxu0 0.0
    %339 = vmatprep.subr.mxu0 0.0
    %340 = vmatpush1.msra.mxu0 0.0
    %341 = vmatprep.subr.mxu0 0.0
    %342 = vmatpush1.msra.mxu0 0.0
    %343 = vmatprep.subr.mxu0 0.0
    %344 = vmatpush1.msra.mxu0 0.0
    %345 = vmatprep.subr.mxu0 0.0
    %346 = vmatpush1.msra.mxu0 0.0
    %347 = vmatprep.subr.mxu0 0.0
    %348 = vmatpush1.msra.mxu0 0.0
    %349 = vmatprep.subr.mxu0 0.0
    %350 = vmatpush1.msra.mxu0 0.0
    %351 = vmatprep.subr.mxu0 0.0
    %352 = vmatpush1.msra.mxu0 0.0
    %353 = vmatprep.subr.mxu0 0.0
    %354 = vmatpush1.msra.mxu0 0.0
    %355 = vmatprep.subr.mxu0 0.0
    %356 = vmatpush1.msra.mxu0 0.0
    %357 = vmatprep.subr.mxu0 0.0
    %358 = vmatpush1.msra.mxu0 0.0
    %359 = vmatprep.subr.mxu0 0.0
    %360 = vmatpush1.msra.mxu0 0.0
    %361 = vmatprep.subr.mxu0 0.0
    %362 = vmatpush1.msra.mxu0 0.0
    %363 = vmatprep.subr.mxu0 0.0
    %364 = vmatpush1.msra.mxu0 0.0
    %365 = vmatprep.subr.mxu0 0.0
    %366 = vmatpush1.msra.mxu0 0.0
    %367 = vmatprep.subr.mxu0 0.0
    %368 = vmatpush1.msra.mxu0 0.0
    %369 = vmatprep.subr.mxu0 0.0
    %370 = vmatpush1.msra.mxu0 0.0
    %371 = vmatprep.subr.mxu0 0.0
    %372 = vmatpush1.msra.mxu0 0.0
    %373 = vmatprep.subr.mxu0 0.0
    %374 = vmatpush1.msra.mxu0 0.0
    %375 = vmatprep.subr.mxu0 0.0
    %376 = vmatpush1.msra.mxu0 0.0
    %377 = vmatprep.subr.mxu0 0.0
    %378 = vmatpush1.msra.mxu0 0.0
    %379 = vmatprep.subr.mxu0 0.0
    %380 = vmatpush1.msra.mxu0 0.0
    %381 = vmatprep.subr.mxu0 0.0
    %382 = vmatpush1.msra.mxu0 0.0
    %383 = vmatprep.subr.mxu0 0.0
    %384 = vmatpush1.msra.mxu0 0.0
    %385 = vmatprep.subr.mxu0 0.0
    %386 = vmatpush1.msra.mxu0 0.0
    %387 = vmatprep.mubr.f32.mxu0 0.0
    %388 = vmatmul.mubr.f32.gmra.mrb[0].mxu0 %v321
    %v389 = vpop.f32.mrb[0].mxu0
    %v390 = vadd.f32 0.0, %v389
    %v391 = vpop.f32.mrb[0].mxu0
    %392 = vdwg.mxu0
    %393 = vrot.lane.b32.xlu0 %v129, 64
    %v394 = vpop.permute.xlu0 %393
    %v397 = vsel %vm137, %v316, 0
    %399 = vmatprep.subr.mxu0 0.0
    %400 = vmatpush1.msra.mxu0 %v394
    %401 = vmatprep.subr.mxu0 0.0
    %402 = vmatpush1.msra.mxu0 0.0
    %403 = vmatprep.subr.mxu0 0.0
    %404 = vmatpush1.msra.mxu0 0.0
    %405 = vmatprep.subr.mxu0 0.0
    %406 = vmatpush1.msra.mxu0 0.0
    %407 = vmatprep.subr.mxu0 0.0
    %408 = vmatpush1.msra.mxu0 0.0
    %409 = vmatprep.subr.mxu0 0.0
    %410 = vmatpush1.msra.mxu0 0.0
    %411 = vmatprep.subr.mxu0 0.0
    %412 = vmatpush1.msra.mxu0 0.0
    %413 = vmatprep.subr.mxu0 0.0
    %414 = vmatpush1.msra.mxu0 0.0
    %415 = vmatprep.subr.mxu0 0.0
    %416 = vmatpush1.msra.mxu0 0.0
    %417 = vmatprep.subr.mxu0 0.0
    %418 = vmatpush1.msra.mxu0 0.0
    %419 = vmatprep.subr.mxu0 0.0
    %420 = vmatpush1.msra.mxu0 0.0
    %421 = vmatprep.subr.mxu0 0.0
    %422 = vmatpush1.msra.mxu0 0.0
    %423 = vmatprep.subr.mxu0 0.0
    %424 = vmatpush1.msra.mxu0 0.0
    %425 = vmatprep.subr.mxu0 0.0
    %426 = vmatpush1.msra.mxu0 0.0
    %427 = vmatprep.subr.mxu0 0.0
    %428 = vmatpush1.msra.mxu0 0.0
    %429 = vmatprep.subr.mxu0 0.0
    %430 = vmatpush1.msra.mxu0 0.0
    %431 = vmatprep.subr.mxu0 0.0
    %432 = vmatpush1.msra.mxu0 0.0
    %433 = vmatprep.subr.mxu0 0.0
    %434 = vmatpush1.msra.mxu0 0.0
    %435 = vmatprep.subr.mxu0 0.0
    %436 = vmatpush1.msra.mxu0 0.0
    %437 = vmatprep.subr.mxu0 0.0
    %438 = vmatpush1.msra.mxu0 0.0
    %439 = vmatprep.subr.mxu0 0.0
    %440 = vmatpush1.msra.mxu0 0.0
    %441 = vmatprep.subr.mxu0 0.0
    %442 = vmatpush1.msra.mxu0 0.0
    %443 = vmatprep.subr.mxu0 0.0
    %444 = vmatpush1.msra.mxu0 0.0
    %445 = vmatprep.subr.mxu0 0.0
    %446 = vmatpush1.msra.mxu0 0.0
    %447 = vmatprep.subr.mxu0 0.0
    %448 = vmatpush1.msra.mxu0 0.0
    %449 = vmatprep.subr.mxu0 0.0
    %450 = vmatpush1.msra.mxu0 0.0
    %451 = vmatprep.subr.mxu0 0.0
    %452 = vmatpush1.msra.mxu0 0.0
    %453 = vmatprep.subr.mxu0 0.0
    %454 = vmatpush1.msra.mxu0 0.0
    %455 = vmatprep.subr.mxu0 0.0
    %456 = vmatpush1.msra.mxu0 0.0
    %457 = vmatprep.subr.mxu0 0.0
    %458 = vmatpush1.msra.mxu0 0.0
    %459 = vmatprep.subr.mxu0 0.0
    %460 = vmatpush1.msra.mxu0 0.0
    %461 = vmatprep.subr.mxu0 0.0
    %462 = vmatpush1.msra.mxu0 0.0
    %463 = vmatprep.mubr.f32.mxu0 0.0
    %464 = vmatmul.mubr.f32.gmra.mrb[0].mxu0 %v397
    %v465 = vpop.f32.mrb[0].mxu0
    %v466 = vadd.f32 0.0, %v465
    %v467 = vpop.f32.mrb[0].mxu0
    %468 = vdwg.mxu0
    %469 = vrot.lane.b32.xlu0 %v124, 120
    %v470 = vpop.permute.xlu0 %469
    %471 = vrot.lane.b32.xlu0 %v124, 88
    %v472 = vpop.permute.xlu0 %471
    %v473 = vsel %vm137, %v470, 0
    %v475 = vsel %vm137, %v472, 0
    %477 = vmatprep.subr.mxu0 0.0
    %478 = vmatpush1.xpose.msra.mxu0 %v475
    %479 = vmatprep.subr.mxu0 0.0
    %480 = vmatpush1.xpose.msra.mxu0 0.0
    %481 = vmatprep.subr.mxu0 0.0
    %482 = vmatpush1.xpose.msra.mxu0 0.0
    %483 = vmatprep.subr.mxu0 0.0
    %484 = vmatpush1.xpose.msra.mxu0 0.0
    %485 = vmatprep.subr.mxu0 0.0
    %486 = vmatpush1.xpose.msra.mxu0 0.0
    %487 = vmatprep.subr.mxu0 0.0
    %488 = vmatpush1.xpose.msra.mxu0 0.0
    %489 = vmatprep.subr.mxu0 0.0
    %490 = vmatpush1.xpose.msra.mxu0 0.0
    %491 = vmatprep.subr.mxu0 0.0
    %492 = vmatpush1.xpose.msra.mxu0 0.0
    %493 = vmatprep.subr.mxu0 0.0
    %494 = vmatpush1.xpose.msra.mxu0 0.0
    %495 = vmatprep.subr.mxu0 0.0
    %496 = vmatpush1.xpose.msra.mxu0 0.0
    %497 = vmatprep.subr.mxu0 0.0
    %498 = vmatpush1.xpose.msra.mxu0 0.0
    %499 = vmatprep.subr.mxu0 0.0
    %500 = vmatpush1.xpose.msra.mxu0 0.0
    %501 = vmatprep.subr.mxu0 0.0
    %502 = vmatpush1.xpose.msra.mxu0 0.0
    %503 = vmatprep.subr.mxu0 0.0
    %504 = vmatpush1.xpose.msra.mxu0 0.0
    %505 = vmatprep.subr.mxu0 0.0
    %506 = vmatpush1.xpose.msra.mxu0 0.0
    %507 = vmatprep.subr.mxu0 0.0
    %508 = vmatpush1.xpose.msra.mxu0 0.0
    %509 = vmatprep.subr.mxu0 0.0
    %510 = vmatpush1.xpose.msra.mxu0 0.0
    %511 = vmatprep.subr.mxu0 0.0
    %512 = vmatpush1.xpose.msra.mxu0 0.0
    %513 = vmatprep.subr.mxu0 0.0
    %514 = vmatpush1.xpose.msra.mxu0 0.0
    %515 = vmatprep.subr.mxu0 0.0
    %516 = vmatpush1.xpose.msra.mxu0 0.0
    %517 = vmatprep.subr.mxu0 0.0
    %518 = vmatpush1.xpose.msra.mxu0 0.0
    %519 = vmatprep.subr.mxu0 0.0
    %520 = vmatpush1.xpose.msra.mxu0 0.0
    %521 = vmatprep.subr.mxu0 0.0
    %522 = vmatpush1.xpose.msra.mxu0 0.0
    %523 = vmatprep.subr.mxu0 0.0
    %524 = vmatpush1.xpose.msra.mxu0 0.0
    %525 = vmatprep.subr.mxu0 0.0
    %526 = vmatpush1.xpose.msra.mxu0 0.0
    %527 = vmatprep.subr.mxu0 0.0
    %528 = vmatpush1.xpose.msra.mxu0 0.0
    %529 = vmatprep.subr.mxu0 0.0
    %530 = vmatpush1.xpose.msra.mxu0 0.0
    %531 = vmatprep.subr.mxu0 0.0
    %532 = vmatpush1.xpose.msra.mxu0 0.0
    %533 = vmatprep.subr.mxu0 0.0
    %534 = vmatpush1.xpose.msra.mxu0 0.0
    %535 = vmatprep.subr.mxu0 0.0
    %536 = vmatpush1.xpose.msra.mxu0 0.0
    %537 = vmatprep.subr.mxu0 0.0
    %538 = vmatpush1.xpose.msra.mxu0 0.0
    %539 = vmatprep.subr.mxu0 0.0
    %540 = vmatpush1.xpose.msra.mxu0 0.0
    %541 = vmatprep.mubr.f32.mxu0 0.0
    %542 = vmatmul.mubr.f32.gmra.mrb[0].mxu0 %v473
    %v543 = vpop.f32.mrb[0].mxu0
    %v544 = vadd.f32 %v132, %v543
    %v545 = vpop.f32.mrb[0].mxu0
    %546 = vdwg.mxu0
    %547 = vrot.lane.b32.xlu0 %v129, 120
    %v548 = vpop.permute.xlu0 %547
    %549 = vrot.lane.b32.xlu0 %v129, 88
    %v550 = vpop.permute.xlu0 %549
    %v551 = vsel %vm137, %v548, 0
    %v553 = vsel %vm137, %v550, 0
    %555 = vmatprep.subr.mxu0 0.0
    %556 = vmatpush1.xpose.msra.mxu0 %v553
    %557 = vmatprep.subr.mxu0 0.0
    %558 = vmatpush1.xpose.msra.mxu0 0.0
    %559 = vmatprep.subr.mxu0 0.0
    %560 = vmatpush1.xpose.msra.mxu0 0.0
    %561 = vmatprep.subr.mxu0 0.0
    %562 = vmatpush1.xpose.msra.mxu0 0.0
    %563 = vmatprep.subr.mxu0 0.0
    %564 = vmatpush1.xpose.msra.mxu0 0.0
    %565 = vmatprep.subr.mxu0 0.0
    %566 = vmatpush1.xpose.msra.mxu0 0.0
    %567 = vmatprep.subr.mxu0 0.0
    %568 = vmatpush1.xpose.msra.mxu0 0.0
    %569 = vmatprep.subr.mxu0 0.0
    %570 = vmatpush1.xpose.msra.mxu0 0.0
    %571 = vmatprep.subr.mxu0 0.0
    %572 = vmatpush1.xpose.msra.mxu0 0.0
    %573 = vmatprep.subr.mxu0 0.0
    %574 = vmatpush1.xpose.msra.mxu0 0.0
    %575 = vmatprep.subr.mxu0 0.0
    %576 = vmatpush1.xpose.msra.mxu0 0.0
    %577 = vmatprep.subr.mxu0 0.0
    %578 = vmatpush1.xpose.msra.mxu0 0.0
    %579 = vmatprep.subr.mxu0 0.0
    %580 = vmatpush1.xpose.msra.mxu0 0.0
    %581 = vmatprep.subr.mxu0 0.0
    %582 = vmatpush1.xpose.msra.mxu0 0.0
    %583 = vmatprep.subr.mxu0 0.0
    %584 = vmatpush1.xpose.msra.mxu0 0.0
    %585 = vmatprep.subr.mxu0 0.0
    %586 = vmatpush1.xpose.msra.mxu0 0.0
    %587 = vmatprep.subr.mxu0 0.0
    %588 = vmatpush1.xpose.msra.mxu0 0.0
    %589 = vmatprep.subr.mxu0 0.0
    %590 = vmatpush1.xpose.msra.mxu0 0.0
    %591 = vmatprep.subr.mxu0 0.0
    %592 = vmatpush1.xpose.msra.mxu0 0.0
    %593 = vmatprep.subr.mxu0 0.0
    %594 = vmatpush1.xpose.msra.mxu0 0.0
    %595 = vmatprep.subr.mxu0 0.0
    %596 = vmatpush1.xpose.msra.mxu0 0.0
    %597 = vmatprep.subr.mxu0 0.0
    %598 = vmatpush1.xpose.msra.mxu0 0.0
    %599 = vmatprep.subr.mxu0 0.0
    %600 = vmatpush1.xpose.msra.mxu0 0.0
    %601 = vmatprep.subr.mxu0 0.0
    %602 = vmatpush1.xpose.msra.mxu0 0.0
    %603 = vmatprep.subr.mxu0 0.0
    %604 = vmatpush1.xpose.msra.mxu0 0.0
    %605 = vmatprep.subr.mxu0 0.0
    %606 = vmatpush1.xpose.msra.mxu0 0.0
    %607 = vmatprep.subr.mxu0 0.0
    %608 = vmatpush1.xpose.msra.mxu0 0.0
    %609 = vmatprep.subr.mxu0 0.0
    %610 = vmatpush1.xpose.msra.mxu0 0.0
    %611 = vmatprep.subr.mxu0 0.0
    %612 = vmatpush1.xpose.msra.mxu0 0.0
    %613 = vmatprep.subr.mxu0 0.0
    %614 = vmatpush1.xpose.msra.mxu0 0.0
    %615 = vmatprep.subr.mxu0 0.0
    %616 = vmatpush1.xpose.msra.mxu0 0.0
    %617 = vmatprep.subr.mxu0 0.0
    %618 = vmatpush1.xpose.msra.mxu0 0.0
    %619 = vmatprep.mubr.f32.mxu0 0.0
    %620 = vmatmul.mubr.f32.gmra.mrb[0].mxu0 %v551
    %v621 = vpop.f32.mrb[0].mxu0
    %v622 = vadd.f32 %v133, %v621
    %v623 = vpop.f32.mrb[0].mxu0
    %624 = vdwg.mxu0
    %v625 = vsel %vm137, %v544, -inf
    %626 = vmax.xlane.f32.xlu0 %v625
    %v627 = vpop.xlane.xlu0 %626
    %v628 = vsel %vm137, %v622, -inf
    %629 = vmax.xlane.f32.xlu0 %v628
    %v630 = vpop.xlane.xlu0 %629
    %v631 = vsub.f32 %v544, %v627
    %v632 = vsub.f32 %v622, %v630
    %v633 = vmul.f32 %v631, 1.442695
    %v634 = vpow.pop %v633
    %v635 = vmul.f32 %v632, 1.442695
    %v636 = vpow.pop %v635
    %v637 = vsel %vm137, %v634, 0.0
    %638 = vadd.xlane.f32.xlu0 %v637
    %v639 = vpop.xlane.xlu0 %638
    %v640 = vsel %vm137, %v636, 0.0
    %641 = vadd.xlane.f32.xlu0 %v640
    %v642 = vpop.xlane.xlu0 %641
    %v643 = vrcp.pop %v639
    %v644 = vrcp.pop %v642
    %v645 = vmul.f32 %v639, %v643
    %v646 = vmul.f32 %v642, %v644
    %v647 = vsub.f32 2.0, %v645
    %v648 = vsub.f32 2.0, %v646
    %v649 = vmul.f32 %v643, %v647
    %v650 = vmul.f32 %v644, %v648
    %v651 = vmul.f32 %v634, %v649
    %v652 = vmul.f32 %v636, %v650
    %653 = vrot.lane.b32.xlu0 %v124, 56
    %v654 = vpop.permute.xlu0 %653
    %v657 = vsel %vm137, %v651, 0
    %659 = vmatprep.subr.mxu0 0.0
    %660 = vmatpush1.msra.mxu0 %v654
    %661 = vmatprep.subr.mxu0 0.0
    %662 = vmatpush1.msra.mxu0 0.0
    %663 = vmatprep.subr.mxu0 0.0
    %664 = vmatpush1.msra.mxu0 0.0
    %665 = vmatprep.subr.mxu0 0.0
    %666 = vmatpush1.msra.mxu0 0.0
    %667 = vmatprep.subr.mxu0 0.0
    %668 = vmatpush1.msra.mxu0 0.0
    %669 = vmatprep.subr.mxu0 0.0
    %670 = vmatpush1.msra.mxu0 0.0
    %671 = vmatprep.subr.mxu0 0.0
    %672 = vmatpush1.msra.mxu0 0.0
    %673 = vmatprep.subr.mxu0 0.0
    %674 = vmatpush1.msra.mxu0 0.0
    %675 = vmatprep.subr.mxu0 0.0
    %676 = vmatpush1.msra.mxu0 0.0
    %677 = vmatprep.subr.mxu0 0.0
    %678 = vmatpush1.msra.mxu0 0.0
    %679 = vmatprep.subr.mxu0 0.0
    %680 = vmatpush1.msra.mxu0 0.0
    %681 = vmatprep.subr.mxu0 0.0
    %682 = vmatpush1.msra.mxu0 0.0
    %683 = vmatprep.subr.mxu0 0.0
    %684 = vmatpush1.msra.mxu0 0.0
    %685 = vmatprep.subr.mxu0 0.0
    %686 = vmatpush1.msra.mxu0 0.0
    %687 = vmatprep.subr.mxu0 0.0
    %688 = vmatpush1.msra.mxu0 0.0
    %689 = vmatprep.subr.mxu0 0.0
    %690 = vmatpush1.msra.mxu0 0.0
    %691 = vmatprep.subr.mxu0 0.0
    %692 = vmatpush1.msra.mxu0 0.0
    %693 = vmatprep.subr.mxu0 0.0
    %694 = vmatpush1.msra.mxu0 0.0
    %695 = vmatprep.subr.mxu0 0.0
    %696 = vmatpush1.msra.mxu0 0.0
    %697 = vmatprep.subr.mxu0 0.0
    %698 = vmatpush1.msra.mxu0 0.0
    %699 = vmatprep.subr.mxu0 0.0
    %700 = vmatpush1.msra.mxu0 0.0
    %701 = vmatprep.subr.mxu0 0.0
    %702 = vmatpush1.msra.mxu0 0.0
    %703 = vmatprep.subr.mxu0 0.0
    %704 = vmatpush1.msra.mxu0 0.0
    %705 = vmatprep.subr.mxu0 0.0
    %706 = vmatpush1.msra.mxu0 0.0
    %707 = vmatprep.subr.mxu0 0.0
    %708 = vmatpush1.msra.mxu0 0.0
    %709 = vmatprep.subr.mxu0 0.0
    %710 = vmatpush1.msra.mxu0 0.0
    %711 = vmatprep.subr.mxu0 0.0
    %712 = vmatpush1.msra.mxu0 0.0
    %713 = vmatprep.subr.mxu0 0.0
    %714 = vmatpush1.msra.mxu0 0.0
    %715 = vmatprep.subr.mxu0 0.0
    %716 = vmatpush1.msra.mxu0 0.0
    %717 = vmatprep.subr.mxu0 0.0
    %718 = vmatpush1.msra.mxu0 0.0
    %719 = vmatprep.subr.mxu0 0.0
    %720 = vmatpush1.msra.mxu0 0.0
    %721 = vmatprep.subr.mxu0 0.0
    %722 = vmatpush1.msra.mxu0 0.0
    %723 = vmatprep.mubr.f32.mxu0 0.0
    %724 = vmatmul.mubr.f32.gmra.mrb[0].mxu0 %v657
    %v725 = vpop.f32.mrb[0].mxu0
    %v726 = vadd.f32 0.0, %v725
    %v727 = vpop.f32.mrb[0].mxu0
    %728 = vdwg.mxu0
    %729 = vrot.lane.b32.xlu0 %v129, 56
    %v730 = vpop.permute.xlu0 %729
    %v733 = vsel %vm137, %v652, 0
    %735 = vmatprep.subr.mxu0 0.0
    %736 = vmatpush1.msra.mxu0 %v730
    %737 = vmatprep.subr.mxu0 0.0
    %738 = vmatpush1.msra.mxu0 0.0
    %739 = vmatprep.subr.mxu0 0.0
    %740 = vmatpush1.msra.mxu0 0.0
    %741 = vmatprep.subr.mxu0 0.0
    %742 = vmatpush1.msra.mxu0 0.0
    %743 = vmatprep.subr.mxu0 0.0
    %744 = vmatpush1.msra.mxu0 0.0
    %745 = vmatprep.subr.mxu0 0.0
    %746 = vmatpush1.msra.mxu0 0.0
    %747 = vmatprep.subr.mxu0 0.0
    %748 = vmatpush1.msra.mxu0 0.0
    %749 = vmatprep.subr.mxu0 0.0
    %750 = vmatpush1.msra.mxu0 0.0
    %751 = vmatprep.subr.mxu0 0.0
    %752 = vmatpush1.msra.mxu0 0.0
    %753 = vmatprep.subr.mxu0 0.0
    %754 = vmatpush1.msra.mxu0 0.0
    %755 = vmatprep.subr.mxu0 0.0
    %756 = vmatpush1.msra.mxu0 0.0
    %757 = vmatprep.subr.mxu0 0.0
    %758 = vmatpush1.msra.mxu0 0.0
    %759 = vmatprep.subr.mxu0 0.0
    %760 = vmatpush1.msra.mxu0 0.0
    %761 = vmatprep.subr.mxu0 0.0
    %762 = vmatpush1.msra.mxu0 0.0
    %763 = vmatprep.subr.mxu0 0.0
    %764 = vmatpush1.msra.mxu0 0.0
    %765 = vmatprep.subr.mxu0 0.0
    %766 = vmatpush1.msra.mxu0 0.0
    %767 = vmatprep.subr.mxu0 0.0
    %768 = vmatpush1.msra.mxu0 0.0
    %769 = vmatprep.subr.mxu0 0.0
    %770 = vmatpush1.msra.mxu0 0.0
    %771 = vmatprep.subr.mxu0 0.0
    %772 = vmatpush1.msra.mxu0 0.0
    %773 = vmatprep.subr.mxu0 0.0
    %774 = vmatpush1.msra.mxu0 0.0
    %775 = vmatprep.subr.mxu0 0.0
    %776 = vmatpush1.msra.mxu0 0.0
    %777 = vmatprep.subr.mxu0 0.0
    %778 = vmatpush1.msra.mxu0 0.0
    %779 = vmatprep.subr.mxu0 0.0
    %780 = vmatpush1.msra.mxu0 0.0
    %781 = vmatprep.subr.mxu0 0.0
    %782 = vmatpush1.msra.mxu0 0.0
    %783 = vmatprep.subr.mxu0 0.0
    %784 = vmatpush1.msra.mxu0 0.0
    %785 = vmatprep.subr.mxu0 0.0
    %786 = vmatpush1.msra.mxu0 0.0
    %787 = vmatprep.subr.mxu0 0.0
    %788 = vmatpush1.msra.mxu0 0.0
    %789 = vmatprep.subr.mxu0 0.0
    %790 = vmatpush1.msra.mxu0 0.0
    %791 = vmatprep.subr.mxu0 0.0
    %792 = vmatpush1.msra.mxu0 0.0
    %793 = vmatprep.subr.mxu0 0.0
    %794 = vmatpush1.msra.mxu0 0.0
    %795 = vmatprep.subr.mxu0 0.0
    %796 = vmatpush1.msra.mxu0 0.0
    %797 = vmatprep.subr.mxu0 0.0
    %798 = vmatpush1.msra.mxu0 0.0
    %799 = vmatprep.mubr.f32.mxu0 0.0
    %800 = vmatmul.mubr.f32.gmra.mrb[0].mxu0 %v733
    %v801 = vpop.f32.mrb[0].mxu0
    %v802 = vadd.f32 0.0, %v801
    %v803 = vpop.f32.mrb[0].mxu0
    %804 = vdwg.mxu0
    %805 = vrot.lane.b32.xlu0 %v124, 112
    %v806 = vpop.permute.xlu0 %805
    %807 = vrot.lane.b32.xlu0 %v124, 80
    %v808 = vpop.permute.xlu0 %807
    %v809 = vsel %vm137, %v806, 0
    %v811 = vsel %vm137, %v808, 0
    %813 = vmatprep.subr.mxu0 0.0
    %814 = vmatpush1.xpose.msra.mxu0 %v811
    %815 = vmatprep.subr.mxu0 0.0
    %816 = vmatpush1.xpose.msra.mxu0 0.0
    %817 = vmatprep.subr.mxu0 0.0
    %818 = vmatpush1.xpose.msra.mxu0 0.0
    %819 = vmatprep.subr.mxu0 0.0
    %820 = vmatpush1.xpose.msra.mxu0 0.0
    %821 = vmatprep.subr.mxu0 0.0
    %822 = vmatpush1.xpose.msra.mxu0 0.0
    %823 = vmatprep.subr.mxu0 0.0
    %824 = vmatpush1.xpose.msra.mxu0 0.0
    %825 = vmatprep.subr.mxu0 0.0
    %826 = vmatpush1.xpose.msra.mxu0 0.0
    %827 = vmatprep.subr.mxu0 0.0
    %828 = vmatpush1.xpose.msra.mxu0 0.0
    %829 = vmatprep.subr.mxu0 0.0
    %830 = vmatpush1.xpose.msra.mxu0 0.0
    %831 = vmatprep.subr.mxu0 0.0
    %832 = vmatpush1.xpose.msra.mxu0 0.0
    %833 = vmatprep.subr.mxu0 0.0
    %834 = vmatpush1.xpose.msra.mxu0 0.0
    %835 = vmatprep.subr.mxu0 0.0
    %836 = vmatpush1.xpose.msra.mxu0 0.0
    %837 = vmatprep.subr.mxu0 0.0
    %838 = vmatpush1.xpose.msra.mxu0 0.0
    %839 = vmatprep.subr.mxu0 0.0
    %840 = vmatpush1.xpose.msra.mxu0 0.0
    %841 = vmatprep.subr.mxu0 0.0
    %842 = vmatpush1.xpose.msra.mxu0 0.0
    %843 = vmatprep.subr.mxu0 0.0
    %844 = vmatpush1.xpose.msra.mxu0 0.0
    %845 = vmatprep.subr.mxu0 0.0
    %846 = vmatpush1.xpose.msra.mxu0 0.0
    %847 = vmatprep.subr.mxu0 0.0
    %848 = vmatpush1.xpose.msra.mxu0 0.0
    %849 = vmatprep.subr.mxu0 0.0
    %850 = vmatpush1.xpose.msra.mxu0 0.0
    %851 = vmatprep.subr.mxu0 0.0
    %852 = vmatpush1.xpose.msra.mxu0 0.0
    %853 = vmatprep.subr.mxu0 0.0
    %854 = vmatpush1.xpose.msra.mxu0 0.0
    %855 = vmatprep.subr.mxu0 0.0
    %856 = vmatpush1.xpose.msra.mxu0 0.0
    %857 = vmatprep.subr.mxu0 0.0
    %858 = vmatpush1.xpose.msra.mxu0 0.0
    %859 = vmatprep.subr.mxu0 0.0
    %860 = vmatpush1.xpose.msra.mxu0 0.0
    %861 = vmatprep.subr.mxu0 0.0
    %862 = vmatpush1.xpose.msra.mxu0 0.0
    %863 = vmatprep.subr.mxu0 0.0
    %864 = vmatpush1.xpose.msra.mxu0 0.0
    %865 = vmatprep.subr.mxu0 0.0
    %866 = vmatpush1.xpose.msra.mxu0 0.0
    %867 = vmatprep.subr.mxu0 0.0
    %868 = vmatpush1.xpose.msra.mxu0 0.0
    %869 = vmatprep.subr.mxu0 0.0
    %870 = vmatpush1.xpose.msra.mxu0 0.0
    %871 = vmatprep.subr.mxu0 0.0
    %872 = vmatpush1.xpose.msra.mxu0 0.0
    %873 = vmatprep.subr.mxu0 0.0
    %874 = vmatpush1.xpose.msra.mxu0 0.0
    %875 = vmatprep.subr.mxu0 0.0
    %876 = vmatpush1.xpose.msra.mxu0 0.0
    %877 = vmatprep.mubr.f32.mxu0 0.0
    %878 = vmatmul.mubr.f32.gmra.mrb[0].mxu0 %v809
    %v879 = vpop.f32.mrb[0].mxu0
    %v880 = vadd.f32 %v132, %v879
    %v881 = vpop.f32.mrb[0].mxu0
    %882 = vdwg.mxu0
    %883 = vrot.lane.b32.xlu0 %v129, 112
    %v884 = vpop.permute.xlu0 %883
    %885 = vrot.lane.b32.xlu0 %v129, 80
    %v886 = vpop.permute.xlu0 %885
    %v887 = vsel %vm137, %v884, 0
    %v889 = vsel %vm137, %v886, 0
    %891 = vmatprep.subr.mxu0 0.0
    %892 = vmatpush1.xpose.msra.mxu0 %v889
    %893 = vmatprep.subr.mxu0 0.0
    %894 = vmatpush1.xpose.msra.mxu0 0.0
    %895 = vmatprep.subr.mxu0 0.0
    %896 = vmatpush1.xpose.msra.mxu0 0.0
    %897 = vmatprep.subr.mxu0 0.0
    %898 = vmatpush1.xpose.msra.mxu0 0.0
    %899 = vmatprep.subr.mxu0 0.0
    %900 = vmatpush1.xpose.msra.mxu0 0.0
    %901 = vmatprep.subr.mxu0 0.0
    %902 = vmatpush1.xpose.msra.mxu0 0.0
    %903 = vmatprep.subr.mxu0 0.0
    %904 = vmatpush1.xpose.msra.mxu0 0.0
    %905 = vmatprep.subr.mxu0 0.0
    %906 = vmatpush1.xpose.msra.mxu0 0.0
    %907 = vmatprep.subr.mxu0 0.0
    %908 = vmatpush1.xpose.msra.mxu0 0.0
    %909 = vmatprep.subr.mxu0 0.0
    %910 = vmatpush1.xpose.msra.mxu0 0.0
    %911 = vmatprep.subr.mxu0 0.0
    %912 = vmatpush1.xpose.msra.mxu0 0.0
    %913 = vmatprep.subr.mxu0 0.0
    %914 = vmatpush1.xpose.msra.mxu0 0.0
    %915 = vmatprep.subr.mxu0 0.0
    %916 = vmatpush1.xpose.msra.mxu0 0.0
    %917 = vmatprep.subr.mxu0 0.0
    %918 = vmatpush1.xpose.msra.mxu0 0.0
    %919 = vmatprep.subr.mxu0 0.0
    %920 = vmatpush1.xpose.msra.mxu0 0.0
    %921 = vmatprep.subr.mxu0 0.0
    %922 = vmatpush1.xpose.msra.mxu0 0.0
    %923 = vmatprep.subr.mxu0 0.0
    %924 = vmatpush1.xpose.msra.mxu0 0.0
    %925 = vmatprep.subr.mxu0 0.0
    %926 = vmatpush1.xpose.msra.mxu0 0.0
    %927 = vmatprep.subr.mxu0 0.0
    %928 = vmatpush1.xpose.msra.mxu0 0.0
    %929 = vmatprep.subr.mxu0 0.0
    %930 = vmatpush1.xpose.msra.mxu0 0.0
    %931 = vmatprep.subr.mxu0 0.0
    %932 = vmatpush1.xpose.msra.mxu0 0.0
    %933 = vmatprep.subr.mxu0 0.0
    %934 = vmatpush1.xpose.msra.mxu0 0.0
    %935 = vmatprep.subr.mxu0 0.0
    %936 = vmatpush1.xpose.msra.mxu0 0.0
    %937 = vmatprep.subr.mxu0 0.0
    %938 = vmatpush1.xpose.msra.mxu0 0.0
    %939 = vmatprep.subr.mxu0 0.0
    %940 = vmatpush1.xpose.msra.mxu0 0.0
    %941 = vmatprep.subr.mxu0 0.0
    %942 = vmatpush1.xpose.msra.mxu0 0.0
    %943 = vmatprep.subr.mxu0 0.0
    %944 = vmatpush1.xpose.msra.mxu0 0.0
    %945 = vmatprep.subr.mxu0 0.0
    %946 = vmatpush1.xpose.msra.mxu0 0.0
    %947 = vmatprep.subr.mxu0 0.0
    %948 = vmatpush1.xpose.msra.mxu0 0.0
    %949 = vmatprep.subr.mxu0 0.0
    %950 = vmatpush1.xpose.msra.mxu0 0.0
    %951 = vmatprep.subr.mxu0 0.0
    %952 = vmatpush1.xpose.msra.mxu0 0.0
    %953 = vmatprep.subr.mxu0 0.0
    %954 = vmatpush1.xpose.msra.mxu0 0.0
    %955 = vmatprep.mubr.f32.mxu0 0.0
    %956 = vmatmul.mubr.f32.gmra.mrb[0].mxu0 %v887
    %v957 = vpop.f32.mrb[0].mxu0
    %v958 = vadd.f32 %v133, %v957
    %v959 = vpop.f32.mrb[0].mxu0
    %960 = vdwg.mxu0
    %v961 = vsel %vm137, %v880, -inf
    %962 = vmax.xlane.f32.xlu0 %v961
    %v963 = vpop.xlane.xlu0 %962
    %v964 = vsel %vm137, %v958, -inf
    %965 = vmax.xlane.f32.xlu0 %v964
    %v966 = vpop.xlane.xlu0 %965
    %v967 = vsub.f32 %v880, %v963
    %v968 = vsub.f32 %v958, %v966
    %v969 = vmul.f32 %v967, 1.442695
    %v970 = vpow.pop %v969
    %v971 = vmul.f32 %v968, 1.442695
    %v972 = vpow.pop %v971
    %v973 = vsel %vm137, %v970, 0.0
    %974 = vadd.xlane.f32.xlu0 %v973
    %v975 = vpop.xlane.xlu0 %974
    %v976 = vsel %vm137, %v972, 0.0
    %977 = vadd.xlane.f32.xlu0 %v976
    %v978 = vpop.xlane.xlu0 %977
    %v979 = vrcp.pop %v975
    %v980 = vrcp.pop %v978
    %v981 = vmul.f32 %v975, %v979
    %v982 = vmul.f32 %v978, %v980
    %v983 = vsub.f32 2.0, %v981
    %v984 = vsub.f32 2.0, %v982
    %v985 = vmul.f32 %v979, %v983
    %v986 = vmul.f32 %v980, %v984
    %v987 = vmul.f32 %v970, %v985
    %v988 = vmul.f32 %v972, %v986
    %989 = vrot.lane.b32.xlu0 %v124, 48
    %v990 = vpop.permute.xlu0 %989
    %v993 = vsel %vm137, %v987, 0
    %995 = vmatprep.subr.mxu0 0.0
    %996 = vmatpush1.msra.mxu0 %v990
    %997 = vmatprep.subr.mxu0 0.0
    %998 = vmatpush1.msra.mxu0 0.0
    %999 = vmatprep.subr.mxu0 0.0
    %1000 = vmatpush1.msra.mxu0 0.0
    %1001 = vmatprep.subr.mxu0 0.0
    %1002 = vmatpush1.msra.mxu0 0.0
    %1003 = vmatprep.subr.mxu0 0.0
    %1004 = vmatpush1.msra.mxu0 0.0
    %1005 = vmatprep.subr.mxu0 0.0
    %1006 = vmatpush1.msra.mxu0 0.0
    %1007 = vmatprep.subr.mxu0 0.0
    %1008 = vmatpush1.msra.mxu0 0.0
    %1009 = vmatprep.subr.mxu0 0.0
    %1010 = vmatpush1.msra.mxu0 0.0
    %1011 = vmatprep.subr.mxu0 0.0
    %1012 = vmatpush1.msra.mxu0 0.0
    %1013 = vmatprep.subr.mxu0 0.0
    %1014 = vmatpush1.msra.mxu0 0.0
    %1015 = vmatprep.subr.mxu0 0.0
    %1016 = vmatpush1.msra.mxu0 0.0
    %1017 = vmatprep.subr.mxu0 0.0
    %1018 = vmatpush1.msra.mxu0 0.0
    %1019 = vmatprep.subr.mxu0 0.0
    %1020 = vmatpush1.msra.mxu0 0.0
    %1021 = vmatprep.subr.mxu0 0.0
    %1022 = vmatpush1.msra.mxu0 0.0
    %1023 = vmatprep.subr.mxu0 0.0
    %1024 = vmatpush1.msra.mxu0 0.0
    %1025 = vmatprep.subr.mxu0 0.0
    %1026 = vmatpush1.msra.mxu0 0.0
    %1027 = vmatprep.subr.mxu0 0.0
    %1028 = vmatpush1.msra.mxu0 0.0
    %1029 = vmatprep.subr.mxu0 0.0
    %1030 = vmatpush1.msra.mxu0 0.0
    %1031 = vmatprep.subr.mxu0 0.0
    %1032 = vmatpush1.msra.mxu0 0.0
    %1033 = vmatprep.subr.mxu0 0.0
    %1034 = vmatpush1.msra.mxu0 0.0
    %1035 = vmatprep.subr.mxu0 0.0
    %1036 = vmatpush1.msra.mxu0 0.0
    %1037 = vmatprep.subr.mxu0 0.0
    %1038 = vmatpush1.msra.mxu0 0.0
    %1039 = vmatprep.subr.mxu0 0.0
    %1040 = vmatpush1.msra.mxu0 0.0
    %1041 = vmatprep.subr.mxu0 0.0
    %1042 = vmatpush1.msra.mxu0 0.0
    %1043 = vmatprep.subr.mxu0 0.0
    %1044 = vmatpush1.msra.mxu0 0.0
    %1045 = vmatprep.subr.mxu0 0.0
    %1046 = vmatpush1.msra.mxu0 0.0
    %1047 = vmatprep.subr.mxu0 0.0
    %1048 = vmatpush1.msra.mxu0 0.0
    %1049 = vmatprep.subr.mxu0 0.0
    %1050 = vmatpush1.msra.mxu0 0.0
    %1051 = vmatprep.subr.mxu0 0.0
    %1052 = vmatpush1.msra.mxu0 0.0
    %1053 = vmatprep.subr.mxu0 0.0
    %1054 = vmatpush1.msra.mxu0 0.0
    %1055 = vmatprep.subr.mxu0 0.0
    %1056 = vmatpush1.msra.mxu0 0.0
    %1057 = vmatprep.subr.mxu0 0.0
    %1058 = vmatpush1.msra.mxu0 0.0
    %1059 = vmatprep.mubr.f32.mxu0 0.0
    %1060 = vmatmul.mubr.f32.gmra.mrb[0].mxu0 %v993
    %v1061 = vpop.f32.mrb[0].mxu0
    %v1062 = vadd.f32 0.0, %v1061
    %v1063 = vpop.f32.mrb[0].mxu0
    %1064 = vdwg.mxu0
    %1065 = vrot.lane.b32.xlu0 %v129, 48
    %v1066 = vpop.permute.xlu0 %1065
    %v1069 = vsel %vm137, %v988, 0
    %1071 = vmatprep.subr.mxu0 0.0
    %1072 = vmatpush1.msra.mxu0 %v1066
    %1073 = vmatprep.subr.mxu0 0.0
    %1074 = vmatpush1.msra.mxu0 0.0
    %1075 = vmatprep.subr.mxu0 0.0
    %1076 = vmatpush1.msra.mxu0 0.0
    %1077 = vmatprep.subr.mxu0 0.0
    %1078 = vmatpush1.msra.mxu0 0.0
    %1079 = vmatprep.subr.mxu0 0.0
    %1080 = vmatpush1.msra.mxu0 0.0
    %1081 = vmatprep.subr.mxu0 0.0
    %1082 = vmatpush1.msra.mxu0 0.0
    %1083 = vmatprep.subr.mxu0 0.0
    %1084 = vmatpush1.msra.mxu0 0.0
    %1085 = vmatprep.subr.mxu0 0.0
    %1086 = vmatpush1.msra.mxu0 0.0
    %1087 = vmatprep.subr.mxu0 0.0
    %1088 = vmatpush1.msra.mxu0 0.0
    %1089 = vmatprep.subr.mxu0 0.0
    %1090 = vmatpush1.msra.mxu0 0.0
    %1091 = vmatprep.subr.mxu0 0.0
    %1092 = vmatpush1.msra.mxu0 0.0
    %1093 = vmatprep.subr.mxu0 0.0
    %1094 = vmatpush1.msra.mxu0 0.0
    %1095 = vmatprep.subr.mxu0 0.0
    %1096 = vmatpush1.msra.mxu0 0.0
    %1097 = vmatprep.subr.mxu0 0.0
    %1098 = vmatpush1.msra.mxu0 0.0
    %1099 = vmatprep.subr.mxu0 0.0
    %1100 = vmatpush1.msra.mxu0 0.0
    %1101 = vmatprep.subr.mxu0 0.0
    %1102 = vmatpush1.msra.mxu0 0.0
    %1103 = vmatprep.subr.mxu0 0.0
    %1104 = vmatpush1.msra.mxu0 0.0
    %1105 = vmatprep.subr.mxu0 0.0
    %1106 = vmatpush1.msra.mxu0 0.0
    %1107 = vmatprep.subr.mxu0 0.0
    %1108 = vmatpush1.msra.mxu0 0.0
    %1109 = vmatprep.subr.mxu0 0.0
    %1110 = vmatpush1.msra.mxu0 0.0
    %1111 = vmatprep.subr.mxu0 0.0
    %1112 = vmatpush1.msra.mxu0 0.0
    %1113 = vmatprep.subr.mxu0 0.0
    %1114 = vmatpush1.msra.mxu0 0.0
    %1115 = vmatprep.subr.mxu0 0.0
    %1116 = vmatpush1.msra.mxu0 0.0
    %1117 = vmatprep.subr.mxu0 0.0
    %1118 = vmatpush1.msra.mxu0 0.0
    %1119 = vmatprep.subr.mxu0 0.0
    %1120 = vmatpush1.msra.mxu0 0.0
    %1121 = vmatprep.subr.mxu0 0.0
    %1122 = vmatpush1.msra.mxu0 0.0
    %1123 = vmatprep.subr.mxu0 0.0
    %1124 = vmatpush1.msra.mxu0 0.0
    %1125 = vmatprep.subr.mxu0 0.0
    %1126 = vmatpush1.msra.mxu0 0.0
    %1127 = vmatprep.subr.mxu0 0.0
    %1128 = vmatpush1.msra.mxu0 0.0
    %1129 = vmatprep.subr.mxu0 0.0
    %1130 = vmatpush1.msra.mxu0 0.0
    %1131 = vmatprep.subr.mxu0 0.0
    %1132 = vmatpush1.msra.mxu0 0.0
    %1133 = vmatprep.subr.mxu0 0.0
    %1134 = vmatpush1.msra.mxu0 0.0
    %1135 = vmatprep.mubr.f32.mxu0 0.0
    %1136 = vmatmul.mubr.f32.gmra.mrb[0].mxu0 %v1069
    %v1137 = vpop.f32.mrb[0].mxu0
    %v1138 = vadd.f32 0.0, %v1137
    %v1139 = vpop.f32.mrb[0].mxu0
    %1140 = vdwg.mxu0
    %1141 = vrot.lane.b32.xlu0 %v124, 104
    %v1142 = vpop.permute.xlu0 %1141
    %1143 = vrot.lane.b32.xlu0 %v124, 72
    %v1144 = vpop.permute.xlu0 %1143
    %v1145 = vsel %vm137, %v1142, 0
    %v1147 = vsel %vm137, %v1144, 0
    %1149 = vmatprep.subr.mxu0 0.0
    %1150 = vmatpush1.xpose.msra.mxu0 %v1147
    %1151 = vmatprep.subr.mxu0 0.0
    %1152 = vmatpush1.xpose.msra.mxu0 0.0
    %1153 = vmatprep.subr.mxu0 0.0
    %1154 = vmatpush1.xpose.msra.mxu0 0.0
    %1155 = vmatprep.subr.mxu0 0.0
    %1156 = vmatpush1.xpose.msra.mxu0 0.0
    %1157 = vmatprep.subr.mxu0 0.0
    %1158 = vmatpush1.xpose.msra.mxu0 0.0
    %1159 = vmatprep.subr.mxu0 0.0
    %1160 = vmatpush1.xpose.msra.mxu0 0.0
    %1161 = vmatprep.subr.mxu0 0.0
    %1162 = vmatpush1.xpose.msra.mxu0 0.0
    %1163 = vmatprep.subr.mxu0 0.0
    %1164 = vmatpush1.xpose.msra.mxu0 0.0
    %1165 = vmatprep.subr.mxu0 0.0
    %1166 = vmatpush1.xpose.msra.mxu0 0.0
    %1167 = vmatprep.subr.mxu0 0.0
    %1168 = vmatpush1.xpose.msra.mxu0 0.0
    %1169 = vmatprep.subr.mxu0 0.0
    %1170 = vmatpush1.xpose.msra.mxu0 0.0
    %1171 = vmatprep.subr.mxu0 0.0
    %1172 = vmatpush1.xpose.msra.mxu0 0.0
    %1173 = vmatprep.subr.mxu0 0.0
    %1174 = vmatpush1.xpose.msra.mxu0 0.0
    %1175 = vmatprep.subr.mxu0 0.0
    %1176 = vmatpush1.xpose.msra.mxu0 0.0
    %1177 = vmatprep.subr.mxu0 0.0
    %1178 = vmatpush1.xpose.msra.mxu0 0.0
    %1179 = vmatprep.subr.mxu0 0.0
    %1180 = vmatpush1.xpose.msra.mxu0 0.0
    %1181 = vmatprep.subr.mxu0 0.0
    %1182 = vmatpush1.xpose.msra.mxu0 0.0
    %1183 = vmatprep.subr.mxu0 0.0
    %1184 = vmatpush1.xpose.msra.mxu0 0.0
    %1185 = vmatprep.subr.mxu0 0.0
    %1186 = vmatpush1.xpose.msra.mxu0 0.0
    %1187 = vmatprep.subr.mxu0 0.0
    %1188 = vmatpush1.xpose.msra.mxu0 0.0
    %1189 = vmatprep.subr.mxu0 0.0
    %1190 = vmatpush1.xpose.msra.mxu0 0.0
    %1191 = vmatprep.subr.mxu0 0.0
    %1192 = vmatpush1.xpose.msra.mxu0 0.0
    %1193 = vmatprep.subr.mxu0 0.0
    %1194 = vmatpush1.xpose.msra.mxu0 0.0
    %1195 = vmatprep.subr.mxu0 0.0
    %1196 = vmatpush1.xpose.msra.mxu0 0.0
    %1197 = vmatprep.subr.mxu0 0.0
    %1198 = vmatpush1.xpose.msra.mxu0 0.0
    %1199 = vmatprep.subr.mxu0 0.0
    %1200 = vmatpush1.xpose.msra.mxu0 0.0
    %1201 = vmatprep.subr.mxu0 0.0
    %1202 = vmatpush1.xpose.msra.mxu0 0.0
    %1203 = vmatprep.subr.mxu0 0.0
    %1204 = vmatpush1.xpose.msra.mxu0 0.0
    %1205 = vmatprep.subr.mxu0 0.0
    %1206 = vmatpush1.xpose.msra.mxu0 0.0
    %1207 = vmatprep.subr.mxu0 0.0
    %1208 = vmatpush1.xpose.msra.mxu0 0.0
    %1209 = vmatprep.subr.mxu0 0.0
    %1210 = vmatpush1.xpose.msra.mxu0 0.0
    %1211 = vmatprep.subr.mxu0 0.0
    %1212 = vmatpush1.xpose.msra.mxu0 0.0
    %1213 = vmatprep.mubr.f32.mxu0 0.0
    %1214 = vmatmul.mubr.f32.gmra.mrb[0].mxu0 %v1145
    %v1215 = vpop.f32.mrb[0].mxu0
    %v1216 = vadd.f32 %v132, %v1215
    %v1217 = vpop.f32.mrb[0].mxu0
    %1218 = vdwg.mxu0
    %1219 = vrot.lane.b32.xlu0 %v129, 104
    %v1220 = vpop.permute.xlu0 %1219
    %1221 = vrot.lane.b32.xlu0 %v129, 72
    %v1222 = vpop.permute.xlu0 %1221
    %v1223 = vsel %vm137, %v1220, 0
    %v1225 = vsel %vm137, %v1222, 0
    %1227 = vmatprep.subr.mxu0 0.0
    %1228 = vmatpush1.xpose.msra.mxu0 %v1225
    %1229 = vmatprep.subr.mxu0 0.0
    %1230 = vmatpush1.xpose.msra.mxu0 0.0
    %1231 = vmatprep.subr.mxu0 0.0
    %1232 = vmatpush1.xpose.msra.mxu0 0.0
    %1233 = vmatprep.subr.mxu0 0.0
    %1234 = vmatpush1.xpose.msra.mxu0 0.0
    %1235 = vmatprep.subr.mxu0 0.0
    %1236 = vmatpush1.xpose.msra.mxu0 0.0
    %1237 = vmatprep.subr.mxu0 0.0
    %1238 = vmatpush1.xpose.msra.mxu0 0.0
    %1239 = vmatprep.subr.mxu0 0.0
    %1240 = vmatpush1.xpose.msra.mxu0 0.0
    %1241 = vmatprep.subr.mxu0 0.0
    %1242 = vmatpush1.xpose.msra.mxu0 0.0
    %1243 = vmatprep.subr.mxu0 0.0
    %1244 = vmatpush1.xpose.msra.mxu0 0.0
    %1245 = vmatprep.subr.mxu0 0.0
    %1246 = vmatpush1.xpose.msra.mxu0 0.0
    %1247 = vmatprep.subr.mxu0 0.0
    %1248 = vmatpush1.xpose.msra.mxu0 0.0
    %1249 = vmatprep.subr.mxu0 0.0
    %1250 = vmatpush1.xpose.msra.mxu0 0.0
    %1251 = vmatprep.subr.mxu0 0.0
    %1252 = vmatpush1.xpose.msra.mxu0 0.0
    %1253 = vmatprep.subr.mxu0 0.0
    %1254 = vmatpush1.xpose.msra.mxu0 0.0
    %1255 = vmatprep.subr.mxu0 0.0
    %1256 = vmatpush1.xpose.msra.mxu0 0.0
    %1257 = vmatprep.subr.mxu0 0.0
    %1258 = vmatpush1.xpose.msra.mxu0 0.0
    %1259 = vmatprep.subr.mxu0 0.0
    %1260 = vmatpush1.xpose.msra.mxu0 0.0
    %1261 = vmatprep.subr.mxu0 0.0
    %1262 = vmatpush1.xpose.msra.mxu0 0.0
    %1263 = vmatprep.subr.mxu0 0.0
    %1264 = vmatpush1.xpose.msra.mxu0 0.0
    %1265 = vmatprep.subr.mxu0 0.0
    %1266 = vmatpush1.xpose.msra.mxu0 0.0
    %1267 = vmatprep.subr.mxu0 0.0
    %1268 = vmatpush1.xpose.msra.mxu0 0.0
    %1269 = vmatprep.subr.mxu0 0.0
    %1270 = vmatpush1.xpose.msra.mxu0 0.0
    %1271 = vmatprep.subr.mxu0 0.0
    %1272 = vmatpush1.xpose.msra.mxu0 0.0
    %1273 = vmatprep.subr.mxu0 0.0
    %1274 = vmatpush1.xpose.msra.mxu0 0.0
    %1275 = vmatprep.subr.mxu0 0.0
    %1276 = vmatpush1.xpose.msra.mxu0 0.0
    %1277 = vmatprep.subr.mxu0 0.0
    %1278 = vmatpush1.xpose.msra.mxu0 0.0
    %1279 = vmatprep.subr.mxu0 0.0
    %1280 = vmatpush1.xpose.msra.mxu0 0.0
    %1281 = vmatprep.subr.mxu0 0.0
    %1282 = vmatpush1.xpose.msra.mxu0 0.0
    %1283 = vmatprep.subr.mxu0 0.0
    %1284 = vmatpush1.xpose.msra.mxu0 0.0
    %1285 = vmatprep.subr.mxu0 0.0
    %1286 = vmatpush1.xpose.msra.mxu0 0.0
    %1287 = vmatprep.subr.mxu0 0.0
    %1288 = vmatpush1.xpose.msra.mxu0 0.0
    %1289 = vmatprep.subr.mxu0 0.0
    %1290 = vmatpush1.xpose.msra.mxu0 0.0
    %1291 = vmatprep.mubr.f32.mxu0 0.0
    %1292 = vmatmul.mubr.f32.gmra.mrb[0].mxu0 %v1223
    %v1293 = vpop.f32.mrb[0].mxu0
    %v1294 = vadd.f32 %v133, %v1293
    %v1295 = vpop.f32.mrb[0].mxu0
    %1296 = vdwg.mxu0
    %v1297 = vsel %vm137, %v1216, -inf
    %1298 = vmax.xlane.f32.xlu0 %v1297
    %v1299 = vpop.xlane.xlu0 %1298
    %v1300 = vsel %vm137, %v1294, -inf
    %1301 = vmax.xlane.f32.xlu0 %v1300
    %v1302 = vpop.xlane.xlu0 %1301
    %v1303 = vsub.f32 %v1216, %v1299
    %v1304 = vsub.f32 %v1294, %v1302
    %v1305 = vmul.f32 %v1303, 1.442695
    %v1306 = vpow.pop %v1305
    %v1307 = vmul.f32 %v1304, 1.442695
    %v1308 = vpow.pop %v1307
    %v1309 = vsel %vm137, %v1306, 0.0
    %1310 = vadd.xlane.f32.xlu0 %v1309
    %v1311 = vpop.xlane.xlu0 %1310
    %v1312 = vsel %vm137, %v1308, 0.0
    %1313 = vadd.xlane.f32.xlu0 %v1312
    %v1314 = vpop.xlane.xlu0 %1313
    %v1315 = vrcp.pop %v1311
    %v1316 = vrcp.pop %v1314
    %v1317 = vmul.f32 %v1311, %v1315
    %v1318 = vmul.f32 %v1314, %v1316
    %v1319 = vsub.f32 2.0, %v1317
    %v1320 = vsub.f32 2.0, %v1318
    %v1321 = vmul.f32 %v1315, %v1319
    %v1322 = vmul.f32 %v1316, %v1320
    %v1323 = vmul.f32 %v1306, %v1321
    %v1324 = vmul.f32 %v1308, %v1322
    %1325 = vrot.lane.b32.xlu0 %v124, 40
    %v1326 = vpop.permute.xlu0 %1325
    %v1329 = vsel %vm137, %v1323, 0
    %1331 = vmatprep.subr.mxu0 0.0
    %1332 = vmatpush1.msra.mxu0 %v1326
    %1333 = vmatprep.subr.mxu0 0.0
    %1334 = vmatpush1.msra.mxu0 0.0
    %1335 = vmatprep.subr.mxu0 0.0
    %1336 = vmatpush1.msra.mxu0 0.0
    %1337 = vmatprep.subr.mxu0 0.0
    %1338 = vmatpush1.msra.mxu0 0.0
    %1339 = vmatprep.subr.mxu0 0.0
    %1340 = vmatpush1.msra.mxu0 0.0
    %1341 = vmatprep.subr.mxu0 0.0
    %1342 = vmatpush1.msra.mxu0 0.0
    %1343 = vmatprep.subr.mxu0 0.0
    %1344 = vmatpush1.msra.mxu0 0.0
    %1345 = vmatprep.subr.mxu0 0.0
    %1346 = vmatpush1.msra.mxu0 0.0
    %1347 = vmatprep.subr.mxu0 0.0
    %1348 = vmatpush1.msra.mxu0 0.0
    %1349 = vmatprep.subr.mxu0 0.0
    %1350 = vmatpush1.msra.mxu0 0.0
    %1351 = vmatprep.subr.mxu0 0.0
    %1352 = vmatpush1.msra.mxu0 0.0
    %1353 = vmatprep.subr.mxu0 0.0
    %1354 = vmatpush1.msra.mxu0 0.0
    %1355 = vmatprep.subr.mxu0 0.0
    %1356 = vmatpush1.msra.mxu0 0.0
    %1357 = vmatprep.subr.mxu0 0.0
    %1358 = vmatpush1.msra.mxu0 0.0
    %1359 = vmatprep.subr.mxu0 0.0
    %1360 = vmatpush1.msra.mxu0 0.0
    %1361 = vmatprep.subr.mxu0 0.0
    %1362 = vmatpush1.msra.mxu0 0.0
    %1363 = vmatprep.subr.mxu0 0.0
    %1364 = vmatpush1.msra.mxu0 0.0
    %1365 = vmatprep.subr.mxu0 0.0
    %1366 = vmatpush1.msra.mxu0 0.0
    %1367 = vmatprep.subr.mxu0 0.0
    %1368 = vmatpush1.msra.mxu0 0.0
    %1369 = vmatprep.subr.mxu0 0.0
    %1370 = vmatpush1.msra.mxu0 0.0
    %1371 = vmatprep.subr.mxu0 0.0
    %1372 = vmatpush1.msra.mxu0 0.0
    %1373 = vmatprep.subr.mxu0 0.0
    %1374 = vmatpush1.msra.mxu0 0.0
    %1375 = vmatprep.subr.mxu0 0.0
    %1376 = vmatpush1.msra.mxu0 0.0
    %1377 = vmatprep.subr.mxu0 0.0
    %1378 = vmatpush1.msra.mxu0 0.0
    %1379 = vmatprep.subr.mxu0 0.0
    %1380 = vmatpush1.msra.mxu0 0.0
    %1381 = vmatprep.subr.mxu0 0.0
    %1382 = vmatpush1.msra.mxu0 0.0
    %1383 = vmatprep.subr.mxu0 0.0
    %1384 = vmatpush1.msra.mxu0 0.0
    %1385 = vmatprep.subr.mxu0 0.0
    %1386 = vmatpush1.msra.mxu0 0.0
    %1387 = vmatprep.subr.mxu0 0.0
    %1388 = vmatpush1.msra.mxu0 0.0
    %1389 = vmatprep.subr.mxu0 0.0
    %1390 = vmatpush1.msra.mxu0 0.0
    %1391 = vmatprep.subr.mxu0 0.0
    %1392 = vmatpush1.msra.mxu0 0.0
    %1393 = vmatprep.subr.mxu0 0.0
    %1394 = vmatpush1.msra.mxu0 0.0
    %1395 = vmatprep.mubr.f32.mxu0 0.0
    %1396 = vmatmul.mubr.f32.gmra.mrb[0].mxu0 %v1329
    %v1397 = vpop.f32.mrb[0].mxu0
    %v1398 = vadd.f32 0.0, %v1397
    %v1399 = vpop.f32.mrb[0].mxu0
    %1400 = vdwg.mxu0
    %1401 = vrot.lane.b32.xlu0 %v129, 40
    %v1402 = vpop.permute.xlu0 %1401
    %v1405 = vsel %vm137, %v1324, 0
    %1407 = vmatprep.subr.mxu0 0.0
    %1408 = vmatpush1.msra.mxu0 %v1402
    %1409 = vmatprep.subr.mxu0 0.0
    %1410 = vmatpush1.msra.mxu0 0.0
    %1411 = vmatprep.subr.mxu0 0.0
    %1412 = vmatpush1.msra.mxu0 0.0
    %1413 = vmatprep.subr.mxu0 0.0
    %1414 = vmatpush1.msra.mxu0 0.0
    %1415 = vmatprep.subr.mxu0 0.0
    %1416 = vmatpush1.msra.mxu0 0.0
    %1417 = vmatprep.subr.mxu0 0.0
    %1418 = vmatpush1.msra.mxu0 0.0
    %1419 = vmatprep.subr.mxu0 0.0
    %1420 = vmatpush1.msra.mxu0 0.0
    %1421 = vmatprep.subr.mxu0 0.0
    %1422 = vmatpush1.msra.mxu0 0.0
    %1423 = vmatprep.subr.mxu0 0.0
    %1424 = vmatpush1.msra.mxu0 0.0
    %1425 = vmatprep.subr.mxu0 0.0
    %1426 = vmatpush1.msra.mxu0 0.0
    %1427 = vmatprep.subr.mxu0 0.0
    %1428 = vmatpush1.msra.mxu0 0.0
    %1429 = vmatprep.subr.mxu0 0.0
    %1430 = vmatpush1.msra.mxu0 0.0
    %1431 = vmatprep.subr.mxu0 0.0
    %1432 = vmatpush1.msra.mxu0 0.0
    %1433 = vmatprep.subr.mxu0 0.0
    %1434 = vmatpush1.msra.mxu0 0.0
    %1435 = vmatprep.subr.mxu0 0.0
    %1436 = vmatpush1.msra.mxu0 0.0
    %1437 = vmatprep.subr.mxu0 0.0
    %1438 = vmatpush1.msra.mxu0 0.0
    %1439 = vmatprep.subr.mxu0 0.0
    %1440 = vmatpush1.msra.mxu0 0.0
    %1441 = vmatprep.subr.mxu0 0.0
    %1442 = vmatpush1.msra.mxu0 0.0
    %1443 = vmatprep.subr.mxu0 0.0
    %1444 = vmatpush1.msra.mxu0 0.0
    %1445 = vmatprep.subr.mxu0 0.0
    %1446 = vmatpush1.msra.mxu0 0.0
    %1447 = vmatprep.subr.mxu0 0.0
    %1448 = vmatpush1.msra.mxu0 0.0
    %1449 = vmatprep.subr.mxu0 0.0
    %1450 = vmatpush1.msra.mxu0 0.0
    %1451 = vmatprep.subr.mxu0 0.0
    %1452 = vmatpush1.msra.mxu0 0.0
    %1453 = vmatprep.subr.mxu0 0.0
    %1454 = vmatpush1.msra.mxu0 0.0
    %1455 = vmatprep.subr.mxu0 0.0
    %1456 = vmatpush1.msra.mxu0 0.0
    %1457 = vmatprep.subr.mxu0 0.0
    %1458 = vmatpush1.msra.mxu0 0.0
    %1459 = vmatprep.subr.mxu0 0.0
    %1460 = vmatpush1.msra.mxu0 0.0
    %1461 = vmatprep.subr.mxu0 0.0
    %1462 = vmatpush1.msra.mxu0 0.0
    %1463 = vmatprep.subr.mxu0 0.0
    %1464 = vmatpush1.msra.mxu0 0.0
    %1465 = vmatprep.subr.mxu0 0.0
    %1466 = vmatpush1.msra.mxu0 0.0
    %1467 = vmatprep.subr.mxu0 0.0
    %1468 = vmatpush1.msra.mxu0 0.0
    %1469 = vmatprep.subr.mxu0 0.0
    %1470 = vmatpush1.msra.mxu0 0.0
    %1471 = vmatprep.mubr.f32.mxu0 0.0
    %1472 = vmatmul.mubr.f32.gmra.mrb[0].mxu0 %v1405
    %v1473 = vpop.f32.mrb[0].mxu0
    %v1474 = vadd.f32 0.0, %v1473
    %v1475 = vpop.f32.mrb[0].mxu0
    %1476 = vdwg.mxu0
    %1479 = vrot.lane.b32.xlu0 %v726, 8
    %v1480 = vpop.permute.xlu0 %1479
    %1481 = vrot.lane.b32.xlu0 %v802, 8
    %v1482 = vpop.permute.xlu0 %1481
    %1487 = vrot.lane.b32.xlu0 %v1062, 16
    %v1488 = vpop.permute.xlu0 %1487
    %1489 = vrot.lane.b32.xlu0 %v1138, 16
    %v1490 = vpop.permute.xlu0 %1489
    %1495 = vrot.lane.b32.xlu0 %v1398, 24
    %v1496 = vpop.permute.xlu0 %1495
    %1497 = vrot.lane.b32.xlu0 %v1474, 24
    %v1498 = vpop.permute.xlu0 %1497
    %v1501 = vsel %vm137, %v390, %v1480
    %v1502 = vsel %vm137, %v466, %v1482
    %vm1503 = vcmask 130048
    %v1504 = vsel %vm1503, %v1501, %v1488
    %v1505 = vsel %vm1503, %v1502, %v1490
    %vm1506 = vcmask 195584
    %v1507 = vsel %vm1506, %v1504, %v1496
    %v1508 = vsel %vm1506, %v1505, %v1498
    %v1509 = vld [vmem:[%s4] sm:$0xff]
    %v1510 = vld [vmem:[%s4 + $0x8] sm:$0xff]
    %v1511 = vld [vmem:[%s4 + $0x10] sm:$0xff]
    %v1512 = vld [vmem:[%s4 + $0x18] sm:$0xff]
    %v1513 = vld [vmem:[%s7] sm:$0x1]
    %v1514 = vlaneseq
    %v1515 = vshrl.u32 %v1514, 7
    %v1516 = vsub.s32 0, %v1515
    %v1517 = vrot.slane %v1513, %v1516
    %1522 = vrot.lane.b32.xlu0 %v1509, 32
    %v1523 = vpop.permute.xlu0 %1522
    %1524 = vrot.lane.b32.xlu0 %v1510, 32
    %v1525 = vpop.permute.xlu0 %1524
    %1526 = vrot.lane.b32.xlu0 %v1511, 32
    %v1527 = vpop.permute.xlu0 %1526
    %1528 = vrot.lane.b32.xlu0 %v1512, 32
    %v1529 = vpop.permute.xlu0 %1528
    %v1535 = vsel %vm50, %v1507, 0
    %v1538 = vsel %vm50, %v1508, 0
    %1540 = vmatprep.subr.mxu0 0.0
    %1541 = vmatpush1.msra.mxu0 %v1523
    %1542 = vmatprep.subr.mxu0 0.0
    %1543 = vmatpush1.msra.mxu0 %v1525
    %1544 = vmatprep.subr.mxu0 0.0
    %1545 = vmatpush1.msra.mxu0 %v1527
    %1546 = vmatprep.subr.mxu0 0.0
    %1547 = vmatpush1.msra.mxu0 %v1529
    %1548 = vmatprep.subr.mxu0 0.0
    %1549 = vmatpush1.msra.mxu0 0.0
    %1550 = vmatprep.subr.mxu0 0.0
    %1551 = vmatpush1.msra.mxu0 0.0
    %1552 = vmatprep.subr.mxu0 0.0
    %1553 = vmatpush1.msra.mxu0 0.0
    %1554 = vmatprep.subr.mxu0 0.0
    %1555 = vmatpush1.msra.mxu0 0.0
    %1556 = vmatprep.subr.mxu0 0.0
    %1557 = vmatpush1.msra.mxu0 0.0
    %1558 = vmatprep.subr.mxu0 0.0
    %1559 = vmatpush1.msra.mxu0 0.0
    %1560 = vmatprep.subr.mxu0 0.0
    %1561 = vmatpush1.msra.mxu0 0.0
    %1562 = vmatprep.subr.mxu0 0.0
    %1563 = vmatpush1.msra.mxu0 0.0
    %1564 = vmatprep.subr.mxu0 0.0
    %1565 = vmatpush1.msra.mxu0 0.0
    %1566 = vmatprep.subr.mxu0 0.0
    %1567 = vmatpush1.msra.mxu0 0.0
    %1568 = vmatprep.subr.mxu0 0.0
    %1569 = vmatpush1.msra.mxu0 0.0
    %1570 = vmatprep.subr.mxu0 0.0
    %1571 = vmatpush1.msra.mxu0 0.0
    %1572 = vmatprep.subr.mxu0 0.0
    %1573 = vmatpush1.msra.mxu0 0.0
    %1574 = vmatprep.subr.mxu0 0.0
    %1575 = vmatpush1.msra.mxu0 0.0
    %1576 = vmatprep.subr.mxu0 0.0
    %1577 = vmatpush1.msra.mxu0 0.0
    %1578 = vmatprep.subr.mxu0 0.0
    %1579 = vmatpush1.msra.mxu0 0.0
    %1580 = vmatprep.subr.mxu0 0.0
    %1581 = vmatpush1.msra.mxu0 0.0
    %1582 = vmatprep.subr.mxu0 0.0
    %1583 = vmatpush1.msra.mxu0 0.0
    %1584 = vmatprep.subr.mxu0 0.0
    %1585 = vmatpush1.msra.mxu0 0.0
    %1586 = vmatprep.subr.mxu0 0.0
    %1587 = vmatpush1.msra.mxu0 0.0
    %1588 = vmatprep.subr.mxu0 0.0
    %1589 = vmatpush1.msra.mxu0 0.0
    %1590 = vmatprep.subr.mxu0 0.0
    %1591 = vmatpush1.msra.mxu0 0.0
    %1592 = vmatprep.subr.mxu0 0.0
    %1593 = vmatpush1.msra.mxu0 0.0
    %1594 = vmatprep.subr.mxu0 0.0
    %1595 = vmatpush1.msra.mxu0 0.0
    %1596 = vmatprep.subr.mxu0 0.0
    %1597 = vmatpush1.msra.mxu0 0.0
    %1598 = vmatprep.subr.mxu0 0.0
    %1599 = vmatpush1.msra.mxu0 0.0
    %1600 = vmatprep.subr.mxu0 0.0
    %1601 = vmatpush1.msra.mxu0 0.0
    %1602 = vmatprep.subr.mxu0 0.0
    %1603 = vmatpush1.msra.mxu0 0.0
    %1604 = vmatprep.mubr.f32.mxu0 0.0
    %1605 = vmatmul.mubr.f32.gmra.mrb[0].mxu0 %v1535
    %v1606 = vpop.f32.mrb[0].mxu0
    %v1607 = vadd.f32 %v1517, %v1606
    %v1608 = vpop.f32.mrb[0].mxu0
    %1609 = vmatprep.mubr.f32.mxu0 0.0
    %1610 = vmatmul.mubr.f32.gmra.mrb[0].mxu0 %v1538
    %v1611 = vpop.f32.mrb[0].mxu0
    %v1612 = vadd.f32 %v1517, %v1611
    %v1613 = vpop.f32.mrb[0].mxu0
    %1614 = vdwg.mxu0
    %v1615 = vadd.f32 %v1607, %v44
    %v1616 = vadd.f32 %v1612, %v45
    %v1617 = vld [vmem:[%s7 + $0x1] sm:$0x1]
    %v1618 = vld [vmem:[%s7 + $0x2] sm:$0x1]
    %v1619 = vsel %vm50, %v1615, 0.0
    %1620 = vadd.xlane.f32.xlu0 %v1619
    %v1621 = vpop.xlane.xlu0 %1620
    %v1622 = vsel %vm50, %v1616, 0.0
    %1623 = vadd.xlane.f32.xlu0 %v1622
    %v1624 = vpop.xlane.xlu0 %1623
    %v1625 = vrcp.pop 32.0
    %v1626 = vmul.f32 %v1621, %v1625
    %v1627 = vmul.f32 %v1624, %v1625
    %v1628 = vsub.f32 %v1615, %v1626
    %v1629 = vsub.f32 %v1616, %v1627
    %v1630 = vmul.f32 %v1628, %v1628
    %v1631 = vmul.f32 %v1629, %v1629
    %v1632 = vsel %vm50, %v1630, 0.0
    %1633 = vadd.xlane.f32.xlu0 %v1632
    %v1634 = vpop.xlane.xlu0 %1633
    %v1635 = vsel %vm50, %v1631, 0.0
    %1636 = vadd.xlane.f32.xlu0 %v1635
    %v1637 = vpop.xlane.xlu0 %1636
    %v1638 = vmul.f32 %v1634, %v1625
    %v1639 = vmul.f32 %v1637, %v1625
    %v1640 = vadd.f32 %v1638, 1e-05
    %v1641 = vadd.f32 %v1639, 1e-05
    %v1642 = vrsqrt.pop %v1640
    %v1643 = vrsqrt.pop %v1641
    %v1644 = vmul.f32 %v1628, %v1642
    %v1645 = vmul.f32 %v1629, %v1643
    %v1646 = vlaneseq
    %v1647 = vshrl.u32 %v1646, 7
    %v1648 = vsub.s32 0, %v1647
    %v1649 = vrot.slane %v1617, %v1648
    %v1650 = vmul.f32 %v1644, %v1649
    %v1651 = vmul.f32 %v1645, %v1649
    %v1652 = vlaneseq
    %v1653 = vshrl.u32 %v1652, 7
    %v1654 = vsub.s32 0, %v1653
    %v1655 = vrot.slane %v1618, %v1654
    %v1656 = vadd.f32 %v1650, %v1655
    %v1657 = vadd.f32 %v1651, %v1655
    %v1658 = vld [vmem:[%s5] sm:$0xff]
    %v1659 = vld [vmem:[%s5 + $0x8] sm:$0xff]
    %v1660 = vld [vmem:[%s5 + $0x10] sm:$0xff]
    %v1661 = vld [vmem:[%s5 + $0x18] sm:$0xff]
    %v1663 = vsel %vm50, %v1656, 0
    %v1666 = vsel %vm50, %v1657, 0
    %1668 = vmatprep.subr.mxu0 0.0
    %1669 = vmatpush1.msra.mxu0 %v1658
    %1670 = vmatprep.subr.mxu0 0.0
    %1671 = vmatpush1.msra.mxu0 %v1659
    %1672 = vmatprep.subr.mxu0 0.0
    %1673 = vmatpush1.msra.mxu0 %v1660
    %1674 = vmatprep.subr.mxu0 0.0
    %1675 = vmatpush1.msra.mxu0 %v1661
    %1676 = vmatprep.subr.mxu0 0.0
    %1677 = vmatpush1.msra.mxu0 0.0
    %1678 = vmatprep.subr.mxu0 0.0
    %1679 = vmatpush1.msra.mxu0 0.0
    %1680 = vmatprep.subr.mxu0 0.0
    %1681 = vmatpush1.msra.mxu0 0.0
    %1682 = vmatprep.subr.mxu0 0.0
    %1683 = vmatpush1.msra.mxu0 0.0
    %1684 = vmatprep.subr.mxu0 0.0
    %1685 = vmatpush1.msra.mxu0 0.0
    %1686 = vmatprep.subr.mxu0 0.0
    %1687 = vmatpush1.msra.mxu0 0.0
    %1688 = vmatprep.subr.mxu0 0.0
    %1689 = vmatpush1.msra.mxu0 0.0
    %1690 = vmatprep.subr.mxu0 0.0
    %1691 = vmatpush1.msra.mxu0 0.0
    %1692 = vmatprep.subr.mxu0 0.0
    %1693 = vmatpush1.msra.mxu0 0.0
    %1694 = vmatprep.subr.mxu0 0.0
    %1695 = vmatpush1.msra.mxu0 0.0
    %1696 = vmatprep.subr.mxu0 0.0
    %1697 = vmatpush1.msra.mxu0 0.0
    %1698 = vmatprep.subr.mxu0 0.0
    %1699 = vmatpush1.msra.mxu0 0.0
    %1700 = vmatprep.subr.mxu0 0.0
    %1701 = vmatpush1.msra.mxu0 0.0
    %1702 = vmatprep.subr.mxu0 0.0
    %1703 = vmatpush1.msra.mxu0 0.0
    %1704 = vmatprep.subr.mxu0 0.0
    %1705 = vmatpush1.msra.mxu0 0.0
    %1706 = vmatprep.subr.mxu0 0.0
    %1707 = vmatpush1.msra.mxu0 0.0
    %1708 = vmatprep.subr.mxu0 0.0
    %1709 = vmatpush1.msra.mxu0 0.0
    %1710 = vmatprep.subr.mxu0 0.0
    %1711 = vmatpush1.msra.mxu0 0.0
    %1712 = vmatprep.subr.mxu0 0.0
    %1713 = vmatpush1.msra.mxu0 0.0
    %1714 = vmatprep.subr.mxu0 0.0
    %1715 = vmatpush1.msra.mxu0 0.0
    %1716 = vmatprep.subr.mxu0 0.0
    %1717 = vmatpush1.msra.mxu0 0.0
    %1718 = vmatprep.subr.mxu0 0.0
    %1719 = vmatpush1.msra.mxu0 0.0
    %1720 = vmatprep.subr.mxu0 0.0
    %1721 = vmatpush1.msra.mxu0 0.0
    %1722 = vmatprep.subr.mxu0 0.0
    %1723 = vmatpush1.msra.mxu0 0.0
    %1724 = vmatprep.subr.mxu0 0.0
    %1725 = vmatpush1.msra.mxu0 0.0
    %1726 = vmatprep.subr.mxu0 0.0
    %1727 = vmatpush1.msra.mxu0 0.0
    %1728 = vmatprep.subr.mxu0 0.0
    %1729 = vmatpush1.msra.mxu0 0.0
    %1730 = vmatprep.subr.mxu0 0.0
    %1731 = vmatpush1.msra.mxu0 0.0
    %1732 = vmatprep.mubr.f32.mxu0 0.0
    %1733 = vmatmul.mubr.f32.gmra.mrb[0].mxu0 %v1663
    %v1734 = vpop.f32.mrb[0].mxu0
    %v1735 = vadd.f32 0.0, %v1734
    %v1736 = vpop.f32.mrb[0].mxu0
    %1737 = vmatprep.mubr.f32.mxu0 0.0
    %1738 = vmatmul.mubr.f32.gmra.mrb[0].mxu0 %v1666
    %v1739 = vpop.f32.mrb[0].mxu0
    %v1740 = vadd.f32 0.0, %v1739
    %v1741 = vpop.f32.mrb[0].mxu0
    %1742 = vdwg.mxu0
    %v1743 = vld [vmem:[%s1] sm:$0xff]
    %v1744 = vld [vmem:[%s1 + $0x8] sm:$0xff]
    %v1745 = vld [vmem:[%s1 + $0x10] sm:$0xff]
    %v1746 = vld [vmem:[%s1 + $0x18] sm:$0xff]
    %v1747 = vld [vmem:[%s1 + $0x20] sm:$0xff]
    %v1748 = vld [vmem:[%s1 + $0x28] sm:$0xff]
    %v1749 = vld [vmem:[%s1 + $0x30] sm:$0xff]
    %v1750 = vld [vmem:[%s1 + $0x38] sm:$0xff]
    %1755 = vrot.lane.b32.xlu0 %v1658, 96
    %v1756 = vpop.permute.xlu0 %1755
    %1757 = vrot.lane.b32.xlu0 %v1659, 96
    %v1758 = vpop.permute.xlu0 %1757
    %1759 = vrot.lane.b32.xlu0 %v1660, 96
    %v1760 = vpop.permute.xlu0 %1759
    %1761 = vrot.lane.b32.xlu0 %v1661, 96
    %v1762 = vpop.permute.xlu0 %1761
    %v1768 = vsel %vm50, %v1743, 0
    %v1771 = vsel %vm50, %v1744, 0
    %v1774 = vsel %vm50, %v1745, 0
    %v1777 = vsel %vm50, %v1746, 0
    %v1780 = vsel %vm50, %v1747, 0
    %v1783 = vsel %vm50, %v1748, 0
    %v1786 = vsel %vm50, %v1749, 0
    %v1789 = vsel %vm50, %v1750, 0
    %1791 = vmatprep.subr.mxu0 0.0
    %1792 = vmatpush1.msra.mxu0 %v1756
    %1793 = vmatprep.subr.mxu0 0.0
    %1794 = vmatpush1.msra.mxu0 %v1758
    %1795 = vmatprep.subr.mxu0 0.0
    %1796 = vmatpush1.msra.mxu0 %v1760
    %1797 = vmatprep.subr.mxu0 0.0
    %1798 = vmatpush1.msra.mxu0 %v1762
    %1799 = vmatprep.subr.mxu0 0.0
    %1800 = vmatpush1.msra.mxu0 0.0
    %1801 = vmatprep.subr.mxu0 0.0
    %1802 = vmatpush1.msra.mxu0 0.0
    %1803 = vmatprep.subr.mxu0 0.0
    %1804 = vmatpush1.msra.mxu0 0.0
    %1805 = vmatprep.subr.mxu0 0.0
    %1806 = vmatpush1.msra.mxu0 0.0
    %1807 = vmatprep.subr.mxu0 0.0
    %1808 = vmatpush1.msra.mxu0 0.0
    %1809 = vmatprep.subr.mxu0 0.0
    %1810 = vmatpush1.msra.mxu0 0.0
    %1811 = vmatprep.subr.mxu0 0.0
    %1812 = vmatpush1.msra.mxu0 0.0
    %1813 = vmatprep.subr.mxu0 0.0
    %1814 = vmatpush1.msra.mxu0 0.0
    %1815 = vmatprep.subr.mxu0 0.0
    %1816 = vmatpush1.msra.mxu0 0.0
    %1817 = vmatprep.subr.mxu0 0.0
    %1818 = vmatpush1.msra.mxu0 0.0
    %1819 = vmatprep.subr.mxu0 0.0
    %1820 = vmatpush1.msra.mxu0 0.0
    %1821 = vmatprep.subr.mxu0 0.0
    %1822 = vmatpush1.msra.mxu0 0.0
    %1823 = vmatprep.subr.mxu0 0.0
    %1824 = vmatpush1.msra.mxu0 0.0
    %1825 = vmatprep.subr.mxu0 0.0
    %1826 = vmatpush1.msra.mxu0 0.0
    %1827 = vmatprep.subr.mxu0 0.0
    %1828 = vmatpush1.msra.mxu0 0.0
    %1829 = vmatprep.subr.mxu0 0.0
    %1830 = vmatpush1.msra.mxu0 0.0
    %1831 = vmatprep.subr.mxu0 0.0
    %1832 = vmatpush1.msra.mxu0 0.0
    %1833 = vmatprep.subr.mxu0 0.0
    %1834 = vmatpush1.msra.mxu0 0.0
    %1835 = vmatprep.subr.mxu0 0.0
    %1836 = vmatpush1.msra.mxu0 0.0
    %1837 = vmatprep.subr.mxu0 0.0
    %1838 = vmatpush1.msra.mxu0 0.0
    %1839 = vmatprep.subr.mxu0 0.0
    %1840 = vmatpush1.msra.mxu0 0.0
    %1841 = vmatprep.subr.mxu0 0.0
    %1842 = vmatpush1.msra.mxu0 0.0
    %1843 = vmatprep.subr.mxu0 0.0
    %1844 = vmatpush1.msra.mxu0 0.0
    %1845 = vmatprep.subr.mxu0 0.0
    %1846 = vmatpush1.msra.mxu0 0.0
    %1847 = vmatprep.subr.mxu0 0.0
    %1848 = vmatpush1.msra.mxu0 0.0
    %1849 = vmatprep.subr.mxu0 0.0
    %1850 = vmatpush1.msra.mxu0 0.0
    %1851 = vmatprep.subr.mxu0 0.0
    %1852 = vmatpush1.msra.mxu0 0.0
    %1853 = vmatprep.subr.mxu0 0.0
    %1854 = vmatpush1.msra.mxu0 0.0
    %1855 = vmatprep.mubr.f32.mxu0 0.0
    %1856 = vmatmul.mubr.f32.gmra.mrb[0].mxu0 %v1768
    %v1857 = vpop.f32.mrb[0].mxu0
    %v1858 = vadd.f32 0.0, %v1857
    %v1859 = vpop.f32.mrb[0].mxu0
    %1860 = vmatprep.mubr.f32.mxu0 0.0
    %1861 = vmatmul.mubr.f32.gmra.mrb[0].mxu0 %v1771
    %v1862 = vpop.f32.mrb[0].mxu0
    %v1863 = vadd.f32 0.0, %v1862
    %v1864 = vpop.f32.mrb[0].mxu0
    %1865 = vmatprep.mubr.f32.mxu0 0.0
    %1866 = vmatmul.mubr.f32.gmra.mrb[0].mxu0 %v1774
    %v1867 = vpop.f32.mrb[0].mxu0
    %v1868 = vadd.f32 0.0, %v1867
    %v1869 = vpop.f32.mrb[0].mxu0
    %1870 = vmatprep.mubr.f32.mxu0 0.0
    %1871 = vmatmul.mubr.f32.gmra.mrb[0].mxu0 %v1777
    %v1872 = vpop.f32.mrb[0].mxu0
    %v1873 = vadd.f32 0.0, %v1872
    %v1874 = vpop.f32.mrb[0].mxu0
    %1875 = vmatprep.mubr.f32.mxu0 0.0
    %1876 = vmatmul.mubr.f32.gmra.mrb[0].mxu0 %v1780
    %v1877 = vpop.f32.mrb[0].mxu0
    %v1878 = vadd.f32 0.0, %v1877
    %v1879 = vpop.f32.mrb[0].mxu0
    %1880 = vmatprep.mubr.f32.mxu0 0.0
    %1881 = vmatmul.mubr.f32.gmra.mrb[0].mxu0 %v1783
    %v1882 = vpop.f32.mrb[0].mxu0
    %v1883 = vadd.f32 0.0, %v1882
    %v1884 = vpop.f32.mrb[0].mxu0
    %1885 = vmatprep.mubr.f32.mxu0 0.0
    %1886 = vmatmul.mubr.f32.gmra.mrb[0].mxu0 %v1786
    %v1887 = vpop.f32.mrb[0].mxu0
    %v1888 = vadd.f32 0.0, %v1887
    %v1889 = vpop.f32.mrb[0].mxu0
    %1890 = vmatprep.mubr.f32.mxu0 0.0
    %1891 = vmatmul.mubr.f32.gmra.mrb[0].mxu0 %v1789
    %v1892 = vpop.f32.mrb[0].mxu0
    %v1893 = vadd.f32 0.0, %v1892
    %v1894 = vpop.f32.mrb[0].mxu0
    %1895 = vdwg.mxu0
    %v1896 = vld [vmem:[%s3] sm:$0x1]
    %v1897 = vld [vmem:[%s3 + $0x1] sm:$0x1]
    %v1900 = vlaneseq
    %v1901 = vshrl.u32 %v1900, 7
    %v1902 = vsub.s32 0, %v1901
    %v1903 = vrot.slane %v1896, %v1902
    %v1904 = vlaneseq
    %v1905 = vshrl.u32 %v1904, 7
    %v1906 = vsub.s32 0, %v1905
    %v1907 = vrot.slane %v1897, %v1906
    %v1911 = vsel %vm137, %v1735, 0
    %v1914 = vsel %vm137, %v1858, 0
    %v1917 = vsel %vm137, %v1863, 0
    %1919 = vmatprep.subr.mxu0 0.0
    %1920 = vmatpush1.xpose.msra.mxu0 %v1914
    %1921 = vmatprep.subr.mxu0 0.0
    %1922 = vmatpush1.xpose.msra.mxu0 %v1917
    %1923 = vmatprep.subr.mxu0 0.0
    %1924 = vmatpush1.xpose.msra.mxu0 0.0
    %1925 = vmatprep.subr.mxu0 0.0
    %1926 = vmatpush1.xpose.msra.mxu0 0.0
    %1927 = vmatprep.subr.mxu0 0.0
    %1928 = vmatpush1.xpose.msra.mxu0 0.0
    %1929 = vmatprep.subr.mxu0 0.0
    %1930 = vmatpush1.xpose.msra.mxu0 0.0
    %1931 = vmatprep.subr.mxu0 0.0
    %1932 = vmatpush1.xpose.msra.mxu0 0.0
    %1933 = vmatprep.subr.mxu0 0.0
    %1934 = vmatpush1.xpose.msra.mxu0 0.0
    %1935 = vmatprep.subr.mxu0 0.0
    %1936 = vmatpush1.xpose.msra.mxu0 0.0
    %1937 = vmatprep.subr.mxu0 0.0
    %1938 = vmatpush1.xpose.msra.mxu0 0.0
    %1939 = vmatprep.subr.mxu0 0.0
    %1940 = vmatpush1.xpose.msra.mxu0 0.0
    %1941 = vmatprep.subr.mxu0 0.0
    %1942 = vmatpush1.xpose.msra.mxu0 0.0
    %1943 = vmatprep.subr.mxu0 0.0
    %1944 = vmatpush1.xpose.msra.mxu0 0.0
    %1945 = vmatprep.subr.mxu0 0.0
    %1946 = vmatpush1.xpose.msra.mxu0 0.0
    %1947 = vmatprep.subr.mxu0 0.0
    %1948 = vmatpush1.xpose.msra.mxu0 0.0
    %1949 = vmatprep.subr.mxu0 0.0
    %1950 = vmatpush1.xpose.msra.mxu0 0.0
    %1951 = vmatprep.subr.mxu0 0.0
    %1952 = vmatpush1.xpose.msra.mxu0 0.0
    %1953 = vmatprep.subr.mxu0 0.0
    %1954 = vmatpush1.xpose.msra.mxu0 0.0
    %1955 = vmatprep.subr.mxu0 0.0
    %1956 = vmatpush1.xpose.msra.mxu0 0.0
    %1957 = vmatprep.subr.mxu0 0.0
    %1958 = vmatpush1.xpose.msra.mxu0 0.0
    %1959 = vmatprep.subr.mxu0 0.0
    %1960 = vmatpush1.xpose.msra.mxu0 0.0
    %1961 = vmatprep.subr.mxu0 0.0
    %1962 = vmatpush1.xpose.msra.mxu0 0.0
    %1963 = vmatprep.subr.mxu0 0.0
    %1964 = vmatpush1.xpose.msra.mxu0 0.0
    %1965 = vmatprep.subr.mxu0 0.0
    %1966 = vmatpush1.xpose.msra.mxu0 0.0
    %1967 = vmatprep.subr.mxu0 0.0
    %1968 = vmatpush1.xpose.msra.mxu0 0.0
    %1969 = vmatprep.subr.mxu0 0.0
    %1970 = vmatpush1.xpose.msra.mxu0 0.0
    %1971 = vmatprep.subr.mxu0 0.0
    %1972 = vmatpush1.xpose.msra.mxu0 0.0
    %1973 = vmatprep.subr.mxu0 0.0
    %1974 = vmatpush1.xpose.msra.mxu0 0.0
    %1975 = vmatprep.subr.mxu0 0.0
    %1976 = vmatpush1.xpose.msra.mxu0 0.0
    %1977 = vmatprep.subr.mxu0 0.0
    %1978 = vmatpush1.xpose.msra.mxu0 0.0
    %1979 = vmatprep.subr.mxu0 0.0
    %1980 = vmatpush1.xpose.msra.mxu0 0.0
    %1981 = vmatprep.subr.mxu0 0.0
    %1982 = vmatpush1.xpose.msra.mxu0 0.0
    %1983 = vmatprep.mubr.f32.mxu0 0.0
    %1984 = vmatmul.mubr.f32.gmra.mrb[0].mxu0 %v1911
    %v1985 = vpop.f32.mrb[0].mxu0
    %v1986 = vadd.f32 %v1903, %v1985
    %v1987 = vpop.f32.mrb[0].mxu0
    %1988 = vdwg.mxu0
    %v1990 = vsel %vm137, %v1740, 0
    %v1993 = vsel %vm137, %v1868, 0
    %v1996 = vsel %vm137, %v1873, 0
    %1998 = vmatprep.subr.mxu0 0.0
    %1999 = vmatpush1.xpose.msra.mxu0 %v1993
    %2000 = vmatprep.subr.mxu0 0.0
    %2001 = vmatpush1.xpose.msra.mxu0 %v1996
    %2002 = vmatprep.subr.mxu0 0.0
    %2003 = vmatpush1.xpose.msra.mxu0 0.0
    %2004 = vmatprep.subr.mxu0 0.0
    %2005 = vmatpush1.xpose.msra.mxu0 0.0
    %2006 = vmatprep.subr.mxu0 0.0
    %2007 = vmatpush1.xpose.msra.mxu0 0.0
    %2008 = vmatprep.subr.mxu0 0.0
    %2009 = vmatpush1.xpose.msra.mxu0 0.0
    %2010 = vmatprep.subr.mxu0 0.0
    %2011 = vmatpush1.xpose.msra.mxu0 0.0
    %2012 = vmatprep.subr.mxu0 0.0
    %2013 = vmatpush1.xpose.msra.mxu0 0.0
    %2014 = vmatprep.subr.mxu0 0.0
    %2015 = vmatpush1.xpose.msra.mxu0 0.0
    %2016 = vmatprep.subr.mxu0 0.0
    %2017 = vmatpush1.xpose.msra.mxu0 0.0
    %2018 = vmatprep.subr.mxu0 0.0
    %2019 = vmatpush1.xpose.msra.mxu0 0.0
    %2020 = vmatprep.subr.mxu0 0.0
    %2021 = vmatpush1.xpose.msra.mxu0 0.0
    %2022 = vmatprep.subr.mxu0 0.0
    %2023 = vmatpush1.xpose.msra.mxu0 0.0
    %2024 = vmatprep.subr.mxu0 0.0
    %2025 = vmatpush1.xpose.msra.mxu0 0.0
    %2026 = vmatprep.subr.mxu0 0.0
    %2027 = vmatpush1.xpose.msra.mxu0 0.0
    %2028 = vmatprep.subr.mxu0 0.0
    %2029 = vmatpush1.xpose.msra.mxu0 0.0
    %2030 = vmatprep.subr.mxu0 0.0
    %2031 = vmatpush1.xpose.msra.mxu0 0.0
    %2032 = vmatprep.subr.mxu0 0.0
    %2033 = vmatpush1.xpose.msra.mxu0 0.0
    %2034 = vmatprep.subr.mxu0 0.0
    %2035 = vmatpush1.xpose.msra.mxu0 0.0
    %2036 = vmatprep.subr.mxu0 0.0
    %2037 = vmatpush1.xpose.msra.mxu0 0.0
    %2038 = vmatprep.subr.mxu0 0.0
    %2039 = vmatpush1.xpose.msra.mxu0 0.0
    %2040 = vmatprep.subr.mxu0 0.0
    %2041 = vmatpush1.xpose.msra.mxu0 0.0
    %2042 = vmatprep.subr.mxu0 0.0
    %2043 = vmatpush1.xpose.msra.mxu0 0.0
    %2044 = vmatprep.subr.mxu0 0.0
    %2045 = vmatpush1.xpose.msra.mxu0 0.0
    %2046 = vmatprep.subr.mxu0 0.0
    %2047 = vmatpush1.xpose.msra.mxu0 0.0
    %2048 = vmatprep.subr.mxu0 0.0
    %2049 = vmatpush1.xpose.msra.mxu0 0.0
    %2050 = vmatprep.subr.mxu0 0.0
    %2051 = vmatpush1.xpose.msra.mxu0 0.0
    %2052 = vmatprep.subr.mxu0 0.0
    %2053 = vmatpush1.xpose.msra.mxu0 0.0
    %2054 = vmatprep.subr.mxu0 0.0
    %2055 = vmatpush1.xpose.msra.mxu0 0.0
    %2056 = vmatprep.subr.mxu0 0.0
    %2057 = vmatpush1.xpose.msra.mxu0 0.0
    %2058 = vmatprep.subr.mxu0 0.0
    %2059 = vmatpush1.xpose.msra.mxu0 0.0
    %2060 = vmatprep.subr.mxu0 0.0
    %2061 = vmatpush1.xpose.msra.mxu0 0.0
    %2062 = vmatprep.mubr.f32.mxu0 0.0
    %2063 = vmatmul.mubr.f32.gmra.mrb[0].mxu0 %v1990
    %v2064 = vpop.f32.mrb[0].mxu0
    %v2065 = vadd.f32 %v1907, %v2064
    %v2066 = vpop.f32.mrb[0].mxu0
    %2067 = vdwg.mxu0
    %v2068 = vsel %vm1503, %v1986, -inf
    %2069 = vmax.xlane.f32.xlu0 %v2068
    %v2070 = vpop.xlane.xlu0 %2069
    %v2071 = vsel %vm1503, %v2065, -inf
    %2072 = vmax.xlane.f32.xlu0 %v2071
    %v2073 = vpop.xlane.xlu0 %2072
    %v2074 = vsub.f32 %v1986, %v2070
    %v2075 = vsub.f32 %v2065, %v2073
    %v2076 = vmul.f32 %v2074, 1.442695
    %v2077 = vpow.pop %v2076
    %v2078 = vmul.f32 %v2075, 1.442695
    %v2079 = vpow.pop %v2078
    %v2080 = vsel %vm1503, %v2077, 0.0
    %2081 = vadd.xlane.f32.xlu0 %v2080
    %v2082 = vpop.xlane.xlu0 %2081
    %v2083 = vsel %vm1503, %v2079, 0.0
    %2084 = vadd.xlane.f32.xlu0 %v2083
    %v2085 = vpop.xlane.xlu0 %2084
    %v2086 = vrcp.pop %v2082
    %v2087 = vrcp.pop %v2085
    %v2088 = vmul.f32 %v2082, %v2086
    %v2089 = vmul.f32 %v2085, %v2087
    %v2090 = vsub.f32 2.0, %v2088
    %v2091 = vsub.f32 2.0, %v2089
    %v2092 = vmul.f32 %v2086, %v2090
    %v2093 = vmul.f32 %v2087, %v2091
    %v2094 = vmul.f32 %v2077, %v2092
    %v2095 = vmul.f32 %v2079, %v2093
    %2098 = vrot.lane.b32.xlu0 %v1878, 96
    %v2099 = vpop.permute.xlu0 %2098
    %2100 = vrot.lane.b32.xlu0 %v1883, 96
    %v2101 = vpop.permute.xlu0 %2100
    %v2105 = vsel %vm1503, %v2094, 0
    %2107 = vmatprep.subr.mxu0 0.0
    %2108 = vmatpush1.msra.mxu0 %v2099
    %2109 = vmatprep.subr.mxu0 0.0
    %2110 = vmatpush1.msra.mxu0 %v2101
    %2111 = vmatprep.subr.mxu0 0.0
    %2112 = vmatpush1.msra.mxu0 0.0
    %2113 = vmatprep.subr.mxu0 0.0
    %2114 = vmatpush1.msra.mxu0 0.0
    %2115 = vmatprep.subr.mxu0 0.0
    %2116 = vmatpush1.msra.mxu0 0.0
    %2117 = vmatprep.subr.mxu0 0.0
    %2118 = vmatpush1.msra.mxu0 0.0
    %2119 = vmatprep.subr.mxu0 0.0
    %2120 = vmatpush1.msra.mxu0 0.0
    %2121 = vmatprep.subr.mxu0 0.0
    %2122 = vmatpush1.msra.mxu0 0.0
    %2123 = vmatprep.subr.mxu0 0.0
    %2124 = vmatpush1.msra.mxu0 0.0
    %2125 = vmatprep.subr.mxu0 0.0
    %2126 = vmatpush1.msra.mxu0 0.0
    %2127 = vmatprep.subr.mxu0 0.0
    %2128 = vmatpush1.msra.mxu0 0.0
    %2129 = vmatprep.subr.mxu0 0.0
    %2130 = vmatpush1.msra.mxu0 0.0
    %2131 = vmatprep.subr.mxu0 0.0
    %2132 = vmatpush1.msra.mxu0 0.0
    %2133 = vmatprep.subr.mxu0 0.0
    %2134 = vmatpush1.msra.mxu0 0.0
    %2135 = vmatprep.subr.mxu0 0.0
    %2136 = vmatpush1.msra.mxu0 0.0
    %2137 = vmatprep.subr.mxu0 0.0
    %2138 = vmatpush1.msra.mxu0 0.0
    %2139 = vmatprep.subr.mxu0 0.0
    %2140 = vmatpush1.msra.mxu0 0.0
    %2141 = vmatprep.subr.mxu0 0.0
    %2142 = vmatpush1.msra.mxu0 0.0
    %2143 = vmatprep.subr.mxu0 0.0
    %2144 = vmatpush1.msra.mxu0 0.0
    %2145 = vmatprep.subr.mxu0 0.0
    %2146 = vmatpush1.msra.mxu0 0.0
    %2147 = vmatprep.subr.mxu0 0.0
    %2148 = vmatpush1.msra.mxu0 0.0
    %2149 = vmatprep.subr.mxu0 0.0
    %2150 = vmatpush1.msra.mxu0 0.0
    %2151 = vmatprep.subr.mxu0 0.0
    %2152 = vmatpush1.msra.mxu0 0.0
    %2153 = vmatprep.subr.mxu0 0.0
    %2154 = vmatpush1.msra.mxu0 0.0
    %2155 = vmatprep.subr.mxu0 0.0
    %2156 = vmatpush1.msra.mxu0 0.0
    %2157 = vmatprep.subr.mxu0 0.0
    %2158 = vmatpush1.msra.mxu0 0.0
    %2159 = vmatprep.subr.mxu0 0.0
    %2160 = vmatpush1.msra.mxu0 0.0
    %2161 = vmatprep.subr.mxu0 0.0
    %2162 = vmatpush1.msra.mxu0 0.0
    %2163 = vmatprep.subr.mxu0 0.0
    %2164 = vmatpush1.msra.mxu0 0.0
    %2165 = vmatprep.subr.mxu0 0.0
    %2166 = vmatpush1.msra.mxu0 0.0
    %2167 = vmatprep.subr.mxu0 0.0
    %2168 = vmatpush1.msra.mxu0 0.0
    %2169 = vmatprep.subr.mxu0 0.0
    %2170 = vmatpush1.msra.mxu0 0.0
    %2171 = vmatprep.mubr.f32.mxu0 0.0
    %2172 = vmatmul.mubr.f32.gmra.mrb[0].mxu0 %v2105
    %v2173 = vpop.f32.mrb[0].mxu0
    %v2174 = vadd.f32 0.0, %v2173
    %v2175 = vpop.f32.mrb[0].mxu0
    %2176 = vdwg.mxu0
    %2179 = vrot.lane.b32.xlu0 %v1888, 96
    %v2180 = vpop.permute.xlu0 %2179
    %2181 = vrot.lane.b32.xlu0 %v1893, 96
    %v2182 = vpop.permute.xlu0 %2181
    %v2186 = vsel %vm1503, %v2095, 0
    %2188 = vmatprep.subr.mxu0 0.0
    %2189 = vmatpush1.msra.mxu0 %v2180
    %2190 = vmatprep.subr.mxu0 0.0
    %2191 = vmatpush1.msra.mxu0 %v2182
    %2192 = vmatprep.subr.mxu0 0.0
    %2193 = vmatpush1.msra.mxu0 0.0
    %2194 = vmatprep.subr.mxu0 0.0
    %2195 = vmatpush1.msra.mxu0 0.0
    %2196 = vmatprep.subr.mxu0 0.0
    %2197 = vmatpush1.msra.mxu0 0.0
    %2198 = vmatprep.subr.mxu0 0.0
    %2199 = vmatpush1.msra.mxu0 0.0
    %2200 = vmatprep.subr.mxu0 0.0
    %2201 = vmatpush1.msra.mxu0 0.0
    %2202 = vmatprep.subr.mxu0 0.0
    %2203 = vmatpush1.msra.mxu0 0.0
    %2204 = vmatprep.subr.mxu0 0.0
    %2205 = vmatpush1.msra.mxu0 0.0
    %2206 = vmatprep.subr.mxu0 0.0
    %2207 = vmatpush1.msra.mxu0 0.0
    %2208 = vmatprep.subr.mxu0 0.0
    %2209 = vmatpush1.msra.mxu0 0.0
    %2210 = vmatprep.subr.mxu0 0.0
    %2211 = vmatpush1.msra.mxu0 0.0
    %2212 = vmatprep.subr.mxu0 0.0
    %2213 = vmatpush1.msra.mxu0 0.0
    %2214 = vmatprep.subr.mxu0 0.0
    %2215 = vmatpush1.msra.mxu0 0.0
    %2216 = vmatprep.subr.mxu0 0.0
    %2217 = vmatpush1.msra.mxu0 0.0
    %2218 = vmatprep.subr.mxu0 0.0
    %2219 = vmatpush1.msra.mxu0 0.0
    %2220 = vmatprep.subr.mxu0 0.0
    %2221 = vmatpush1.msra.mxu0 0.0
    %2222 = vmatprep.subr.mxu0 0.0
    %2223 = vmatpush1.msra.mxu0 0.0
    %2224 = vmatprep.subr.mxu0 0.0
    %2225 = vmatpush1.msra.mxu0 0.0
    %2226 = vmatprep.subr.mxu0 0.0
    %2227 = vmatpush1.msra.mxu0 0.0
    %2228 = vmatprep.subr.mxu0 0.0
    %2229 = vmatpush1.msra.mxu0 0.0
    %2230 = vmatprep.subr.mxu0 0.0
    %2231 = vmatpush1.msra.mxu0 0.0
    %2232 = vmatprep.subr.mxu0 0.0
    %2233 = vmatpush1.msra.mxu0 0.0
    %2234 = vmatprep.subr.mxu0 0.0
    %2235 = vmatpush1.msra.mxu0 0.0
    %2236 = vmatprep.subr.mxu0 0.0
    %2237 = vmatpush1.msra.mxu0 0.0
    %2238 = vmatprep.subr.mxu0 0.0
    %2239 = vmatpush1.msra.mxu0 0.0
    %2240 = vmatprep.subr.mxu0 0.0
    %2241 = vmatpush1.msra.mxu0 0.0
    %2242 = vmatprep.subr.mxu0 0.0
    %2243 = vmatpush1.msra.mxu0 0.0
    %2244 = vmatprep.subr.mxu0 0.0
    %2245 = vmatpush1.msra.mxu0 0.0
    %2246 = vmatprep.subr.mxu0 0.0
    %2247 = vmatpush1.msra.mxu0 0.0
    %2248 = vmatprep.subr.mxu0 0.0
    %2249 = vmatpush1.msra.mxu0 0.0
    %2250 = vmatprep.subr.mxu0 0.0
    %2251 = vmatpush1.msra.mxu0 0.0
    %2252 = vmatprep.mubr.f32.mxu0 0.0
    %2253 = vmatmul.mubr.f32.gmra.mrb[0].mxu0 %v2186
    %v2254 = vpop.f32.mrb[0].mxu0
    %v2255 = vadd.f32 0.0, %v2254
    %v2256 = vpop.f32.mrb[0].mxu0
    %2257 = vdwg.mxu0
    %2258 = vrot.lane.b32.xlu0 %v1735, 120
    %v2259 = vpop.permute.xlu0 %2258
    %2260 = vrot.lane.b32.xlu0 %v1858, 120
    %v2261 = vpop.permute.xlu0 %2260
    %2262 = vrot.lane.b32.xlu0 %v1863, 120
    %v2263 = vpop.permute.xlu0 %2262
    %v2264 = vsel %vm137, %v2259, 0
    %v2266 = vsel %vm137, %v2261, 0
    %v2268 = vsel %vm137, %v2263, 0
    %2270 = vmatprep.subr.mxu0 0.0
    %2271 = vmatpush1.xpose.msra.mxu0 %v2266
    %2272 = vmatprep.subr.mxu0 0.0
    %2273 = vmatpush1.xpose.msra.mxu0 %v2268
    %2274 = vmatprep.subr.mxu0 0.0
    %2275 = vmatpush1.xpose.msra.mxu0 0.0
    %2276 = vmatprep.subr.mxu0 0.0
    %2277 = vmatpush1.xpose.msra.mxu0 0.0
    %2278 = vmatprep.subr.mxu0 0.0
    %2279 = vmatpush1.xpose.msra.mxu0 0.0
    %2280 = vmatprep.subr.mxu0 0.0
    %2281 = vmatpush1.xpose.msra.mxu0 0.0
    %2282 = vmatprep.subr.mxu0 0.0
    %2283 = vmatpush1.xpose.msra.mxu0 0.0
    %2284 = vmatprep.subr.mxu0 0.0
    %2285 = vmatpush1.xpose.msra.mxu0 0.0
    %2286 = vmatprep.subr.mxu0 0.0
    %2287 = vmatpush1.xpose.msra.mxu0 0.0
    %2288 = vmatprep.subr.mxu0 0.0
    %2289 = vmatpush1.xpose.msra.mxu0 0.0
    %2290 = vmatprep.subr.mxu0 0.0
    %2291 = vmatpush1.xpose.msra.mxu0 0.0
    %2292 = vmatprep.subr.mxu0 0.0
    %2293 = vmatpush1.xpose.msra.mxu0 0.0
    %2294 = vmatprep.subr.mxu0 0.0
    %2295 = vmatpush1.xpose.msra.mxu0 0.0
    %2296 = vmatprep.subr.mxu0 0.0
    %2297 = vmatpush1.xpose.msra.mxu0 0.0
    %2298 = vmatprep.subr.mxu0 0.0
    %2299 = vmatpush1.xpose.msra.mxu0 0.0
    %2300 = vmatprep.subr.mxu0 0.0
    %2301 = vmatpush1.xpose.msra.mxu0 0.0
    %2302 = vmatprep.subr.mxu0 0.0
    %2303 = vmatpush1.xpose.msra.mxu0 0.0
    %2304 = vmatprep.subr.mxu0 0.0
    %2305 = vmatpush1.xpose.msra.mxu0 0.0
    %2306 = vmatprep.subr.mxu0 0.0
    %2307 = vmatpush1.xpose.msra.mxu0 0.0
    %2308 = vmatprep.subr.mxu0 0.0
    %2309 = vmatpush1.xpose.msra.mxu0 0.0
    %2310 = vmatprep.subr.mxu0 0.0
    %2311 = vmatpush1.xpose.msra.mxu0 0.0
    %2312 = vmatprep.subr.mxu0 0.0
    %2313 = vmatpush1.xpose.msra.mxu0 0.0
    %2314 = vmatprep.subr.mxu0 0.0
    %2315 = vmatpush1.xpose.msra.mxu0 0.0
    %2316 = vmatprep.subr.mxu0 0.0
    %2317 = vmatpush1.xpose.msra.mxu0 0.0
    %2318 = vmatprep.subr.mxu0 0.0
    %2319 = vmatpush1.xpose.msra.mxu0 0.0
    %2320 = vmatprep.subr.mxu0 0.0
    %2321 = vmatpush1.xpose.msra.mxu0 0.0
    %2322 = vmatprep.subr.mxu0 0.0
    %2323 = vmatpush1.xpose.msra.mxu0 0.0
    %2324 = vmatprep.subr.mxu0 0.0
    %2325 = vmatpush1.xpose.msra.mxu0 0.0
    %2326 = vmatprep.subr.mxu0 0.0
    %2327 = vmatpush1.xpose.msra.mxu0 0.0
    %2328 = vmatprep.subr.mxu0 0.0
    %2329 = vmatpush1.xpose.msra.mxu0 0.0
    %2330 = vmatprep.subr.mxu0 0.0
    %2331 = vmatpush1.xpose.msra.mxu0 0.0
    %2332 = vmatprep.subr.mxu0 0.0
    %2333 = vmatpush1.xpose.msra.mxu0 0.0
    %2334 = vmatprep.mubr.f32.mxu0 0.0
    %2335 = vmatmul.mubr.f32.gmra.mrb[0].mxu0 %v2264
    %v2336 = vpop.f32.mrb[0].mxu0
    %v2337 = vadd.f32 %v1903, %v2336
    %v2338 = vpop.f32.mrb[0].mxu0
    %2339 = vdwg.mxu0
    %2340 = vrot.lane.b32.xlu0 %v1740, 120
    %v2341 = vpop.permute.xlu0 %2340
    %2342 = vrot.lane.b32.xlu0 %v1868, 120
    %v2343 = vpop.permute.xlu0 %2342
    %2344 = vrot.lane.b32.xlu0 %v1873, 120
    %v2345 = vpop.permute.xlu0 %2344
    %v2346 = vsel %vm137, %v2341, 0
    %v2348 = vsel %vm137, %v2343, 0
    %v2350 = vsel %vm137, %v2345, 0
    %2352 = vmatprep.subr.mxu0 0.0
    %2353 = vmatpush1.xpose.msra.mxu0 %v2348
    %2354 = vmatprep.subr.mxu0 0.0
    %2355 = vmatpush1.xpose.msra.mxu0 %v2350
    %2356 = vmatprep.subr.mxu0 0.0
    %2357 = vmatpush1.xpose.msra.mxu0 0.0
    %2358 = vmatprep.subr.mxu0 0.0
    %2359 = vmatpush1.xpose.msra.mxu0 0.0
    %2360 = vmatprep.subr.mxu0 0.0
    %2361 = vmatpush1.xpose.msra.mxu0 0.0
    %2362 = vmatprep.subr.mxu0 0.0
    %2363 = vmatpush1.xpose.msra.mxu0 0.0
    %2364 = vmatprep.subr.mxu0 0.0
    %2365 = vmatpush1.xpose.msra.mxu0 0.0
    %2366 = vmatprep.subr.mxu0 0.0
    %2367 = vmatpush1.xpose.msra.mxu0 0.0
    %2368 = vmatprep.subr.mxu0 0.0
    %2369 = vmatpush1.xpose.msra.mxu0 0.0
    %2370 = vmatprep.subr.mxu0 0.0
    %2371 = vmatpush1.xpose.msra.mxu0 0.0
    %2372 = vmatprep.subr.mxu0 0.0
    %2373 = vmatpush1.xpose.msra.mxu0 0.0
    %2374 = vmatprep.subr.mxu0 0.0
    %2375 = vmatpush1.xpose.msra.mxu0 0.0
    %2376 = vmatprep.subr.mxu0 0.0
    %2377 = vmatpush1.xpose.msra.mxu0 0.0
    %2378 = vmatprep.subr.mxu0 0.0
    %2379 = vmatpush1.xpose.msra.mxu0 0.0
    %2380 = vmatprep.subr.mxu0 0.0
    %2381 = vmatpush1.xpose.msra.mxu0 0.0
    %2382 = vmatprep.subr.mxu0 0.0
    %2383 = vmatpush1.xpose.msra.mxu0 0.0
    %2384 = vmatprep.subr.mxu0 0.0
    %2385 = vmatpush1.xpose.msra.mxu0 0.0
    %2386 = vmatprep.subr.mxu0 0.0
    %2387 = vmatpush1.xpose.msra.mxu0 0.0
    %2388 = vmatprep.subr.mxu0 0.0
    %2389 = vmatpush1.xpose.msra.mxu0 0.0
    %2390 = vmatprep.subr.mxu0 0.0
    %2391 = vmatpush1.xpose.msra.mxu0 0.0
    %2392 = vmatprep.subr.mxu0 0.0
    %2393 = vmatpush1.xpose.msra.mxu0 0.0
    %2394 = vmatprep.subr.mxu0 0.0
    %2395 = vmatpush1.xpose.msra.mxu0 0.0
    %2396 = vmatprep.subr.mxu0 0.0
    %2397 = vmatpush1.xpose.msra.mxu0 0.0
    %2398 = vmatprep.subr.mxu0 0.0
    %2399 = vmatpush1.xpose.msra.mxu0 0.0
    %2400 = vmatprep.subr.mxu0 0.0
    %2401 = vmatpush1.xpose.msra.mxu0 0.0
    %2402 = vmatprep.subr.mxu0 0.0
    %2403 = vmatpush1.xpose.msra.mxu0 0.0
    %2404 = vmatprep.subr.mxu0 0.0
    %2405 = vmatpush1.xpose.msra.mxu0 0.0
    %2406 = vmatprep.subr.mxu0 0.0
    %2407 = vmatpush1.xpose.msra.mxu0 0.0
    %2408 = vmatprep.subr.mxu0 0.0
    %2409 = vmatpush1.xpose.msra.mxu0 0.0
    %2410 = vmatprep.subr.mxu0 0.0
    %2411 = vmatpush1.xpose.msra.mxu0 0.0
    %2412 = vmatprep.subr.mxu0 0.0
    %2413 = vmatpush1.xpose.msra.mxu0 0.0
    %2414 = vmatprep.subr.mxu0 0.0
    %2415 = vmatpush1.xpose.msra.mxu0 0.0
    %2416 = vmatprep.mubr.f32.mxu0 0.0
    %2417 = vmatmul.mubr.f32.gmra.mrb[0].mxu0 %v2346
    %v2418 = vpop.f32.mrb[0].mxu0
    %v2419 = vadd.f32 %v1907, %v2418
    %v2420 = vpop.f32.mrb[0].mxu0
    %2421 = vdwg.mxu0
    %v2422 = vsel %vm1503, %v2337, -inf
    %2423 = vmax.xlane.f32.xlu0 %v2422
    %v2424 = vpop.xlane.xlu0 %2423
    %v2425 = vsel %vm1503, %v2419, -inf
    %2426 = vmax.xlane.f32.xlu0 %v2425
    %v2427 = vpop.xlane.xlu0 %2426
    %v2428 = vsub.f32 %v2337, %v2424
    %v2429 = vsub.f32 %v2419, %v2427
    %v2430 = vmul.f32 %v2428, 1.442695
    %v2431 = vpow.pop %v2430
    %v2432 = vmul.f32 %v2429, 1.442695
    %v2433 = vpow.pop %v2432
    %v2434 = vsel %vm1503, %v2431, 0.0
    %2435 = vadd.xlane.f32.xlu0 %v2434
    %v2436 = vpop.xlane.xlu0 %2435
    %v2437 = vsel %vm1503, %v2433, 0.0
    %2438 = vadd.xlane.f32.xlu0 %v2437
    %v2439 = vpop.xlane.xlu0 %2438
    %v2440 = vrcp.pop %v2436
    %v2441 = vrcp.pop %v2439
    %v2442 = vmul.f32 %v2436, %v2440
    %v2443 = vmul.f32 %v2439, %v2441
    %v2444 = vsub.f32 2.0, %v2442
    %v2445 = vsub.f32 2.0, %v2443
    %v2446 = vmul.f32 %v2440, %v2444
    %v2447 = vmul.f32 %v2441, %v2445
    %v2448 = vmul.f32 %v2431, %v2446
    %v2449 = vmul.f32 %v2433, %v2447
    %2450 = vrot.lane.b32.xlu0 %v1878, 88
    %v2451 = vpop.permute.xlu0 %2450
    %2452 = vrot.lane.b32.xlu0 %v1883, 88
    %v2453 = vpop.permute.xlu0 %2452
    %v2457 = vsel %vm1503, %v2448, 0
    %2459 = vmatprep.subr.mxu0 0.0
    %2460 = vmatpush1.msra.mxu0 %v2451
    %2461 = vmatprep.subr.mxu0 0.0
    %2462 = vmatpush1.msra.mxu0 %v2453
    %2463 = vmatprep.subr.mxu0 0.0
    %2464 = vmatpush1.msra.mxu0 0.0
    %2465 = vmatprep.subr.mxu0 0.0
    %2466 = vmatpush1.msra.mxu0 0.0
    %2467 = vmatprep.subr.mxu0 0.0
    %2468 = vmatpush1.msra.mxu0 0.0
    %2469 = vmatprep.subr.mxu0 0.0
    %2470 = vmatpush1.msra.mxu0 0.0
    %2471 = vmatprep.subr.mxu0 0.0
    %2472 = vmatpush1.msra.mxu0 0.0
    %2473 = vmatprep.subr.mxu0 0.0
    %2474 = vmatpush1.msra.mxu0 0.0
    %2475 = vmatprep.subr.mxu0 0.0
    %2476 = vmatpush1.msra.mxu0 0.0
    %2477 = vmatprep.subr.mxu0 0.0
    %2478 = vmatpush1.msra.mxu0 0.0
    %2479 = vmatprep.subr.mxu0 0.0
    %2480 = vmatpush1.msra.mxu0 0.0
    %2481 = vmatprep.subr.mxu0 0.0
    %2482 = vmatpush1.msra.mxu0 0.0
    %2483 = vmatprep.subr.mxu0 0.0
    %2484 = vmatpush1.msra.mxu0 0.0
    %2485 = vmatprep.subr.mxu0 0.0
    %2486 = vmatpush1.msra.mxu0 0.0
    %2487 = vmatprep.subr.mxu0 0.0
    %2488 = vmatpush1.msra.mxu0 0.0
    %2489 = vmatprep.subr.mxu0 0.0
    %2490 = vmatpush1.msra.mxu0 0.0
    %2491 = vmatprep.subr.mxu0 0.0
    %2492 = vmatpush1.msra.mxu0 0.0
    %2493 = vmatprep.subr.mxu0 0.0
    %2494 = vmatpush1.msra.mxu0 0.0
    %2495 = vmatprep.subr.mxu0 0.0
    %2496 = vmatpush1.msra.mxu0 0.0
    %2497 = vmatprep.subr.mxu0 0.0
    %2498 = vmatpush1.msra.mxu0 0.0
    %2499 = vmatprep.subr.mxu0 0.0
    %2500 = vmatpush1.msra.mxu0 0.0
    %2501 = vmatprep.subr.mxu0 0.0
    %2502 = vmatpush1.msra.mxu0 0.0
    %2503 = vmatprep.subr.mxu0 0.0
    %2504 = vmatpush1.msra.mxu0 0.0
    %2505 = vmatprep.subr.mxu0 0.0
    %2506 = vmatpush1.msra.mxu0 0.0
    %2507 = vmatprep.subr.mxu0 0.0
    %2508 = vmatpush1.msra.mxu0 0.0
    %2509 = vmatprep.subr.mxu0 0.0
    %2510 = vmatpush1.msra.mxu0 0.0
    %2511 = vmatprep.subr.mxu0 0.0
    %2512 = vmatpush1.msra.mxu0 0.0
    %2513 = vmatprep.subr.mxu0 0.0
    %2514 = vmatpush1.msra.mxu0 0.0
    %2515 = vmatprep.subr.mxu0 0.0
    %2516 = vmatpush1.msra.mxu0 0.0
    %2517 = vmatprep.subr.mxu0 0.0
    %2518 = vmatpush1.msra.mxu0 0.0
    %2519 = vmatprep.subr.mxu0 0.0
    %2520 = vmatpush1.msra.mxu0 0.0
    %2521 = vmatprep.subr.mxu0 0.0
    %2522 = vmatpush1.msra.mxu0 0.0
    %2523 = vmatprep.mubr.f32.mxu0 0.0
    %2524 = vmatmul.mubr.f32.gmra.mrb[0].mxu0 %v2457
    %v2525 = vpop.f32.mrb[0].mxu0
    %v2526 = vadd.f32 0.0, %v2525
    %v2527 = vpop.f32.mrb[0].mxu0
    %2528 = vdwg.mxu0
    %2529 = vrot.lane.b32.xlu0 %v1888, 88
    %v2530 = vpop.permute.xlu0 %2529
    %2531 = vrot.lane.b32.xlu0 %v1893, 88
    %v2532 = vpop.permute.xlu0 %2531
    %v2536 = vsel %vm1503, %v2449, 0
    %2538 = vmatprep.subr.mxu0 0.0
    %2539 = vmatpush1.msra.mxu0 %v2530
    %2540 = vmatprep.subr.mxu0 0.0
    %2541 = vmatpush1.msra.mxu0 %v2532
    %2542 = vmatprep.subr.mxu0 0.0
    %2543 = vmatpush1.msra.mxu0 0.0
    %2544 = vmatprep.subr.mxu0 0.0
    %2545 = vmatpush1.msra.mxu0 0.0
    %2546 = vmatprep.subr.mxu0 0.0
    %2547 = vmatpush1.msra.mxu0 0.0
    %2548 = vmatprep.subr.mxu0 0.0
    %2549 = vmatpush1.msra.mxu0 0.0
    %2550 = vmatprep.subr.mxu0 0.0
    %2551 = vmatpush1.msra.mxu0 0.0
    %2552 = vmatprep.subr.mxu0 0.0
    %2553 = vmatpush1.msra.mxu0 0.0
    %2554 = vmatprep.subr.mxu0 0.0
    %2555 = vmatpush1.msra.mxu0 0.0
    %2556 = vmatprep.subr.mxu0 0.0
    %2557 = vmatpush1.msra.mxu0 0.0
    %2558 = vmatprep.subr.mxu0 0.0
    %2559 = vmatpush1.msra.mxu0 0.0
    %2560 = vmatprep.subr.mxu0 0.0
    %2561 = vmatpush1.msra.mxu0 0.0
    %2562 = vmatprep.subr.mxu0 0.0
    %2563 = vmatpush1.msra.mxu0 0.0
    %2564 = vmatprep.subr.mxu0 0.0
    %2565 = vmatpush1.msra.mxu0 0.0
    %2566 = vmatprep.subr.mxu0 0.0
    %2567 = vmatpush1.msra.mxu0 0.0
    %2568 = vmatprep.subr.mxu0 0.0
    %2569 = vmatpush1.msra.mxu0 0.0
    %2570 = vmatprep.subr.mxu0 0.0
    %2571 = vmatpush1.msra.mxu0 0.0
    %2572 = vmatprep.subr.mxu0 0.0
    %2573 = vmatpush1.msra.mxu0 0.0
    %2574 = vmatprep.subr.mxu0 0.0
    %2575 = vmatpush1.msra.mxu0 0.0
    %2576 = vmatprep.subr.mxu0 0.0
    %2577 = vmatpush1.msra.mxu0 0.0
    %2578 = vmatprep.subr.mxu0 0.0
    %2579 = vmatpush1.msra.mxu0 0.0
    %2580 = vmatprep.subr.mxu0 0.0
    %2581 = vmatpush1.msra.mxu0 0.0
    %2582 = vmatprep.subr.mxu0 0.0
    %2583 = vmatpush1.msra.mxu0 0.0
    %2584 = vmatprep.subr.mxu0 0.0
    %2585 = vmatpush1.msra.mxu0 0.0
    %2586 = vmatprep.subr.mxu0 0.0
    %2587 = vmatpush1.msra.mxu0 0.0
    %2588 = vmatprep.subr.mxu0 0.0
    %2589 = vmatpush1.msra.mxu0 0.0
    %2590 = vmatprep.subr.mxu0 0.0
    %2591 = vmatpush1.msra.mxu0 0.0
    %2592 = vmatprep.subr.mxu0 0.0
    %2593 = vmatpush1.msra.mxu0 0.0
    %2594 = vmatprep.subr.mxu0 0.0
    %2595 = vmatpush1.msra.mxu0 0.0
    %2596 = vmatprep.subr.mxu0 0.0
    %2597 = vmatpush1.msra.mxu0 0.0
    %2598 = vmatprep.subr.mxu0 0.0
    %2599 = vmatpush1.msra.mxu0 0.0
    %2600 = vmatprep.subr.mxu0 0.0
    %2601 = vmatpush1.msra.mxu0 0.0
    %2602 = vmatprep.mubr.f32.mxu0 0.0
    %2603 = vmatmul.mubr.f32.gmra.mrb[0].mxu0 %v2536
    %v2604 = vpop.f32.mrb[0].mxu0
    %v2605 = vadd.f32 0.0, %v2604
    %v2606 = vpop.f32.mrb[0].mxu0
    %2607 = vdwg.mxu0
    %2608 = vrot.lane.b32.xlu0 %v1735, 112
    %v2609 = vpop.permute.xlu0 %2608
    %2610 = vrot.lane.b32.xlu0 %v1858, 112
    %v2611 = vpop.permute.xlu0 %2610
    %2612 = vrot.lane.b32.xlu0 %v1863, 112
    %v2613 = vpop.permute.xlu0 %2612
    %v2614 = vsel %vm137, %v2609, 0
    %v2616 = vsel %vm137, %v2611, 0
    %v2618 = vsel %vm137, %v2613, 0
    %2620 = vmatprep.subr.mxu0 0.0
    %2621 = vmatpush1.xpose.msra.mxu0 %v2616
    %2622 = vmatprep.subr.mxu0 0.0
    %2623 = vmatpush1.xpose.msra.mxu0 %v2618
    %2624 = vmatprep.subr.mxu0 0.0
    %2625 = vmatpush1.xpose.msra.mxu0 0.0
    %2626 = vmatprep.subr.mxu0 0.0
    %2627 = vmatpush1.xpose.msra.mxu0 0.0
    %2628 = vmatprep.subr.mxu0 0.0
    %2629 = vmatpush1.xpose.msra.mxu0 0.0
    %2630 = vmatprep.subr.mxu0 0.0
    %2631 = vmatpush1.xpose.msra.mxu0 0.0
    %2632 = vmatprep.subr.mxu0 0.0
    %2633 = vmatpush1.xpose.msra.mxu0 0.0
    %2634 = vmatprep.subr.mxu0 0.0
    %2635 = vmatpush1.xpose.msra.mxu0 0.0
    %2636 = vmatprep.subr.mxu0 0.0
    %2637 = vmatpush1.xpose.msra.mxu0 0.0
    %2638 = vmatprep.subr.mxu0 0.0
    %2639 = vmatpush1.xpose.msra.mxu0 0.0
    %2640 = vmatprep.subr.mxu0 0.0
    %2641 = vmatpush1.xpose.msra.mxu0 0.0
    %2642 = vmatprep.subr.mxu0 0.0
    %2643 = vmatpush1.xpose.msra.mxu0 0.0
    %2644 = vmatprep.subr.mxu0 0.0
    %2645 = vmatpush1.xpose.msra.mxu0 0.0
    %2646 = vmatprep.subr.mxu0 0.0
    %2647 = vmatpush1.xpose.msra.mxu0 0.0
    %2648 = vmatprep.subr.mxu0 0.0
    %2649 = vmatpush1.xpose.msra.mxu0 0.0
    %2650 = vmatprep.subr.mxu0 0.0
    %2651 = vmatpush1.xpose.msra.mxu0 0.0
    %2652 = vmatprep.subr.mxu0 0.0
    %2653 = vmatpush1.xpose.msra.mxu0 0.0
    %2654 = vmatprep.subr.mxu0 0.0
    %2655 = vmatpush1.xpose.msra.mxu0 0.0
    %2656 = vmatprep.subr.mxu0 0.0
    %2657 = vmatpush1.xpose.msra.mxu0 0.0
    %2658 = vmatprep.subr.mxu0 0.0
    %2659 = vmatpush1.xpose.msra.mxu0 0.0
    %2660 = vmatprep.subr.mxu0 0.0
    %2661 = vmatpush1.xpose.msra.mxu0 0.0
    %2662 = vmatprep.subr.mxu0 0.0
    %2663 = vmatpush1.xpose.msra.mxu0 0.0
    %2664 = vmatprep.subr.mxu0 0.0
    %2665 = vmatpush1.xpose.msra.mxu0 0.0
    %2666 = vmatprep.subr.mxu0 0.0
    %2667 = vmatpush1.xpose.msra.mxu0 0.0
    %2668 = vmatprep.subr.mxu0 0.0
    %2669 = vmatpush1.xpose.msra.mxu0 0.0
    %2670 = vmatprep.subr.mxu0 0.0
    %2671 = vmatpush1.xpose.msra.mxu0 0.0
    %2672 = vmatprep.subr.mxu0 0.0
    %2673 = vmatpush1.xpose.msra.mxu0 0.0
    %2674 = vmatprep.subr.mxu0 0.0
    %2675 = vmatpush1.xpose.msra.mxu0 0.0
    %2676 = vmatprep.subr.mxu0 0.0
    %2677 = vmatpush1.xpose.msra.mxu0 0.0
    %2678 = vmatprep.subr.mxu0 0.0
    %2679 = vmatpush1.xpose.msra.mxu0 0.0
    %2680 = vmatprep.subr.mxu0 0.0
    %2681 = vmatpush1.xpose.msra.mxu0 0.0
    %2682 = vmatprep.subr.mxu0 0.0
    %2683 = vmatpush1.xpose.msra.mxu0 0.0
    %2684 = vmatprep.mubr.f32.mxu0 0.0
    %2685 = vmatmul.mubr.f32.gmra.mrb[0].mxu0 %v2614
    %v2686 = vpop.f32.mrb[0].mxu0
    %v2687 = vadd.f32 %v1903, %v2686
    %v2688 = vpop.f32.mrb[0].mxu0
    %2689 = vdwg.mxu0
    %2690 = vrot.lane.b32.xlu0 %v1740, 112
    %v2691 = vpop.permute.xlu0 %2690
    %2692 = vrot.lane.b32.xlu0 %v1868, 112
    %v2693 = vpop.permute.xlu0 %2692
    %2694 = vrot.lane.b32.xlu0 %v1873, 112
    %v2695 = vpop.permute.xlu0 %2694
    %v2696 = vsel %vm137, %v2691, 0
    %v2698 = vsel %vm137, %v2693, 0
    %v2700 = vsel %vm137, %v2695, 0
    %2702 = vmatprep.subr.mxu0 0.0
    %2703 = vmatpush1.xpose.msra.mxu0 %v2698
    %2704 = vmatprep.subr.mxu0 0.0
    %2705 = vmatpush1.xpose.msra.mxu0 %v2700
    %2706 = vmatprep.subr.mxu0 0.0
    %2707 = vmatpush1.xpose.msra.mxu0 0.0
    %2708 = vmatprep.subr.mxu0 0.0
    %2709 = vmatpush1.xpose.msra.mxu0 0.0
    %2710 = vmatprep.subr.mxu0 0.0
    %2711 = vmatpush1.xpose.msra.mxu0 0.0
    %2712 = vmatprep.subr.mxu0 0.0
    %2713 = vmatpush1.xpose.msra.mxu0 0.0
    %2714 = vmatprep.subr.mxu0 0.0
    %2715 = vmatpush1.xpose.msra.mxu0 0.0
    %2716 = vmatprep.subr.mxu0 0.0
    %2717 = vmatpush1.xpose.msra.mxu0 0.0
    %2718 = vmatprep.subr.mxu0 0.0
    %2719 = vmatpush1.xpose.msra.mxu0 0.0
    %2720 = vmatprep.subr.mxu0 0.0
    %2721 = vmatpush1.xpose.msra.mxu0 0.0
    %2722 = vmatprep.subr.mxu0 0.0
    %2723 = vmatpush1.xpose.msra.mxu0 0.0
    %2724 = vmatprep.subr.mxu0 0.0
    %2725 = vmatpush1.xpose.msra.mxu0 0.0
    %2726 = vmatprep.subr.mxu0 0.0
    %2727 = vmatpush1.xpose.msra.mxu0 0.0
    %2728 = vmatprep.subr.mxu0 0.0
    %2729 = vmatpush1.xpose.msra.mxu0 0.0
    %2730 = vmatprep.subr.mxu0 0.0
    %2731 = vmatpush1.xpose.msra.mxu0 0.0
    %2732 = vmatprep.subr.mxu0 0.0
    %2733 = vmatpush1.xpose.msra.mxu0 0.0
    %2734 = vmatprep.subr.mxu0 0.0
    %2735 = vmatpush1.xpose.msra.mxu0 0.0
    %2736 = vmatprep.subr.mxu0 0.0
    %2737 = vmatpush1.xpose.msra.mxu0 0.0
    %2738 = vmatprep.subr.mxu0 0.0
    %2739 = vmatpush1.xpose.msra.mxu0 0.0
    %2740 = vmatprep.subr.mxu0 0.0
    %2741 = vmatpush1.xpose.msra.mxu0 0.0
    %2742 = vmatprep.subr.mxu0 0.0
    %2743 = vmatpush1.xpose.msra.mxu0 0.0
    %2744 = vmatprep.subr.mxu0 0.0
    %2745 = vmatpush1.xpose.msra.mxu0 0.0
    %2746 = vmatprep.subr.mxu0 0.0
    %2747 = vmatpush1.xpose.msra.mxu0 0.0
    %2748 = vmatprep.subr.mxu0 0.0
    %2749 = vmatpush1.xpose.msra.mxu0 0.0
    %2750 = vmatprep.subr.mxu0 0.0
    %2751 = vmatpush1.xpose.msra.mxu0 0.0
    %2752 = vmatprep.subr.mxu0 0.0
    %2753 = vmatpush1.xpose.msra.mxu0 0.0
    %2754 = vmatprep.subr.mxu0 0.0
    %2755 = vmatpush1.xpose.msra.mxu0 0.0
    %2756 = vmatprep.subr.mxu0 0.0
    %2757 = vmatpush1.xpose.msra.mxu0 0.0
    %2758 = vmatprep.subr.mxu0 0.0
    %2759 = vmatpush1.xpose.msra.mxu0 0.0
    %2760 = vmatprep.subr.mxu0 0.0
    %2761 = vmatpush1.xpose.msra.mxu0 0.0
    %2762 = vmatprep.subr.mxu0 0.0
    %2763 = vmatpush1.xpose.msra.mxu0 0.0
    %2764 = vmatprep.subr.mxu0 0.0
    %2765 = vmatpush1.xpose.msra.mxu0 0.0
    %2766 = vmatprep.mubr.f32.mxu0 0.0
    %2767 = vmatmul.mubr.f32.gmra.mrb[0].mxu0 %v2696
    %v2768 = vpop.f32.mrb[0].mxu0
    %v2769 = vadd.f32 %v1907, %v2768
    %v2770 = vpop.f32.mrb[0].mxu0
    %2771 = vdwg.mxu0
    %v2772 = vsel %vm1503, %v2687, -inf
    %2773 = vmax.xlane.f32.xlu0 %v2772
    %v2774 = vpop.xlane.xlu0 %2773
    %v2775 = vsel %vm1503, %v2769, -inf
    %2776 = vmax.xlane.f32.xlu0 %v2775
    %v2777 = vpop.xlane.xlu0 %2776
    %v2778 = vsub.f32 %v2687, %v2774
    %v2779 = vsub.f32 %v2769, %v2777
    %v2780 = vmul.f32 %v2778, 1.442695
    %v2781 = vpow.pop %v2780
    %v2782 = vmul.f32 %v2779, 1.442695
    %v2783 = vpow.pop %v2782
    %v2784 = vsel %vm1503, %v2781, 0.0
    %2785 = vadd.xlane.f32.xlu0 %v2784
    %v2786 = vpop.xlane.xlu0 %2785
    %v2787 = vsel %vm1503, %v2783, 0.0
    %2788 = vadd.xlane.f32.xlu0 %v2787
    %v2789 = vpop.xlane.xlu0 %2788
    %v2790 = vrcp.pop %v2786
    %v2791 = vrcp.pop %v2789
    %v2792 = vmul.f32 %v2786, %v2790
    %v2793 = vmul.f32 %v2789, %v2791
    %v2794 = vsub.f32 2.0, %v2792
    %v2795 = vsub.f32 2.0, %v2793
    %v2796 = vmul.f32 %v2790, %v2794
    %v2797 = vmul.f32 %v2791, %v2795
    %v2798 = vmul.f32 %v2781, %v2796
    %v2799 = vmul.f32 %v2783, %v2797
    %2800 = vrot.lane.b32.xlu0 %v1878, 80
    %v2801 = vpop.permute.xlu0 %2800
    %2802 = vrot.lane.b32.xlu0 %v1883, 80
    %v2803 = vpop.permute.xlu0 %2802
    %v2807 = vsel %vm1503, %v2798, 0
    %2809 = vmatprep.subr.mxu0 0.0
    %2810 = vmatpush1.msra.mxu0 %v2801
    %2811 = vmatprep.subr.mxu0 0.0
    %2812 = vmatpush1.msra.mxu0 %v2803
    %2813 = vmatprep.subr.mxu0 0.0
    %2814 = vmatpush1.msra.mxu0 0.0
    %2815 = vmatprep.subr.mxu0 0.0
    %2816 = vmatpush1.msra.mxu0 0.0
    %2817 = vmatprep.subr.mxu0 0.0
    %2818 = vmatpush1.msra.mxu0 0.0
    %2819 = vmatprep.subr.mxu0 0.0
    %2820 = vmatpush1.msra.mxu0 0.0
    %2821 = vmatprep.subr.mxu0 0.0
    %2822 = vmatpush1.msra.mxu0 0.0
    %2823 = vmatprep.subr.mxu0 0.0
    %2824 = vmatpush1.msra.mxu0 0.0
    %2825 = vmatprep.subr.mxu0 0.0
    %2826 = vmatpush1.msra.mxu0 0.0
    %2827 = vmatprep.subr.mxu0 0.0
    %2828 = vmatpush1.msra.mxu0 0.0
    %2829 = vmatprep.subr.mxu0 0.0
    %2830 = vmatpush1.msra.mxu0 0.0
    %2831 = vmatprep.subr.mxu0 0.0
    %2832 = vmatpush1.msra.mxu0 0.0
    %2833 = vmatprep.subr.mxu0 0.0
    %2834 = vmatpush1.msra.mxu0 0.0
    %2835 = vmatprep.subr.mxu0 0.0
    %2836 = vmatpush1.msra.mxu0 0.0
    %2837 = vmatprep.subr.mxu0 0.0
    %2838 = vmatpush1.msra.mxu0 0.0
    %2839 = vmatprep.subr.mxu0 0.0
    %2840 = vmatpush1.msra.mxu0 0.0
    %2841 = vmatprep.subr.mxu0 0.0
    %2842 = vmatpush1.msra.mxu0 0.0
    %2843 = vmatprep.subr.mxu0 0.0
    %2844 = vmatpush1.msra.mxu0 0.0
    %2845 = vmatprep.subr.mxu0 0.0
    %2846 = vmatpush1.msra.mxu0 0.0
    %2847 = vmatprep.subr.mxu0 0.0
    %2848 = vmatpush1.msra.mxu0 0.0
    %2849 = vmatprep.subr.mxu0 0.0
    %2850 = vmatpush1.msra.mxu0 0.0
    %2851 = vmatprep.subr.mxu0 0.0
    %2852 = vmatpush1.msra.mxu0 0.0
    %2853 = vmatprep.subr.mxu0 0.0
    %2854 = vmatpush1.msra.mxu0 0.0
    %2855 = vmatprep.subr.mxu0 0.0
    %2856 = vmatpush1.msra.mxu0 0.0
    %2857 = vmatprep.subr.mxu0 0.0
    %2858 = vmatpush1.msra.mxu0 0.0
    %2859 = vmatprep.subr.mxu0 0.0
    %2860 = vmatpush1.msra.mxu0 0.0
    %2861 = vmatprep.subr.mxu0 0.0
    %2862 = vmatpush1.msra.mxu0 0.0
    %2863 = vmatprep.subr.mxu0 0.0
    %2864 = vmatpush1.msra.mxu0 0.0
    %2865 = vmatprep.subr.mxu0 0.0
    %2866 = vmatpush1.msra.mxu0 0.0
    %2867 = vmatprep.subr.mxu0 0.0
    %2868 = vmatpush1.msra.mxu0 0.0
    %2869 = vmatprep.subr.mxu0 0.0
    %2870 = vmatpush1.msra.mxu0 0.0
    %2871 = vmatprep.subr.mxu0 0.0
    %2872 = vmatpush1.msra.mxu0 0.0
    %2873 = vmatprep.mubr.f32.mxu0 0.0
    %2874 = vmatmul.mubr.f32.gmra.mrb[0].mxu0 %v2807
    %v2875 = vpop.f32.mrb[0].mxu0
    %v2876 = vadd.f32 0.0, %v2875
    %v2877 = vpop.f32.mrb[0].mxu0
    %2878 = vdwg.mxu0
    %2879 = vrot.lane.b32.xlu0 %v1888, 80
    %v2880 = vpop.permute.xlu0 %2879
    %2881 = vrot.lane.b32.xlu0 %v1893, 80
    %v2882 = vpop.permute.xlu0 %2881
    %v2886 = vsel %vm1503, %v2799, 0
    %2888 = vmatprep.subr.mxu0 0.0
    %2889 = vmatpush1.msra.mxu0 %v2880
    %2890 = vmatprep.subr.mxu0 0.0
    %2891 = vmatpush1.msra.mxu0 %v2882
    %2892 = vmatprep.subr.mxu0 0.0
    %2893 = vmatpush1.msra.mxu0 0.0
    %2894 = vmatprep.subr.mxu0 0.0
    %2895 = vmatpush1.msra.mxu0 0.0
    %2896 = vmatprep.subr.mxu0 0.0
    %2897 = vmatpush1.msra.mxu0 0.0
    %2898 = vmatprep.subr.mxu0 0.0
    %2899 = vmatpush1.msra.mxu0 0.0
    %2900 = vmatprep.subr.mxu0 0.0
    %2901 = vmatpush1.msra.mxu0 0.0
    %2902 = vmatprep.subr.mxu0 0.0
    %2903 = vmatpush1.msra.mxu0 0.0
    %2904 = vmatprep.subr.mxu0 0.0
    %2905 = vmatpush1.msra.mxu0 0.0
    %2906 = vmatprep.subr.mxu0 0.0
    %2907 = vmatpush1.msra.mxu0 0.0
    %2908 = vmatprep.subr.mxu0 0.0
    %2909 = vmatpush1.msra.mxu0 0.0
    %2910 = vmatprep.subr.mxu0 0.0
    %2911 = vmatpush1.msra.mxu0 0.0
    %2912 = vmatprep.subr.mxu0 0.0
    %2913 = vmatpush1.msra.mxu0 0.0
    %2914 = vmatprep.subr.mxu0 0.0
    %2915 = vmatpush1.msra.mxu0 0.0
    %2916 = vmatprep.subr.mxu0 0.0
    %2917 = vmatpush1.msra.mxu0 0.0
    %2918 = vmatprep.subr.mxu0 0.0
    %2919 = vmatpush1.msra.mxu0 0.0
    %2920 = vmatprep.subr.mxu0 0.0
    %2921 = vmatpush1.msra.mxu0 0.0
    %2922 = vmatprep.subr.mxu0 0.0
    %2923 = vmatpush1.msra.mxu0 0.0
    %2924 = vmatprep.subr.mxu0 0.0
    %2925 = vmatpush1.msra.mxu0 0.0
    %2926 = vmatprep.subr.mxu0 0.0
    %2927 = vmatpush1.msra.mxu0 0.0
    %2928 = vmatprep.subr.mxu0 0.0
    %2929 = vmatpush1.msra.mxu0 0.0
    %2930 = vmatprep.subr.mxu0 0.0
    %2931 = vmatpush1.msra.mxu0 0.0
    %2932 = vmatprep.subr.mxu0 0.0
    %2933 = vmatpush1.msra.mxu0 0.0
    %2934 = vmatprep.subr.mxu0 0.0
    %2935 = vmatpush1.msra.mxu0 0.0
    %2936 = vmatprep.subr.mxu0 0.0
    %2937 = vmatpush1.msra.mxu0 0.0
    %2938 = vmatprep.subr.mxu0 0.0
    %2939 = vmatpush1.msra.mxu0 0.0
    %2940 = vmatprep.subr.mxu0 0.0
    %2941 = vmatpush1.msra.mxu0 0.0
    %2942 = vmatprep.subr.mxu0 0.0
    %2943 = vmatpush1.msra.mxu0 0.0
    %2944 = vmatprep.subr.mxu0 0.0
    %2945 = vmatpush1.msra.mxu0 0.0
    %2946 = vmatprep.subr.mxu0 0.0
    %2947 = vmatpush1.msra.mxu0 0.0
    %2948 = vmatprep.subr.mxu0 0.0
    %2949 = vmatpush1.msra.mxu0 0.0
    %2950 = vmatprep.subr.mxu0 0.0
    %2951 = vmatpush1.msra.mxu0 0.0
    %2952 = vmatprep.mubr.f32.mxu0 0.0
    %2953 = vmatmul.mubr.f32.gmra.mrb[0].mxu0 %v2886
    %v2954 = vpop.f32.mrb[0].mxu0
    %v2955 = vadd.f32 0.0, %v2954
    %v2956 = vpop.f32.mrb[0].mxu0
    %2957 = vdwg.mxu0
    %2958 = vrot.lane.b32.xlu0 %v1735, 104
    %v2959 = vpop.permute.xlu0 %2958
    %2960 = vrot.lane.b32.xlu0 %v1858, 104
    %v2961 = vpop.permute.xlu0 %2960
    %2962 = vrot.lane.b32.xlu0 %v1863, 104
    %v2963 = vpop.permute.xlu0 %2962
    %v2964 = vsel %vm137, %v2959, 0
    %v2966 = vsel %vm137, %v2961, 0
    %v2968 = vsel %vm137, %v2963, 0
    %2970 = vmatprep.subr.mxu0 0.0
    %2971 = vmatpush1.xpose.msra.mxu0 %v2966
    %2972 = vmatprep.subr.mxu0 0.0
    %2973 = vmatpush1.xpose.msra.mxu0 %v2968
    %2974 = vmatprep.subr.mxu0 0.0
    %2975 = vmatpush1.xpose.msra.mxu0 0.0
    %2976 = vmatprep.subr.mxu0 0.0
    %2977 = vmatpush1.xpose.msra.mxu0 0.0
    %2978 = vmatprep.subr.mxu0 0.0
    %2979 = vmatpush1.xpose.msra.mxu0 0.0
    %2980 = vmatprep.subr.mxu0 0.0
    %2981 = vmatpush1.xpose.msra.mxu0 0.0
    %2982 = vmatprep.subr.mxu0 0.0
    %2983 = vmatpush1.xpose.msra.mxu0 0.0
    %2984 = vmatprep.subr.mxu0 0.0
    %2985 = vmatpush1.xpose.msra.mxu0 0.0
    %2986 = vmatprep.subr.mxu0 0.0
    %2987 = vmatpush1.xpose.msra.mxu0 0.0
    %2988 = vmatprep.subr.mxu0 0.0
    %2989 = vmatpush1.xpose.msra.mxu0 0.0
    %2990 = vmatprep.subr.mxu0 0.0
    %2991 = vmatpush1.xpose.msra.mxu0 0.0
    %2992 = vmatprep.subr.mxu0 0.0
    %2993 = vmatpush1.xpose.msra.mxu0 0.0
    %2994 = vmatprep.subr.mxu0 0.0
    %2995 = vmatpush1.xpose.msra.mxu0 0.0
    %2996 = vmatprep.subr.mxu0 0.0
    %2997 = vmatpush1.xpose.msra.mxu0 0.0
    %2998 = vmatprep.subr.mxu0 0.0
    %2999 = vmatpush1.xpose.msra.mxu0 0.0
    %3000 = vmatprep.subr.mxu0 0.0
    %3001 = vmatpush1.xpose.msra.mxu0 0.0
    %3002 = vmatprep.subr.mxu0 0.0
    %3003 = vmatpush1.xpose.msra.mxu0 0.0
    %3004 = vmatprep.subr.mxu0 0.0
    %3005 = vmatpush1.xpose.msra.mxu0 0.0
    %3006 = vmatprep.subr.mxu0 0.0
    %3007 = vmatpush1.xpose.msra.mxu0 0.0
    %3008 = vmatprep.subr.mxu0 0.0
    %3009 = vmatpush1.xpose.msra.mxu0 0.0
    %3010 = vmatprep.subr.mxu0 0.0
    %3011 = vmatpush1.xpose.msra.mxu0 0.0
    %3012 = vmatprep.subr.mxu0 0.0
    %3013 = vmatpush1.xpose.msra.mxu0 0.0
    %3014 = vmatprep.subr.mxu0 0.0
    %3015 = vmatpush1.xpose.msra.mxu0 0.0
    %3016 = vmatprep.subr.mxu0 0.0
    %3017 = vmatpush1.xpose.msra.mxu0 0.0
    %3018 = vmatprep.subr.mxu0 0.0
    %3019 = vmatpush1.xpose.msra.mxu0 0.0
    %3020 = vmatprep.subr.mxu0 0.0
    %3021 = vmatpush1.xpose.msra.mxu0 0.0
    %3022 = vmatprep.subr.mxu0 0.0
    %3023 = vmatpush1.xpose.msra.mxu0 0.0
    %3024 = vmatprep.subr.mxu0 0.0
    %3025 = vmatpush1.xpose.msra.mxu0 0.0
    %3026 = vmatprep.subr.mxu0 0.0
    %3027 = vmatpush1.xpose.msra.mxu0 0.0
    %3028 = vmatprep.subr.mxu0 0.0
    %3029 = vmatpush1.xpose.msra.mxu0 0.0
    %3030 = vmatprep.subr.mxu0 0.0
    %3031 = vmatpush1.xpose.msra.mxu0 0.0
    %3032 = vmatprep.subr.mxu0 0.0
    %3033 = vmatpush1.xpose.msra.mxu0 0.0
    %3034 = vmatprep.mubr.f32.mxu0 0.0
    %3035 = vmatmul.mubr.f32.gmra.mrb[0].mxu0 %v2964
    %v3036 = vpop.f32.mrb[0].mxu0
    %v3037 = vadd.f32 %v1903, %v3036
    %v3038 = vpop.f32.mrb[0].mxu0
    %3039 = vdwg.mxu0
    %3040 = vrot.lane.b32.xlu0 %v1740, 104
    %v3041 = vpop.permute.xlu0 %3040
    %3042 = vrot.lane.b32.xlu0 %v1868, 104
    %v3043 = vpop.permute.xlu0 %3042
    %3044 = vrot.lane.b32.xlu0 %v1873, 104
    %v3045 = vpop.permute.xlu0 %3044
    %v3046 = vsel %vm137, %v3041, 0
    %v3048 = vsel %vm137, %v3043, 0
    %v3050 = vsel %vm137, %v3045, 0
    %3052 = vmatprep.subr.mxu0 0.0
    %3053 = vmatpush1.xpose.msra.mxu0 %v3048
    %3054 = vmatprep.subr.mxu0 0.0
    %3055 = vmatpush1.xpose.msra.mxu0 %v3050
    %3056 = vmatprep.subr.mxu0 0.0
    %3057 = vmatpush1.xpose.msra.mxu0 0.0
    %3058 = vmatprep.subr.mxu0 0.0
    %3059 = vmatpush1.xpose.msra.mxu0 0.0
    %3060 = vmatprep.subr.mxu0 0.0
    %3061 = vmatpush1.xpose.msra.mxu0 0.0
    %3062 = vmatprep.subr.mxu0 0.0
    %3063 = vmatpush1.xpose.msra.mxu0 0.0
    %3064 = vmatprep.subr.mxu0 0.0
    %3065 = vmatpush1.xpose.msra.mxu0 0.0
    %3066 = vmatprep.subr.mxu0 0.0
    %3067 = vmatpush1.xpose.msra.mxu0 0.0
    %3068 = vmatprep.subr.mxu0 0.0
    %3069 = vmatpush1.xpose.msra.mxu0 0.0
    %3070 = vmatprep.subr.mxu0 0.0
    %3071 = vmatpush1.xpose.msra.mxu0 0.0
    %3072 = vmatprep.subr.mxu0 0.0
    %3073 = vmatpush1.xpose.msra.mxu0 0.0
    %3074 = vmatprep.subr.mxu0 0.0
    %3075 = vmatpush1.xpose.msra.mxu0 0.0
    %3076 = vmatprep.subr.mxu0 0.0
    %3077 = vmatpush1.xpose.msra.mxu0 0.0
    %3078 = vmatprep.subr.mxu0 0.0
    %3079 = vmatpush1.xpose.msra.mxu0 0.0
    %3080 = vmatprep.subr.mxu0 0.0
    %3081 = vmatpush1.xpose.msra.mxu0 0.0
    %3082 = vmatprep.subr.mxu0 0.0
    %3083 = vmatpush1.xpose.msra.mxu0 0.0
    %3084 = vmatprep.subr.mxu0 0.0
    %3085 = vmatpush1.xpose.msra.mxu0 0.0
    %3086 = vmatprep.subr.mxu0 0.0
    %3087 = vmatpush1.xpose.msra.mxu0 0.0
    %3088 = vmatprep.subr.mxu0 0.0
    %3089 = vmatpush1.xpose.msra.mxu0 0.0
    %3090 = vmatprep.subr.mxu0 0.0
    %3091 = vmatpush1.xpose.msra.mxu0 0.0
    %3092 = vmatprep.subr.mxu0 0.0
    %3093 = vmatpush1.xpose.msra.mxu0 0.0
    %3094 = vmatprep.subr.mxu0 0.0
    %3095 = vmatpush1.xpose.msra.mxu0 0.0
    %3096 = vmatprep.subr.mxu0 0.0
    %3097 = vmatpush1.xpose.msra.mxu0 0.0
    %3098 = vmatprep.subr.mxu0 0.0
    %3099 = vmatpush1.xpose.msra.mxu0 0.0
    %3100 = vmatprep.subr.mxu0 0.0
    %3101 = vmatpush1.xpose.msra.mxu0 0.0
    %3102 = vmatprep.subr.mxu0 0.0
    %3103 = vmatpush1.xpose.msra.mxu0 0.0
    %3104 = vmatprep.subr.mxu0 0.0
    %3105 = vmatpush1.xpose.msra.mxu0 0.0
    %3106 = vmatprep.subr.mxu0 0.0
    %3107 = vmatpush1.xpose.msra.mxu0 0.0
    %3108 = vmatprep.subr.mxu0 0.0
    %3109 = vmatpush1.xpose.msra.mxu0 0.0
    %3110 = vmatprep.subr.mxu0 0.0
    %3111 = vmatpush1.xpose.msra.mxu0 0.0
    %3112 = vmatprep.subr.mxu0 0.0
    %3113 = vmatpush1.xpose.msra.mxu0 0.0
    %3114 = vmatprep.subr.mxu0 0.0
    %3115 = vmatpush1.xpose.msra.mxu0 0.0
    %3116 = vmatprep.mubr.f32.mxu0 0.0
    %3117 = vmatmul.mubr.f32.gmra.mrb[0].mxu0 %v3046
    %v3118 = vpop.f32.mrb[0].mxu0
    %v3119 = vadd.f32 %v1907, %v3118
    %v3120 = vpop.f32.mrb[0].mxu0
    %3121 = vdwg.mxu0
    %v3122 = vsel %vm1503, %v3037, -inf
    %3123 = vmax.xlane.f32.xlu0 %v3122
    %v3124 = vpop.xlane.xlu0 %3123
    %v3125 = vsel %vm1503, %v3119, -inf
    %3126 = vmax.xlane.f32.xlu0 %v3125
    %v3127 = vpop.xlane.xlu0 %3126
    %v3128 = vsub.f32 %v3037, %v3124
    %v3129 = vsub.f32 %v3119, %v3127
    %v3130 = vmul.f32 %v3128, 1.442695
    %v3131 = vpow.pop %v3130
    %v3132 = vmul.f32 %v3129, 1.442695
    %v3133 = vpow.pop %v3132
    %v3134 = vsel %vm1503, %v3131, 0.0
    %3135 = vadd.xlane.f32.xlu0 %v3134
    %v3136 = vpop.xlane.xlu0 %3135
    %v3137 = vsel %vm1503, %v3133, 0.0
    %3138 = vadd.xlane.f32.xlu0 %v3137
    %v3139 = vpop.xlane.xlu0 %3138
    %v3140 = vrcp.pop %v3136
    %v3141 = vrcp.pop %v3139
    %v3142 = vmul.f32 %v3136, %v3140
    %v3143 = vmul.f32 %v3139, %v3141
    %v3144 = vsub.f32 2.0, %v3142
    %v3145 = vsub.f32 2.0, %v3143
    %v3146 = vmul.f32 %v3140, %v3144
    %v3147 = vmul.f32 %v3141, %v3145
    %v3148 = vmul.f32 %v3131, %v3146
    %v3149 = vmul.f32 %v3133, %v3147
    %3150 = vrot.lane.b32.xlu0 %v1878, 72
    %v3151 = vpop.permute.xlu0 %3150
    %3152 = vrot.lane.b32.xlu0 %v1883, 72
    %v3153 = vpop.permute.xlu0 %3152
    %v3157 = vsel %vm1503, %v3148, 0
    %3159 = vmatprep.subr.mxu0 0.0
    %3160 = vmatpush1.msra.mxu0 %v3151
    %3161 = vmatprep.subr.mxu0 0.0
    %3162 = vmatpush1.msra.mxu0 %v3153
    %3163 = vmatprep.subr.mxu0 0.0
    %3164 = vmatpush1.msra.mxu0 0.0
    %3165 = vmatprep.subr.mxu0 0.0
    %3166 = vmatpush1.msra.mxu0 0.0
    %3167 = vmatprep.subr.mxu0 0.0
    %3168 = vmatpush1.msra.mxu0 0.0
    %3169 = vmatprep.subr.mxu0 0.0
    %3170 = vmatpush1.msra.mxu0 0.0
    %3171 = vmatprep.subr.mxu0 0.0
    %3172 = vmatpush1.msra.mxu0 0.0
    %3173 = vmatprep.subr.mxu0 0.0
    %3174 = vmatpush1.msra.mxu0 0.0
    %3175 = vmatprep.subr.mxu0 0.0
    %3176 = vmatpush1.msra.mxu0 0.0
    %3177 = vmatprep.subr.mxu0 0.0
    %3178 = vmatpush1.msra.mxu0 0.0
    %3179 = vmatprep.subr.mxu0 0.0
    %3180 = vmatpush1.msra.mxu0 0.0
    %3181 = vmatprep.subr.mxu0 0.0
    %3182 = vmatpush1.msra.mxu0 0.0
    %3183 = vmatprep.subr.mxu0 0.0
    %3184 = vmatpush1.msra.mxu0 0.0
    %3185 = vmatprep.subr.mxu0 0.0
    %3186 = vmatpush1.msra.mxu0 0.0
    %3187 = vmatprep.subr.mxu0 0.0
    %3188 = vmatpush1.msra.mxu0 0.0
    %3189 = vmatprep.subr.mxu0 0.0
    %3190 = vmatpush1.msra.mxu0 0.0
    %3191 = vmatprep.subr.mxu0 0.0
    %3192 = vmatpush1.msra.mxu0 0.0
    %3193 = vmatprep.subr.mxu0 0.0
    %3194 = vmatpush1.msra.mxu0 0.0
    %3195 = vmatprep.subr.mxu0 0.0
    %3196 = vmatpush1.msra.mxu0 0.0
    %3197 = vmatprep.subr.mxu0 0.0
    %3198 = vmatpush1.msra.mxu0 0.0
    %3199 = vmatprep.subr.mxu0 0.0
    %3200 = vmatpush1.msra.mxu0 0.0
    %3201 = vmatprep.subr.mxu0 0.0
    %3202 = vmatpush1.msra.mxu0 0.0
    %3203 = vmatprep.subr.mxu0 0.0
    %3204 = vmatpush1.msra.mxu0 0.0
    %3205 = vmatprep.subr.mxu0 0.0
    %3206 = vmatpush1.msra.mxu0 0.0
    %3207 = vmatprep.subr.mxu0 0.0
    %3208 = vmatpush1.msra.mxu0 0.0
    %3209 = vmatprep.subr.mxu0 0.0
    %3210 = vmatpush1.msra.mxu0 0.0
    %3211 = vmatprep.subr.mxu0 0.0
    %3212 = vmatpush1.msra.mxu0 0.0
    %3213 = vmatprep.subr.mxu0 0.0
    %3214 = vmatpush1.msra.mxu0 0.0
    %3215 = vmatprep.subr.mxu0 0.0
    %3216 = vmatpush1.msra.mxu0 0.0
    %3217 = vmatprep.subr.mxu0 0.0
    %3218 = vmatpush1.msra.mxu0 0.0
    %3219 = vmatprep.subr.mxu0 0.0
    %3220 = vmatpush1.msra.mxu0 0.0
    %3221 = vmatprep.subr.mxu0 0.0
    %3222 = vmatpush1.msra.mxu0 0.0
    %3223 = vmatprep.mubr.f32.mxu0 0.0
    %3224 = vmatmul.mubr.f32.gmra.mrb[0].mxu0 %v3157
    %v3225 = vpop.f32.mrb[0].mxu0
    %v3226 = vadd.f32 0.0, %v3225
    %v3227 = vpop.f32.mrb[0].mxu0
    %3228 = vdwg.mxu0
    %3229 = vrot.lane.b32.xlu0 %v1888, 72
    %v3230 = vpop.permute.xlu0 %3229
    %3231 = vrot.lane.b32.xlu0 %v1893, 72
    %v3232 = vpop.permute.xlu0 %3231
    %v3236 = vsel %vm1503, %v3149, 0
    %3238 = vmatprep.subr.mxu0 0.0
    %3239 = vmatpush1.msra.mxu0 %v3230
    %3240 = vmatprep.subr.mxu0 0.0
    %3241 = vmatpush1.msra.mxu0 %v3232
    %3242 = vmatprep.subr.mxu0 0.0
    %3243 = vmatpush1.msra.mxu0 0.0
    %3244 = vmatprep.subr.mxu0 0.0
    %3245 = vmatpush1.msra.mxu0 0.0
    %3246 = vmatprep.subr.mxu0 0.0
    %3247 = vmatpush1.msra.mxu0 0.0
    %3248 = vmatprep.subr.mxu0 0.0
    %3249 = vmatpush1.msra.mxu0 0.0
    %3250 = vmatprep.subr.mxu0 0.0
    %3251 = vmatpush1.msra.mxu0 0.0
    %3252 = vmatprep.subr.mxu0 0.0
    %3253 = vmatpush1.msra.mxu0 0.0
    %3254 = vmatprep.subr.mxu0 0.0
    %3255 = vmatpush1.msra.mxu0 0.0
    %3256 = vmatprep.subr.mxu0 0.0
    %3257 = vmatpush1.msra.mxu0 0.0
    %3258 = vmatprep.subr.mxu0 0.0
    %3259 = vmatpush1.msra.mxu0 0.0
    %3260 = vmatprep.subr.mxu0 0.0
    %3261 = vmatpush1.msra.mxu0 0.0
    %3262 = vmatprep.subr.mxu0 0.0
    %3263 = vmatpush1.msra.mxu0 0.0
    %3264 = vmatprep.subr.mxu0 0.0
    %3265 = vmatpush1.msra.mxu0 0.0
    %3266 = vmatprep.subr.mxu0 0.0
    %3267 = vmatpush1.msra.mxu0 0.0
    %3268 = vmatprep.subr.mxu0 0.0
    %3269 = vmatpush1.msra.mxu0 0.0
    %3270 = vmatprep.subr.mxu0 0.0
    %3271 = vmatpush1.msra.mxu0 0.0
    %3272 = vmatprep.subr.mxu0 0.0
    %3273 = vmatpush1.msra.mxu0 0.0
    %3274 = vmatprep.subr.mxu0 0.0
    %3275 = vmatpush1.msra.mxu0 0.0
    %3276 = vmatprep.subr.mxu0 0.0
    %3277 = vmatpush1.msra.mxu0 0.0
    %3278 = vmatprep.subr.mxu0 0.0
    %3279 = vmatpush1.msra.mxu0 0.0
    %3280 = vmatprep.subr.mxu0 0.0
    %3281 = vmatpush1.msra.mxu0 0.0
    %3282 = vmatprep.subr.mxu0 0.0
    %3283 = vmatpush1.msra.mxu0 0.0
    %3284 = vmatprep.subr.mxu0 0.0
    %3285 = vmatpush1.msra.mxu0 0.0
    %3286 = vmatprep.subr.mxu0 0.0
    %3287 = vmatpush1.msra.mxu0 0.0
    %3288 = vmatprep.subr.mxu0 0.0
    %3289 = vmatpush1.msra.mxu0 0.0
    %3290 = vmatprep.subr.mxu0 0.0
    %3291 = vmatpush1.msra.mxu0 0.0
    %3292 = vmatprep.subr.mxu0 0.0
    %3293 = vmatpush1.msra.mxu0 0.0
    %3294 = vmatprep.subr.mxu0 0.0
    %3295 = vmatpush1.msra.mxu0 0.0
    %3296 = vmatprep.subr.mxu0 0.0
    %3297 = vmatpush1.msra.mxu0 0.0
    %3298 = vmatprep.subr.mxu0 0.0
    %3299 = vmatpush1.msra.mxu0 0.0
    %3300 = vmatprep.subr.mxu0 0.0
    %3301 = vmatpush1.msra.mxu0 0.0
    %3302 = vmatprep.mubr.f32.mxu0 0.0
    %3303 = vmatmul.mubr.f32.gmra.mrb[0].mxu0 %v3236
    %v3304 = vpop.f32.mrb[0].mxu0
    %v3305 = vadd.f32 0.0, %v3304
    %v3306 = vpop.f32.mrb[0].mxu0
    %3307 = vdwg.mxu0
    %3310 = vrot.lane.b32.xlu0 %v2526, 8
    %v3311 = vpop.permute.xlu0 %3310
    %3312 = vrot.lane.b32.xlu0 %v2605, 8
    %v3313 = vpop.permute.xlu0 %3312
    %3318 = vrot.lane.b32.xlu0 %v2876, 16
    %v3319 = vpop.permute.xlu0 %3318
    %3320 = vrot.lane.b32.xlu0 %v2955, 16
    %v3321 = vpop.permute.xlu0 %3320
    %3326 = vrot.lane.b32.xlu0 %v3226, 24
    %v3327 = vpop.permute.xlu0 %3326
    %3328 = vrot.lane.b32.xlu0 %v3305, 24
    %v3329 = vpop.permute.xlu0 %3328
    %v3332 = vsel %vm137, %v2174, %v3311
    %v3333 = vsel %vm137, %v2255, %v3313
    %v3334 = vsel %vm1503, %v3332, %v3319
    %v3335 = vsel %vm1503, %v3333, %v3321
    %v3336 = vsel %vm1506, %v3334, %v3327
    %v3337 = vsel %vm1506, %v3335, %v3329
    %v3338 = vld [vmem:[%s5] sm:$0xff]
    %v3339 = vld [vmem:[%s5 + $0x8] sm:$0xff]
    %v3340 = vld [vmem:[%s5 + $0x10] sm:$0xff]
    %v3341 = vld [vmem:[%s5 + $0x18] sm:$0xff]
    %v3342 = vld [vmem:[%s7 + $0x3] sm:$0x1]
    %v3343 = vlaneseq
    %v3344 = vshrl.u32 %v3343, 7
    %v3345 = vsub.s32 0, %v3344
    %v3346 = vrot.slane %v3342, %v3345
    %3351 = vrot.lane.b32.xlu0 %v3338, 32
    %v3352 = vpop.permute.xlu0 %3351
    %3353 = vrot.lane.b32.xlu0 %v3339, 32
    %v3354 = vpop.permute.xlu0 %3353
    %3355 = vrot.lane.b32.xlu0 %v3340, 32
    %v3356 = vpop.permute.xlu0 %3355
    %3357 = vrot.lane.b32.xlu0 %v3341, 32
    %v3358 = vpop.permute.xlu0 %3357
    %v3364 = vsel %vm50, %v3336, 0
    %v3367 = vsel %vm50, %v3337, 0
    %3369 = vmatprep.subr.mxu0 0.0
    %3370 = vmatpush1.msra.mxu0 %v3352
    %3371 = vmatprep.subr.mxu0 0.0
    %3372 = vmatpush1.msra.mxu0 %v3354
    %3373 = vmatprep.subr.mxu0 0.0
    %3374 = vmatpush1.msra.mxu0 %v3356
    %3375 = vmatprep.subr.mxu0 0.0
    %3376 = vmatpush1.msra.mxu0 %v3358
    %3377 = vmatprep.subr.mxu0 0.0
    %3378 = vmatpush1.msra.mxu0 0.0
    %3379 = vmatprep.subr.mxu0 0.0
    %3380 = vmatpush1.msra.mxu0 0.0
    %3381 = vmatprep.subr.mxu0 0.0
    %3382 = vmatpush1.msra.mxu0 0.0
    %3383 = vmatprep.subr.mxu0 0.0
    %3384 = vmatpush1.msra.mxu0 0.0
    %3385 = vmatprep.subr.mxu0 0.0
    %3386 = vmatpush1.msra.mxu0 0.0
    %3387 = vmatprep.subr.mxu0 0.0
    %3388 = vmatpush1.msra.mxu0 0.0
    %3389 = vmatprep.subr.mxu0 0.0
    %3390 = vmatpush1.msra.mxu0 0.0
    %3391 = vmatprep.subr.mxu0 0.0
    %3392 = vmatpush1.msra.mxu0 0.0
    %3393 = vmatprep.subr.mxu0 0.0
    %3394 = vmatpush1.msra.mxu0 0.0
    %3395 = vmatprep.subr.mxu0 0.0
    %3396 = vmatpush1.msra.mxu0 0.0
    %3397 = vmatprep.subr.mxu0 0.0
    %3398 = vmatpush1.msra.mxu0 0.0
    %3399 = vmatprep.subr.mxu0 0.0
    %3400 = vmatpush1.msra.mxu0 0.0
    %3401 = vmatprep.subr.mxu0 0.0
    %3402 = vmatpush1.msra.mxu0 0.0
    %3403 = vmatprep.subr.mxu0 0.0
    %3404 = vmatpush1.msra.mxu0 0.0
    %3405 = vmatprep.subr.mxu0 0.0
    %3406 = vmatpush1.msra.mxu0 0.0
    %3407 = vmatprep.subr.mxu0 0.0
    %3408 = vmatpush1.msra.mxu0 0.0
    %3409 = vmatprep.subr.mxu0 0.0
    %3410 = vmatpush1.msra.mxu0 0.0
    %3411 = vmatprep.subr.mxu0 0.0
    %3412 = vmatpush1.msra.mxu0 0.0
    %3413 = vmatprep.subr.mxu0 0.0
    %3414 = vmatpush1.msra.mxu0 0.0
    %3415 = vmatprep.subr.mxu0 0.0
    %3416 = vmatpush1.msra.mxu0 0.0
    %3417 = vmatprep.subr.mxu0 0.0
    %3418 = vmatpush1.msra.mxu0 0.0
    %3419 = vmatprep.subr.mxu0 0.0
    %3420 = vmatpush1.msra.mxu0 0.0
    %3421 = vmatprep.subr.mxu0 0.0
    %3422 = vmatpush1.msra.mxu0 0.0
    %3423 = vmatprep.subr.mxu0 0.0
    %3424 = vmatpush1.msra.mxu0 0.0
    %3425 = vmatprep.subr.mxu0 0.0
    %3426 = vmatpush1.msra.mxu0 0.0
    %3427 = vmatprep.subr.mxu0 0.0
    %3428 = vmatpush1.msra.mxu0 0.0
    %3429 = vmatprep.subr.mxu0 0.0
    %3430 = vmatpush1.msra.mxu0 0.0
    %3431 = vmatprep.subr.mxu0 0.0
    %3432 = vmatpush1.msra.mxu0 0.0
    %3433 = vmatprep.mubr.f32.mxu0 0.0
    %3434 = vmatmul.mubr.f32.gmra.mrb[0].mxu0 %v3364
    %v3435 = vpop.f32.mrb[0].mxu0
    %v3436 = vadd.f32 %v3346, %v3435
    %v3437 = vpop.f32.mrb[0].mxu0
    %3438 = vmatprep.mubr.f32.mxu0 0.0
    %3439 = vmatmul.mubr.f32.gmra.mrb[0].mxu0 %v3367
    %v3440 = vpop.f32.mrb[0].mxu0
    %v3441 = vadd.f32 %v3346, %v3440
    %v3442 = vpop.f32.mrb[0].mxu0
    %3443 = vdwg.mxu0
    %v3444 = vadd.f32 %v3436, %v1656
    %v3445 = vadd.f32 %v3441, %v1657
    %v3446 = vld [vmem:[%s7 + $0x4] sm:$0x1]
    %v3447 = vld [vmem:[%s7 + $0x5] sm:$0x1]
    %v3448 = vsel %vm50, %v3444, 0.0
    %3449 = vadd.xlane.f32.xlu0 %v3448
    %v3450 = vpop.xlane.xlu0 %3449
    %v3451 = vsel %vm50, %v3445, 0.0
    %3452 = vadd.xlane.f32.xlu0 %v3451
    %v3453 = vpop.xlane.xlu0 %3452
    %v3454 = vmul.f32 %v3450, %v1625
    %v3455 = vmul.f32 %v3453, %v1625
    %v3456 = vsub.f32 %v3444, %v3454
    %v3457 = vsub.f32 %v3445, %v3455
    %v3458 = vmul.f32 %v3456, %v3456
    %v3459 = vmul.f32 %v3457, %v3457
    %v3460 = vsel %vm50, %v3458, 0.0
    %3461 = vadd.xlane.f32.xlu0 %v3460
    %v3462 = vpop.xlane.xlu0 %3461
    %v3463 = vsel %vm50, %v3459, 0.0
    %3464 = vadd.xlane.f32.xlu0 %v3463
    %v3465 = vpop.xlane.xlu0 %3464
    %v3466 = vmul.f32 %v3462, %v1625
    %v3467 = vmul.f32 %v3465, %v1625
    %v3468 = vadd.f32 %v3466, 1e-05
    %v3469 = vadd.f32 %v3467, 1e-05
    %v3470 = vrsqrt.pop %v3468
    %v3471 = vrsqrt.pop %v3469
    %v3472 = vmul.f32 %v3456, %v3470
    %v3473 = vmul.f32 %v3457, %v3471
    %v3474 = vlaneseq
    %v3475 = vshrl.u32 %v3474, 7
    %v3476 = vsub.s32 0, %v3475
    %v3477 = vrot.slane %v3446, %v3476
    %v3478 = vmul.f32 %v3472, %v3477
    %v3479 = vmul.f32 %v3473, %v3477
    %v3480 = vlaneseq
    %v3481 = vshrl.u32 %v3480, 7
    %v3482 = vsub.s32 0, %v3481
    %v3483 = vrot.slane %v3447, %v3482
    %v3484 = vadd.f32 %v3478, %v3483
    %v3485 = vadd.f32 %v3479, %v3483
    %v3486 = vld [vmem:[#allocation2] sm:$0xff]
    %v3487 = vld [vmem:[#allocation2 + $0x8] sm:$0xff]
    %v3488 = vld [vmem:[#allocation2 + $0x10] sm:$0xff]
    %v3489 = vld [vmem:[#allocation2 + $0x18] sm:$0xff]
    %v3490 = vld [vmem:[%s7 + $0x9] sm:$0x1]
    %v3491 = vlaneseq
    %v3492 = vshrl.u32 %v3491, 7
    %v3493 = vsub.s32 0, %v3492
    %v3494 = vrot.slane %v3490, %v3493
    %v3496 = vsel %vm50, %v3484, 0
    %v3499 = vsel %vm50, %v3485, 0
    %3501 = vmatprep.subr.mxu0 0.0
    %3502 = vmatpush1.msra.mxu0 %v3486
    %3503 = vmatprep.subr.mxu0 0.0
    %3504 = vmatpush1.msra.mxu0 %v3487
    %3505 = vmatprep.subr.mxu0 0.0
    %3506 = vmatpush1.msra.mxu0 %v3488
    %3507 = vmatprep.subr.mxu0 0.0
    %3508 = vmatpush1.msra.mxu0 %v3489
    %3509 = vmatprep.subr.mxu0 0.0
    %3510 = vmatpush1.msra.mxu0 0.0
    %3511 = vmatprep.subr.mxu0 0.0
    %3512 = vmatpush1.msra.mxu0 0.0
    %3513 = vmatprep.subr.mxu0 0.0
    %3514 = vmatpush1.msra.mxu0 0.0
    %3515 = vmatprep.subr.mxu0 0.0
    %3516 = vmatpush1.msra.mxu0 0.0
    %3517 = vmatprep.subr.mxu0 0.0
    %3518 = vmatpush1.msra.mxu0 0.0
    %3519 = vmatprep.subr.mxu0 0.0
    %3520 = vmatpush1.msra.mxu0 0.0
    %3521 = vmatprep.subr.mxu0 0.0
    %3522 = vmatpush1.msra.mxu0 0.0
    %3523 = vmatprep.subr.mxu0 0.0
    %3524 = vmatpush1.msra.mxu0 0.0
    %3525 = vmatprep.subr.mxu0 0.0
    %3526 = vmatpush1.msra.mxu0 0.0
    %3527 = vmatprep.subr.mxu0 0.0
    %3528 = vmatpush1.msra.mxu0 0.0
    %3529 = vmatprep.subr.mxu0 0.0
    %3530 = vmatpush1.msra.mxu0 0.0
    %3531 = vmatprep.subr.mxu0 0.0
    %3532 = vmatpush1.msra.mxu0 0.0
    %3533 = vmatprep.subr.mxu0 0.0
    %3534 = vmatpush1.msra.mxu0 0.0
    %3535 = vmatprep.subr.mxu0 0.0
    %3536 = vmatpush1.msra.mxu0 0.0
    %3537 = vmatprep.subr.mxu0 0.0
    %3538 = vmatpush1.msra.mxu0 0.0
    %3539 = vmatprep.subr.mxu0 0.0
    %3540 = vmatpush1.msra.mxu0 0.0
    %3541 = vmatprep.subr.mxu0 0.0
    %3542 = vmatpush1.msra.mxu0 0.0
    %3543 = vmatprep.subr.mxu0 0.0
    %3544 = vmatpush1.msra.mxu0 0.0
    %3545 = vmatprep.subr.mxu0 0.0
    %3546 = vmatpush1.msra.mxu0 0.0
    %3547 = vmatprep.subr.mxu0 0.0
    %3548 = vmatpush1.msra.mxu0 0.0
    %3549 = vmatprep.subr.mxu0 0.0
    %3550 = vmatpush1.msra.mxu0 0.0
    %3551 = vmatprep.subr.mxu0 0.0
    %3552 = vmatpush1.msra.mxu0 0.0
    %3553 = vmatprep.subr.mxu0 0.0
    %3554 = vmatpush1.msra.mxu0 0.0
    %3555 = vmatprep.subr.mxu0 0.0
    %3556 = vmatpush1.msra.mxu0 0.0
    %3557 = vmatprep.subr.mxu0 0.0
    %3558 = vmatpush1.msra.mxu0 0.0
    %3559 = vmatprep.subr.mxu0 0.0
    %3560 = vmatpush1.msra.mxu0 0.0
    %3561 = vmatprep.subr.mxu0 0.0
    %3562 = vmatpush1.msra.mxu0 0.0
    %3563 = vmatprep.subr.mxu0 0.0
    %3564 = vmatpush1.msra.mxu0 0.0
    %3565 = vmatprep.mubr.f32.mxu0 0.0
    %3566 = vmatmul.mubr.f32.gmra.mrb[0].mxu0 %v3496
    %v3567 = vpop.f32.mrb[0].mxu0
    %v3568 = vadd.f32 %v3494, %v3567
    %v3569 = vpop.f32.mrb[0].mxu0
    %3570 = vmatprep.mubr.f32.mxu0 0.0
    %3571 = vmatmul.mubr.f32.gmra.mrb[0].mxu0 %v3499
    %v3572 = vpop.f32.mrb[0].mxu0
    %v3573 = vadd.f32 %v3494, %v3572
    %v3574 = vpop.f32.mrb[0].mxu0
    %3575 = vdwg.mxu0
    %v3576 = vmax.f32 %v3568, 0.0
    %v3577 = vmax.f32 %v3573, 0.0
    %v3578 = vld [vmem:[#allocation2 + $0x20] sm:$0xff]
    %v3579 = vld [vmem:[#allocation2 + $0x28] sm:$0xff]
    %v3580 = vld [vmem:[#allocation2 + $0x30] sm:$0xff]
    %v3581 = vld [vmem:[#allocation2 + $0x38] sm:$0xff]
    %v3582 = vld [vmem:[#allocation2 + $0x40] sm:$0xff]
    %v3583 = vld [vmem:[#allocation2 + $0x48] sm:$0xff]
    %v3584 = vld [vmem:[#allocation2 + $0x50] sm:$0xff]
    %v3585 = vld [vmem:[#allocation2 + $0x58] sm:$0xff]
    %v3586 = vld [vmem:[#allocation2 + $0x60] sm:$0xff]
    %v3587 = vld [vmem:[#allocation2 + $0x68] sm:$0xff]
    %v3588 = vld [vmem:[#allocation2 + $0x70] sm:$0xff]
    %v3589 = vld [vmem:[#allocation2 + $0x78] sm:$0xff]
    %v3590 = vld [vmem:[#allocation2 + $0x80] sm:$0xff]
    %v3591 = vld [vmem:[#allocation2 + $0x88] sm:$0xff]
    %v3592 = vld [vmem:[#allocation2 + $0x90] sm:$0xff]
    %v3593 = vld [vmem:[#allocation2 + $0x98] sm:$0xff]
    %3594 = vmatprep.subr.mxu0 0.0
    %3595 = vmatpush1.msra.mxu0 %v3578
    %3596 = vmatprep.subr.mxu0 0.0
    %3597 = vmatpush1.msra.mxu0 %v3579
    %3598 = vmatprep.subr.mxu0 0.0
    %3599 = vmatpush1.msra.mxu0 %v3580
    %3600 = vmatprep.subr.mxu0 0.0
    %3601 = vmatpush1.msra.mxu0 %v3581
    %3602 = vmatprep.subr.mxu0 0.0
    %3603 = vmatpush1.msra.mxu0 %v3582
    %3604 = vmatprep.subr.mxu0 0.0
    %3605 = vmatpush1.msra.mxu0 %v3583
    %3606 = vmatprep.subr.mxu0 0.0
    %3607 = vmatpush1.msra.mxu0 %v3584
    %3608 = vmatprep.subr.mxu0 0.0
    %3609 = vmatpush1.msra.mxu0 %v3585
    %3610 = vmatprep.subr.mxu0 0.0
    %3611 = vmatpush1.msra.mxu0 %v3586
    %3612 = vmatprep.subr.mxu0 0.0
    %3613 = vmatpush1.msra.mxu0 %v3587
    %3614 = vmatprep.subr.mxu0 0.0
    %3615 = vmatpush1.msra.mxu0 %v3588
    %3616 = vmatprep.subr.mxu0 0.0
    %3617 = vmatpush1.msra.mxu0 %v3589
    %3618 = vmatprep.subr.mxu0 0.0
    %3619 = vmatpush1.msra.mxu0 %v3590
    %3620 = vmatprep.subr.mxu0 0.0
    %3621 = vmatpush1.msra.mxu0 %v3591
    %3622 = vmatprep.subr.mxu0 0.0
    %3623 = vmatpush1.msra.mxu0 %v3592
    %3624 = vmatprep.subr.mxu0 0.0
    %3625 = vmatpush1.msra.mxu0 %v3593
    %3626 = vmatprep.subr.mxu0 0.0
    %3627 = vmatpush1.msra.mxu0 0.0
    %3628 = vmatprep.subr.mxu0 0.0
    %3629 = vmatpush1.msra.mxu0 0.0
    %3630 = vmatprep.subr.mxu0 0.0
    %3631 = vmatpush1.msra.mxu0 0.0
    %3632 = vmatprep.subr.mxu0 0.0
    %3633 = vmatpush1.msra.mxu0 0.0
    %3634 = vmatprep.subr.mxu0 0.0
    %3635 = vmatpush1.msra.mxu0 0.0
    %3636 = vmatprep.subr.mxu0 0.0
    %3637 = vmatpush1.msra.mxu0 0.0
    %3638 = vmatprep.subr.mxu0 0.0
    %3639 = vmatpush1.msra.mxu0 0.0
    %3640 = vmatprep.subr.mxu0 0.0
    %3641 = vmatpush1.msra.mxu0 0.0
    %3642 = vmatprep.subr.mxu0 0.0
    %3643 = vmatpush1.msra.mxu0 0.0
    %3644 = vmatprep.subr.mxu0 0.0
    %3645 = vmatpush1.msra.mxu0 0.0
    %3646 = vmatprep.subr.mxu0 0.0
    %3647 = vmatpush1.msra.mxu0 0.0
    %3648 = vmatprep.subr.mxu0 0.0
    %3649 = vmatpush1.msra.mxu0 0.0
    %3650 = vmatprep.subr.mxu0 0.0
    %3651 = vmatpush1.msra.mxu0 0.0
    %3652 = vmatprep.subr.mxu0 0.0
    %3653 = vmatpush1.msra.mxu0 0.0
    %3654 = vmatprep.subr.mxu0 0.0
    %3655 = vmatpush1.msra.mxu0 0.0
    %3656 = vmatprep.subr.mxu0 0.0
    %3657 = vmatpush1.msra.mxu0 0.0
    %3658 = vmatprep.mubr.f32.mxu0 0.0
    %3659 = vmatmul.mubr.f32.gmra.mrb[0].mxu0 %v3576
    %v3660 = vpop.f32.mrb[0].mxu0
    %v3661 = vadd.f32 0.0, %v3660
    %v3662 = vpop.f32.mrb[0].mxu0
    %3663 = vmatprep.mubr.f32.mxu0 0.0
    %3664 = vmatmul.mubr.f32.gmra.mrb[0].mxu0 %v3577
    %v3665 = vpop.f32.mrb[0].mxu0
    %v3666 = vadd.f32 0.0, %v3665
    %v3667 = vpop.f32.mrb[0].mxu0
    %3668 = vdwg.mxu0
    %v3669 = vld [vmem:[%s7 + $0x6] sm:$0x1]
    %v3670 = vlaneseq
    %v3671 = vshrl.u32 %v3670, 7
    %v3672 = vsub.s32 0, %v3671
    %v3673 = vrot.slane %v3669, %v3672
    %v3674 = vadd.f32 %v3661, %v3673
    %v3675 = vadd.f32 %v3666, %v3673
    %v3676 = vadd.f32 %v3674, %v3484
    %v3677 = vadd.f32 %v3675, %v3485
    %v3678 = vld [vmem:[%s7 + $0x7] sm:$0x1]
    %v3679 = vld [vmem:[%s7 + $0x8] sm:$0x1]
    %v3680 = vsel %vm50, %v3676, 0.0
    %3681 = vadd.xlane.f32.xlu0 %v3680
    %v3682 = vpop.xlane.xlu0 %3681
    %v3683 = vsel %vm50, %v3677, 0.0
    %3684 = vadd.xlane.f32.xlu0 %v3683
    %v3685 = vpop.xlane.xlu0 %3684
    %v3686 = vmul.f32 %v3682, %v1625
    %v3687 = vmul.f32 %v3685, %v1625
    %v3688 = vsub.f32 %v3676, %v3686
    %v3689 = vsub.f32 %v3677, %v3687
    %v3690 = vmul.f32 %v3688, %v3688
    %v3691 = vmul.f32 %v3689, %v3689
    %v3692 = vsel %vm50, %v3690, 0.0
    %3693 = vadd.xlane.f32.xlu0 %v3692
    %v3694 = vpop.xlane.xlu0 %3693
    %v3695 = vsel %vm50, %v3691, 0.0
    %3696 = vadd.xlane.f32.xlu0 %v3695
    %v3697 = vpop.xlane.xlu0 %3696
    %v3698 = vmul.f32 %v3694, %v1625
    %v3699 = vmul.f32 %v3697, %v1625
    %v3700 = vadd.f32 %v3698, 1e-05
    %v3701 = vadd.f32 %v3699, 1e-05
    %v3702 = vrsqrt.pop %v3700
    %v3703 = vrsqrt.pop %v3701
    %v3704 = vmul.f32 %v3688, %v3702
    %v3705 = vmul.f32 %v3689, %v3703
    %v3706 = vlaneseq
    %v3707 = vshrl.u32 %v3706, 7
    %v3708 = vsub.s32 0, %v3707
    %v3709 = vrot.slane %v3678, %v3708
    %v3710 = vmul.f32 %v3704, %v3709
    %v3711 = vmul.f32 %v3705, %v3709
    %v3712 = vlaneseq
    %v3713 = vshrl.u32 %v3712, 7
    %v3714 = vsub.s32 0, %v3713
    %v3715 = vrot.slane %v3679, %v3714
    %v3716 = vadd.f32 %v3710, %v3715
    %v3717 = vadd.f32 %v3711, %v3715
    %3718 = vst.msk [vmem:[#allocation5] sm:$0xff] %vm50, %v3716
    %3719 = vst.msk [vmem:[#allocation5 + $0x8] sm:$0xff] %vm50, %v3717
    // Predicated region
    $region38: #{tpu_custom_call.1} parent=1 // pred_check
      _
    $region39: #{tpu_custom_call.1} parent=1 // pred_check_branch
      %3721 = sbr.rel (0) target = $region41
    $region40: #{tpu_custom_call.1} parent=1 // pred_region
      %s3723 = ssub.s32 256, 256
      %3724 = vsyncadd [#allocation4], %s3723
      %s3725 = sshll.u32 [#allocation5], 4
      %s3726 = int_to_ptr.vmem [resolvable:$true] %s3725
      %3731 = dma.vmem_to_hbm [thread:$0]  %s3726, 256, %s8, [#allocation4], 128, 128, 8
    $region41: #{tpu_custom_call.1} parent=1 // pred_fallthru
      _
    // Predicated region
    $region42: #{tpu_custom_call.1} parent=1 // pred_check
      _
    $region43: #{tpu_custom_call.1} parent=1 // pred_check_branch
      %3733 = sbr.rel (0) target = $region45
    $region44: #{tpu_custom_call.1} parent=1 // pred_region
      %3734 = dma.done [#allocation4], 256
    $region45: #{tpu_custom_call.1} parent=1 // pred_fallthru
      _
    %3735 = vsyncpa [#allocation3], 1
    %3736 = vsyncpa [#allocation4], 1

</llo_original>
